<compile_context>
chip_gen: v5e
topology: v5e:2x2
jax: 0.10.0
libtpu: 0.0.40
codegen_flags: <defaults>
</compile_context>

<pallas_src>
import functools

import jax
import jax.numpy as jnp
from jax import lax
from jax.experimental import pallas as pl
from jax.experimental.pallas import tpu as pltpu  # noqa: F401

# ----------------------------- configuration -------------------------------
BATCH     = 2
CHANNELS  = 4
IMG       = 16                       # image_size = (16, 16)
PATCH     = 4                        # patch_size = patch_stride = (4, 4)
N_LAYERS  = 2
D_MODEL   = 32
N_HEADS   = 4
MLP_RATIO = 4                        # hard-coded in the module
EPS       = 1e-6

GRID_HW   = IMG // PATCH             # 4
N_PATCH   = GRID_HW * GRID_HW        # 16
T         = N_PATCH + 1              # 17 tokens (cls + patches)
BT        = BATCH * T                # 34 real rows
BT_PAD    = 40                       # padded to a multiple of 8 sublanes
HEAD_DIM  = D_MODEL // N_HEADS       # 8
D_HID     = MLP_RATIO * D_MODEL      # 128
PATCH_DIM = CHANNELS * PATCH * PATCH # 64

# --- packed weight slab (bf16, (W_ROWS, 512)), all sub-blocks 128-lane aligned
OFF_FC1  = 0                          # wfc1           lanes [0, 128)
OFF_FC2T = D_HID                      # wfc2^T * ls2   lanes [128, 256)
OFF_QKV  = 2 * D_HID                  # wqkv (Q scaled) lanes [256, 352)
OFF_PROJ = 3 * D_HID                  # wproj * ls1    lanes [384, 416)
W_SLAB_W = 4 * D_HID                  # 512 lanes
W_LAYER0 = PATCH_DIM                  # rows [0:64) hold the patch-embed weight
W_ROWS   = W_LAYER0 + N_LAYERS * D_MODEL   # 128 rows

# --- packed vector slab (f32, (V_ROWS, 128))
V_NRM_G  = BT_PAD                     # row 40: final-norm gamma
V_NRM_B  = BT_PAD + 1                 # row 41: final-norm beta
V_LAYER0 = BT_PAD + 8                 # 48 (8-row aligned layer blocks)
V_ROWS   = V_LAYER0 + N_LAYERS * 8    # 64 rows
(R_LN1G, R_LN1B, R_BQKV, R_BPROJ,
 R_LN2G, R_LN2B, R_BFC1, R_BFC2) = range(8)


# ------------------------------ Pallas kernel --------------------------------
def _layernorm(x, g, b):
    mu = jnp.mean(x, axis=-1, keepdims=True)
    var = jnp.mean((x - mu) ** 2, axis=-1, keepdims=True)
    return (x - mu) * lax.rsqrt(var + EPS) * g + b


def vit_kernel(p_ref, w_ref, v_ref, o_ref):
    """Fused ViT forward on the padded (BT_PAD, D) token slab.

    p_ref : (BT_PAD, PATCH_DIM) bf16  patches; zero rows at cls & pad positions
    w_ref : (W_ROWS, 512)       bf16  [w_pe | per-layer weight blocks]
    v_ref : (V_ROWS, 128)       f32   [token bias+pos | final norm | layer vecs]
    o_ref : (BT_PAD, D_MODEL)   f32
    """
    f32 = jnp.float32
    bf16 = jnp.bfloat16

    # Block-diagonal attention mask generated in-kernel (no extra input DMA).
    # Comparison-accumulation avoids vector integer division.
    ri = lax.broadcasted_iota(jnp.int32, (BT_PAD, BT_PAD), 0)
    ci = lax.broadcasted_iota(jnp.int32, (BT_PAD, BT_PAD), 1)
    rb = jnp.zeros((BT_PAD, BT_PAD), jnp.int32)
    cb = jnp.zeros((BT_PAD, BT_PAD), jnp.int32)
    for b in range(1, BATCH + 1):
        rb = rb + (ri >= b * T).astype(jnp.int32)
        cb = cb + (ci >= b * T).astype(jnp.int32)
    # pad rows (ri >= BT) keep an all-zero mask row -> finite softmax;
    # pad columns are masked out for real rows (different batch id).
    mask = jnp.where((rb == cb) | (ri >= BT), 0.0, -1e30).astype(f32)

    # patch embedding; cls rows come from the zero patch rows; (cls|conv-bias)
    # + pos_embed are pre-folded into the per-token bias rows of v_ref.
    x = jnp.dot(p_ref[...], w_ref[0:PATCH_DIM, 0:D_MODEL],
                preferred_element_type=f32)
    x = x + v_ref[0:BT_PAD, 0:D_MODEL]                              # (BT_PAD, D)

    for l in range(N_LAYERS):                                       # static unroll
        W = w_ref[W_LAYER0 + l * D_MODEL:W_LAYER0 + (l + 1) * D_MODEL, :]
        V = v_ref[V_LAYER0 + l * 8:V_LAYER0 + (l + 1) * 8, :]
        ln1_g = V[R_LN1G:R_LN1G + 1, 0:D_MODEL]
        ln1_b = V[R_LN1B:R_LN1B + 1, 0:D_MODEL]
        bqkv  = V[R_BQKV:R_BQKV + 1, 0:3 * D_MODEL]   # Q part pre-scaled
        bproj = V[R_BPROJ:R_BPROJ + 1, 0:D_MODEL]     # ls1 pre-folded
        ln2_g = V[R_LN2G:R_LN2G + 1, 0:D_MODEL]
        ln2_b = V[R_LN2B:R_LN2B + 1, 0:D_MODEL]
        bfc1  = V[R_BFC1:R_BFC1 + 1, 0:D_HID]
        bfc2  = V[R_BFC2:R_BFC2 + 1, 0:D_MODEL]       # ls2 pre-folded

        # ---------------- attention branch ----------------
        h = _layernorm(x, ln1_g, ln1_b).astype(bf16)
        qkv = jnp.dot(h, W[:, OFF_QKV:OFF_QKV + 3 * D_MODEL],
                      preferred_element_type=f32) + bqkv            # (BT_PAD, 3D)
        q_all = qkv[:, 0:D_MODEL].astype(bf16)                      # scale folded
        k_all = qkv[:, D_MODEL:2 * D_MODEL].astype(bf16)
        v_all = qkv[:, 2 * D_MODEL:3 * D_MODEL].astype(bf16)

        heads = []
        for hd in range(N_HEADS):
            lo = hd * HEAD_DIM
            q = q_all[:, lo:lo + HEAD_DIM]
            k = k_all[:, lo:lo + HEAD_DIM]
            v = v_all[:, lo:lo + HEAD_DIM]
            s = lax.dot_general(q, k, (((1,), (1,)), ((), ())),
                                preferred_element_type=f32) + mask  # (BT_PAD, BT_PAD)
            s = s - jnp.max(s, axis=-1, keepdims=True)
            p = jnp.exp(s)
            p = p * pl.reciprocal(jnp.sum(p, axis=-1, keepdims=True),
                                  approx=True)
            heads.append(jnp.dot(p.astype(bf16), v,
                                 preferred_element_type=f32))       # (BT_PAD, hd)
        ctx = jnp.concatenate(heads, axis=1).astype(bf16)           # (BT_PAD, D)
        # single output projection (ls1 already folded into W/bproj)
        x = x + jnp.dot(ctx, W[:, OFF_PROJ:OFF_PROJ + D_MODEL],
                        preferred_element_type=f32) + bproj

        # ---------------- MLP branch ----------------
        h = _layernorm(x, ln2_g, ln2_b).astype(bf16)
        h = jnp.dot(h, W[:, OFF_FC1:OFF_FC1 + D_HID],
                    preferred_element_type=f32) + bfc1              # (BT_PAD, D_HID)
        h = jax.nn.gelu(h, approximate=True)                        # tanh GELU (EUP)
        h = lax.dot_general(h.astype(bf16), W[:, OFF_FC2T:OFF_FC2T + D_HID],
                            (((1,), (1,)), ((), ())),
                            preferred_element_type=f32) + bfc2      # ls2 folded
        x = x + h

    # final LayerNorm (self.norm); head is Identity
    nrm_g = v_ref[V_NRM_G:V_NRM_G + 1, 0:D_MODEL]
    nrm_b = v_ref[V_NRM_B:V_NRM_B + 1, 0:D_MODEL]
    o_ref[...] = _layernorm(x, nrm_g, nrm_b)


# ------------------------------ host wrappers --------------------------------
def init_params(key):
    ks = jax.random.split(key, 6)
    f32 = jnp.float32

    def nrm(k, shape, scale=0.02):
        return (scale * jax.random.normal(k, shape)).astype(f32)

    return dict(
        # Conv2d(C, D, k=PATCH, s=PATCH) weights (PyTorch layout)
        w_conv=nrm(ks[0], (D_MODEL, CHANNELS, PATCH, PATCH)),
        b_conv=jnp.zeros((D_MODEL,), f32),
        cls_token=jnp.zeros((1, 1, D_MODEL), f32),                  # zeros, as in __init__
        pos_embed=jax.random.normal(ks[1], (1, T, D_MODEL)).astype(f32),
        ln1_g=jnp.ones((N_LAYERS, D_MODEL), f32),
        ln1_b=jnp.zeros((N_LAYERS, D_MODEL), f32),
        wqkv=nrm(ks[2], (N_LAYERS, D_MODEL, 3 * D_MODEL)),
        bqkv=jnp.zeros((N_LAYERS, 3 * D_MODEL), f32),
        wproj=nrm(ks[3], (N_LAYERS, D_MODEL, D_MODEL)),
        bproj=jnp.zeros((N_LAYERS, D_MODEL), f32),
        ls1=jnp.ones((N_LAYERS, D_MODEL), f32),                     # init_values=1.0
        ln2_g=jnp.ones((N_LAYERS, D_MODEL), f32),
        ln2_b=jnp.zeros((N_LAYERS, D_MODEL), f32),
        wfc1=nrm(ks[4], (N_LAYERS, D_MODEL, D_HID)),
        bfc1=jnp.zeros((N_LAYERS, D_HID), f32),
        wfc2=nrm(ks[5], (N_LAYERS, D_HID, D_MODEL)),
        bfc2=jnp.zeros((N_LAYERS, D_MODEL), f32),
        ls2=jnp.ones((N_LAYERS, D_MODEL), f32),
        nrm_g=jnp.ones((D_MODEL,), f32),
        nrm_b=jnp.zeros((D_MODEL,), f32),
    )


def pack_params(params):
    """One-time host-side packing into 2 lane-dense parameter slabs with the
    attention scale and both LayerScales folded into the weights/biases."""
    f32, bf16 = jnp.float32, jnp.bfloat16
    scale = HEAD_DIM ** -0.5

    # ---------- bf16 weight slab (W_ROWS, 512) ----------
    w_pe = params["w_conv"].reshape(D_MODEL, PATCH_DIM).T            # (64, 32)
    w_pe_rows = jnp.pad(w_pe, ((0, 0), (0, W_SLAB_W - D_MODEL)))     # (64, 512)

    def pad_lanes(w, width):
        return jnp.pad(w, ((0, 0), (0, width - w.shape[1])))

    layer_rows = []
    for l in range(N_LAYERS):
        wqkv = params["wqkv"][l].at[:, 0:D_MODEL].multiply(scale)    # fold scale into Q
        wproj_ls = params["wproj"][l] * params["ls1"][l][None, :]    # fold ls1
        wfc2t_ls = (params["wfc2"][l] * params["ls2"][l][None, :]).T # fold ls2, transpose
        layer_rows.append(jnp.concatenate([
            params["wfc1"][l],                                       # (32, 128)
            wfc2t_ls,                                                # (32, 128)
            pad_lanes(wqkv, D_HID),                                  # (32, 128) data [0:96)
            pad_lanes(wproj_ls, D_HID),                              # (32, 128) data [0:32)
        ], axis=1))
    w_slab = jnp.concatenate([w_pe_rows] + layer_rows, axis=0).astype(bf16)  # (128, 512)

    # ---------- f32 vector slab (V_ROWS, 128) ----------
    pos = params["pos_embed"][0]                                     # (T, D)
    cls_row = (params["cls_token"][0, 0] + pos[0])[None, :]          # (1, D)
    patch_bias = params["b_conv"][None, :] + pos[1:]                 # (N_PATCH, D)
    per_batch = jnp.concatenate([cls_row, patch_bias], axis=0)       # (T, D)
    tok_bias = jnp.tile(per_batch, (BATCH, 1))                       # (BT, D)
    tok_bias = jnp.pad(tok_bias, ((0, BT_PAD - BT), (0, 0)))         # pad rows = 0
    tok_block = jnp.pad(tok_bias, ((0, 0), (0, 128 - D_MODEL)))      # (40, 128)

    def row128(v):
        v = v.reshape(1, -1)
        return jnp.pad(v, ((0, 0), (0, 128 - v.shape[1])))

    norm_block = jnp.concatenate(
        [row128(params["nrm_g"]), row128(params["nrm_b"]),
         jnp.zeros((6, 128), f32)], axis=0)                          # (8, 128)

    layer_vecs = []
    for l in range(N_LAYERS):
        bqkv = params["bqkv"][l].at[0:D_MODEL].multiply(scale)       # fold scale into Q bias
        layer_vecs.append(jnp.concatenate([
            row128(params["ln1_g"][l]), row128(params["ln1_b"][l]),
            row128(bqkv),
            row128(params["bproj"][l] * params["ls1"][l]),           # fold ls1
            row128(params["ln2_g"][l]), row128(params["ln2_b"][l]),
            row128(params["bfc1"][l]),
            row128(params["bfc2"][l] * params["ls2"][l]),            # fold ls2
        ], axis=0))                                                  # (8, 128)
    v_slab = jnp.concatenate([tok_block, norm_block] + layer_vecs,
                             axis=0).astype(f32)                     # (64, 128)

    return dict(w_slab=w_slab, v_slab=v_slab)


def prepare_patches(im):
    """im2col for Conv2d(kernel=stride=PATCH), one zero row per batch at the
    cls position and 6 zero pad rows (34 -> 40, 8-sublane aligned)."""
    B = im.shape[0]
    x = im.reshape(B, CHANNELS, GRID_HW, PATCH, GRID_HW, PATCH)
    x = x.transpose(0, 2, 4, 1, 3, 5)                                # (B, gh, gw, C, ph, pw)
    p = x.reshape(B, N_PATCH, PATCH_DIM)
    p = jnp.pad(p, ((0, 0), (1, 0), (0, 0)))                         # cls row = zeros
    p = p.reshape(B * T, PATCH_DIM)
    p = jnp.pad(p, ((0, BT_PAD - BT), (0, 0)))                       # pad rows = zeros
    return p.astype(jnp.bfloat16)                                    # (BT_PAD, PATCH_DIM)


def vision_transformer_forward(im, packed):
    patches = prepare_patches(im)                                    # (BT_PAD, PATCH_DIM)
    out = pl.pallas_call(
        vit_kernel,
        out_shape=jax.ShapeDtypeStruct((BT_PAD, D_MODEL), jnp.float32),
    )(patches, packed["w_slab"], packed["v_slab"])
    x = out[:BT].reshape(BATCH, T, D_MODEL)
    # forward() returns (x, im)
    return x, im


# ----------------------------------- main ------------------------------------
if __name__ == "__main__":
    key = jax.random.PRNGKey(0)
    k_im, k_params = jax.random.split(key)

    im = jax.random.normal(k_im, (BATCH, CHANNELS, IMG, IMG), jnp.float32)  # NCHW
    params = init_params(k_params)
    packed = pack_params(params)

    fwd = jax.jit(functools.partial(vision_transformer_forward))
    out, im_out = fwd(im, packed)
    jax.block_until_ready(out)
    jax.block_until_ready(im_out)

    assert out.shape == (BATCH, T, D_MODEL)
    assert im_out.shape == im.shape
    assert bool(jnp.all(jnp.isfinite(out)))
    print("KERNEL_OK")
</pallas_src>

<mosaic_0001>
module attributes {stable_mosaic.version = 11 : i64} {
  func.func @vit_kernel(%arg0: memref<40x64xbf16, #tpu.memory_space<vmem>>, %arg1: memref<128x512xbf16, #tpu.memory_space<vmem>>, %arg2: memref<64x128xf32, #tpu.memory_space<vmem>>, %arg3: memref<40x32xf32, #tpu.memory_space<vmem>>) attributes {dimension_semantics = [], scalar_prefetch = 0 : i64, scratch_operands = 0 : i64, tpu.core_type = #tpu.core_type<tc>} {
    %0 = tpu.iota {dimensions = array<i32: 0>} : vector<40x40xi32>
    %1 = tpu.iota {dimensions = array<i32: 1>} : vector<40x40xi32>
    %c0_i32 = arith.constant 0 : i32
    %2 = vector.broadcast %c0_i32 : i32 to vector<40x40xi32>
    %c0_i32_0 = arith.constant 0 : i32
    %3 = vector.broadcast %c0_i32_0 : i32 to vector<40x40xi32>
    %c17_i32 = arith.constant 17 : i32
    %4 = vector.broadcast %c17_i32 : i32 to vector<40x40xi32>
    %5 = arith.cmpi sge, %0, %4 : vector<40x40xi32>
    %6 = arith.extui %5 : vector<40x40xi1> to vector<40x40xi32>
    %7 = arith.addi %2, %6 : vector<40x40xi32>
    %c17_i32_1 = arith.constant 17 : i32
    %8 = vector.broadcast %c17_i32_1 : i32 to vector<40x40xi32>
    %9 = arith.cmpi sge, %1, %8 : vector<40x40xi32>
    %10 = arith.extui %9 : vector<40x40xi1> to vector<40x40xi32>
    %11 = arith.addi %3, %10 : vector<40x40xi32>
    %c34_i32 = arith.constant 34 : i32
    %12 = vector.broadcast %c34_i32 : i32 to vector<40x40xi32>
    %13 = arith.cmpi sge, %0, %12 : vector<40x40xi32>
    %14 = arith.extui %13 : vector<40x40xi1> to vector<40x40xi32>
    %15 = arith.addi %7, %14 : vector<40x40xi32>
    %c34_i32_2 = arith.constant 34 : i32
    %16 = vector.broadcast %c34_i32_2 : i32 to vector<40x40xi32>
    %17 = arith.cmpi sge, %1, %16 : vector<40x40xi32>
    %18 = arith.extui %17 : vector<40x40xi1> to vector<40x40xi32>
    %19 = arith.addi %11, %18 : vector<40x40xi32>
    %20 = arith.cmpi eq, %15, %19 : vector<40x40xi32>
    %c34_i32_3 = arith.constant 34 : i32
    %21 = vector.broadcast %c34_i32_3 : i32 to vector<40x40xi32>
    %22 = arith.cmpi sge, %0, %21 : vector<40x40xi32>
    %23 = arith.ori %20, %22 : vector<40x40xi1>
    %cst = arith.constant 0.000000e+00 : f32
    %cst_4 = arith.constant -1.000000e+30 : f32
    %24 = vector.broadcast %cst : f32 to vector<40x40xf32>
    %25 = vector.broadcast %cst_4 : f32 to vector<40x40xf32>
    %26 = arith.select %23, %24, %25 : vector<40x40xi1>, vector<40x40xf32>
    %c0 = arith.constant 0 : index
    %c0_5 = arith.constant 0 : index
    %27 = vector.load %arg0[%c0, %c0_5] : memref<40x64xbf16, #tpu.memory_space<vmem>>, vector<40x64xbf16>
    %c0_6 = arith.constant 0 : index
    %c0_7 = arith.constant 0 : index
    %28 = vector.load %arg1[%c0_6, %c0_7] : memref<128x512xbf16, #tpu.memory_space<vmem>>, vector<64x32xbf16>
    %cst_8 = arith.constant dense<0.000000e+00> : vector<40x32xf32>
    %29 = tpu.matmul %27, %28, %cst_8 {dimension_numbers = #tpu.dot_dimension_numbers<[1], [0], [0], [1], [0, 0, 1, 1], [], []>} : vector<40x64xbf16>, vector<64x32xbf16>, vector<40x32xf32> -> vector<40x32xf32>
    %c0_9 = arith.constant 0 : index
    %c0_10 = arith.constant 0 : index
    %30 = vector.load %arg2[%c0_9, %c0_10] : memref<64x128xf32, #tpu.memory_space<vmem>>, vector<40x32xf32>
    %31 = arith.addf %29, %30 : vector<40x32xf32>
    %c64 = arith.constant 64 : index
    %c0_11 = arith.constant 0 : index
    %32 = vector.load %arg1[%c64, %c0_11] : memref<128x512xbf16, #tpu.memory_space<vmem>>, vector<32x512xbf16>
    %c48 = arith.constant 48 : index
    %c0_12 = arith.constant 0 : index
    %33 = vector.load %arg2[%c48, %c0_12] : memref<64x128xf32, #tpu.memory_space<vmem>>, vector<8x128xf32>
    %34 = vector.extract_strided_slice %33 {offsets = [0, 0], sizes = [1, 32], strides = [1, 1]} : vector<8x128xf32> to vector<1x32xf32>
    %35 = vector.extract_strided_slice %33 {offsets = [1, 0], sizes = [1, 32], strides = [1, 1]} : vector<8x128xf32> to vector<1x32xf32>
    %36 = vector.extract_strided_slice %33 {offsets = [2, 0], sizes = [1, 96], strides = [1, 1]} : vector<8x128xf32> to vector<1x96xf32>
    %37 = vector.extract_strided_slice %33 {offsets = [3, 0], sizes = [1, 32], strides = [1, 1]} : vector<8x128xf32> to vector<1x32xf32>
    %38 = vector.extract_strided_slice %33 {offsets = [4, 0], sizes = [1, 32], strides = [1, 1]} : vector<8x128xf32> to vector<1x32xf32>
    %39 = vector.extract_strided_slice %33 {offsets = [5, 0], sizes = [1, 32], strides = [1, 1]} : vector<8x128xf32> to vector<1x32xf32>
    %40 = vector.extract_strided_slice %33 {offsets = [6, 0], sizes = [1, 128], strides = [1, 1]} : vector<8x128xf32> to vector<1x128xf32>
    %41 = vector.extract_strided_slice %33 {offsets = [7, 0], sizes = [1, 32], strides = [1, 1]} : vector<8x128xf32> to vector<1x32xf32>
    %cst_13 = arith.constant dense<0.000000e+00> : vector<40xf32>
    %42 = vector.multi_reduction <add>, %31, %cst_13 [1] : vector<40x32xf32> to vector<40xf32>
    %43 = vector.shape_cast %42 : vector<40xf32> to vector<40x1xf32>
    %cst_14 = arith.constant 3.200000e+01 : f32
    %44 = vector.broadcast %cst_14 : f32 to vector<40x1xf32>
    %45 = arith.divf %43, %44 : vector<40x1xf32>
    %46 = vector.broadcast %45 : vector<40x1xf32> to vector<40x32xf32>
    %47 = arith.subf %31, %46 : vector<40x32xf32>
    %48 = arith.mulf %47, %47 : vector<40x32xf32>
    %cst_15 = arith.constant dense<0.000000e+00> : vector<40xf32>
    %49 = vector.multi_reduction <add>, %48, %cst_15 [1] : vector<40x32xf32> to vector<40xf32>
    %50 = vector.shape_cast %49 : vector<40xf32> to vector<40x1xf32>
    %cst_16 = arith.constant 3.200000e+01 : f32
    %51 = vector.broadcast %cst_16 : f32 to vector<40x1xf32>
    %52 = arith.divf %50, %51 : vector<40x1xf32>
    %53 = vector.broadcast %45 : vector<40x1xf32> to vector<40x32xf32>
    %54 = arith.subf %31, %53 : vector<40x32xf32>
    %cst_17 = arith.constant 9.99999997E-7 : f32
    %55 = vector.broadcast %cst_17 : f32 to vector<40x1xf32>
    %56 = arith.addf %52, %55 : vector<40x1xf32>
    %57 = math.rsqrt %56 : vector<40x1xf32>
    %58 = vector.broadcast %57 : vector<40x1xf32> to vector<40x32xf32>
    %59 = arith.mulf %54, %58 : vector<40x32xf32>
    %60 = vector.broadcast %34 : vector<1x32xf32> to vector<40x32xf32>
    %61 = arith.mulf %59, %60 : vector<40x32xf32>
    %62 = vector.broadcast %35 : vector<1x32xf32> to vector<40x32xf32>
    %63 = arith.addf %61, %62 : vector<40x32xf32>
    %64 = arith.truncf %63 : vector<40x32xf32> to vector<40x32xbf16>
    %65 = vector.extract_strided_slice %32 {offsets = [0, 256], sizes = [32, 96], strides = [1, 1]} : vector<32x512xbf16> to vector<32x96xbf16>
    %cst_18 = arith.constant dense<0.000000e+00> : vector<40x96xf32>
    %66 = tpu.matmul %64, %65, %cst_18 {dimension_numbers = #tpu.dot_dimension_numbers<[1], [0], [0], [1], [0, 0, 1, 1], [], []>} : vector<40x32xbf16>, vector<32x96xbf16>, vector<40x96xf32> -> vector<40x96xf32>
    %67 = vector.broadcast %36 : vector<1x96xf32> to vector<40x96xf32>
    %68 = arith.addf %66, %67 : vector<40x96xf32>
    %69 = vector.extract_strided_slice %68 {offsets = [0, 0], sizes = [40, 32], strides = [1, 1]} : vector<40x96xf32> to vector<40x32xf32>
    %70 = arith.truncf %69 : vector<40x32xf32> to vector<40x32xbf16>
    %71 = vector.extract_strided_slice %68 {offsets = [0, 32], sizes = [40, 32], strides = [1, 1]} : vector<40x96xf32> to vector<40x32xf32>
    %72 = arith.truncf %71 : vector<40x32xf32> to vector<40x32xbf16>
    %73 = vector.extract_strided_slice %68 {offsets = [0, 64], sizes = [40, 32], strides = [1, 1]} : vector<40x96xf32> to vector<40x32xf32>
    %74 = arith.truncf %73 : vector<40x32xf32> to vector<40x32xbf16>
    %75 = vector.extract_strided_slice %70 {offsets = [0, 0], sizes = [40, 8], strides = [1, 1]} : vector<40x32xbf16> to vector<40x8xbf16>
    %76 = vector.extract_strided_slice %72 {offsets = [0, 0], sizes = [40, 8], strides = [1, 1]} : vector<40x32xbf16> to vector<40x8xbf16>
    %77 = vector.extract_strided_slice %74 {offsets = [0, 0], sizes = [40, 8], strides = [1, 1]} : vector<40x32xbf16> to vector<40x8xbf16>
    %cst_19 = arith.constant dense<0.000000e+00> : vector<40x40xf32>
    %78 = tpu.matmul %75, %76, %cst_19 {dimension_numbers = #tpu.dot_dimension_numbers<[1], [1], [0], [0], [0, 0, 1, 0], [], []>} : vector<40x8xbf16>, vector<40x8xbf16>, vector<40x40xf32> -> vector<40x40xf32>
    %79 = arith.addf %78, %26 : vector<40x40xf32>
    %cst_20 = arith.constant dense<0xFF800000> : vector<40xf32>
    %80 = vector.multi_reduction <maximumf>, %79, %cst_20 [1] : vector<40x40xf32> to vector<40xf32>
    %81 = vector.shape_cast %80 : vector<40xf32> to vector<40x1xf32>
    %82 = vector.broadcast %81 : vector<40x1xf32> to vector<40x40xf32>
    %83 = arith.subf %79, %82 : vector<40x40xf32>
    %84 = math.exp %83 : vector<40x40xf32>
    %cst_21 = arith.constant dense<0.000000e+00> : vector<40xf32>
    %85 = vector.multi_reduction <add>, %84, %cst_21 [1] : vector<40x40xf32> to vector<40xf32>
    %86 = vector.shape_cast %85 : vector<40xf32> to vector<40x1xf32>
    %87 = tpu.reciprocal %86 {approx = true} : vector<40x1xf32> -> vector<40x1xf32>
    %88 = vector.broadcast %87 : vector<40x1xf32> to vector<40x40xf32>
    %89 = arith.mulf %84, %88 : vector<40x40xf32>
    %90 = arith.truncf %89 : vector<40x40xf32> to vector<40x40xbf16>
    %cst_22 = arith.constant dense<0.000000e+00> : vector<40x8xf32>
    %91 = tpu.matmul %90, %77, %cst_22 {dimension_numbers = #tpu.dot_dimension_numbers<[1], [0], [0], [1], [0, 0, 1, 1], [], []>} : vector<40x40xbf16>, vector<40x8xbf16>, vector<40x8xf32> -> vector<40x8xf32>
    %92 = vector.extract_strided_slice %70 {offsets = [0, 8], sizes = [40, 8], strides = [1, 1]} : vector<40x32xbf16> to vector<40x8xbf16>
    %93 = vector.extract_strided_slice %72 {offsets = [0, 8], sizes = [40, 8], strides = [1, 1]} : vector<40x32xbf16> to vector<40x8xbf16>
    %94 = vector.extract_strided_slice %74 {offsets = [0, 8], sizes = [40, 8], strides = [1, 1]} : vector<40x32xbf16> to vector<40x8xbf16>
    %cst_23 = arith.constant dense<0.000000e+00> : vector<40x40xf32>
    %95 = tpu.matmul %92, %93, %cst_23 {dimension_numbers = #tpu.dot_dimension_numbers<[1], [1], [0], [0], [0, 0, 1, 0], [], []>} : vector<40x8xbf16>, vector<40x8xbf16>, vector<40x40xf32> -> vector<40x40xf32>
    %96 = arith.addf %95, %26 : vector<40x40xf32>
    %cst_24 = arith.constant dense<0xFF800000> : vector<40xf32>
    %97 = vector.multi_reduction <maximumf>, %96, %cst_24 [1] : vector<40x40xf32> to vector<40xf32>
    %98 = vector.shape_cast %97 : vector<40xf32> to vector<40x1xf32>
    %99 = vector.broadcast %98 : vector<40x1xf32> to vector<40x40xf32>
    %100 = arith.subf %96, %99 : vector<40x40xf32>
    %101 = math.exp %100 : vector<40x40xf32>
    %cst_25 = arith.constant dense<0.000000e+00> : vector<40xf32>
    %102 = vector.multi_reduction <add>, %101, %cst_25 [1] : vector<40x40xf32> to vector<40xf32>
    %103 = vector.shape_cast %102 : vector<40xf32> to vector<40x1xf32>
    %104 = tpu.reciprocal %103 {approx = true} : vector<40x1xf32> -> vector<40x1xf32>
    %105 = vector.broadcast %104 : vector<40x1xf32> to vector<40x40xf32>
    %106 = arith.mulf %101, %105 : vector<40x40xf32>
    %107 = arith.truncf %106 : vector<40x40xf32> to vector<40x40xbf16>
    %cst_26 = arith.constant dense<0.000000e+00> : vector<40x8xf32>
    %108 = tpu.matmul %107, %94, %cst_26 {dimension_numbers = #tpu.dot_dimension_numbers<[1], [0], [0], [1], [0, 0, 1, 1], [], []>} : vector<40x40xbf16>, vector<40x8xbf16>, vector<40x8xf32> -> vector<40x8xf32>
    %109 = vector.extract_strided_slice %70 {offsets = [0, 16], sizes = [40, 8], strides = [1, 1]} : vector<40x32xbf16> to vector<40x8xbf16>
    %110 = vector.extract_strided_slice %72 {offsets = [0, 16], sizes = [40, 8], strides = [1, 1]} : vector<40x32xbf16> to vector<40x8xbf16>
    %111 = vector.extract_strided_slice %74 {offsets = [0, 16], sizes = [40, 8], strides = [1, 1]} : vector<40x32xbf16> to vector<40x8xbf16>
    %cst_27 = arith.constant dense<0.000000e+00> : vector<40x40xf32>
    %112 = tpu.matmul %109, %110, %cst_27 {dimension_numbers = #tpu.dot_dimension_numbers<[1], [1], [0], [0], [0, 0, 1, 0], [], []>} : vector<40x8xbf16>, vector<40x8xbf16>, vector<40x40xf32> -> vector<40x40xf32>
    %113 = arith.addf %112, %26 : vector<40x40xf32>
    %cst_28 = arith.constant dense<0xFF800000> : vector<40xf32>
    %114 = vector.multi_reduction <maximumf>, %113, %cst_28 [1] : vector<40x40xf32> to vector<40xf32>
    %115 = vector.shape_cast %114 : vector<40xf32> to vector<40x1xf32>
    %116 = vector.broadcast %115 : vector<40x1xf32> to vector<40x40xf32>
    %117 = arith.subf %113, %116 : vector<40x40xf32>
    %118 = math.exp %117 : vector<40x40xf32>
    %cst_29 = arith.constant dense<0.000000e+00> : vector<40xf32>
    %119 = vector.multi_reduction <add>, %118, %cst_29 [1] : vector<40x40xf32> to vector<40xf32>
    %120 = vector.shape_cast %119 : vector<40xf32> to vector<40x1xf32>
    %121 = tpu.reciprocal %120 {approx = true} : vector<40x1xf32> -> vector<40x1xf32>
    %122 = vector.broadcast %121 : vector<40x1xf32> to vector<40x40xf32>
    %123 = arith.mulf %118, %122 : vector<40x40xf32>
    %124 = arith.truncf %123 : vector<40x40xf32> to vector<40x40xbf16>
    %cst_30 = arith.constant dense<0.000000e+00> : vector<40x8xf32>
    %125 = tpu.matmul %124, %111, %cst_30 {dimension_numbers = #tpu.dot_dimension_numbers<[1], [0], [0], [1], [0, 0, 1, 1], [], []>} : vector<40x40xbf16>, vector<40x8xbf16>, vector<40x8xf32> -> vector<40x8xf32>
    %126 = vector.extract_strided_slice %70 {offsets = [0, 24], sizes = [40, 8], strides = [1, 1]} : vector<40x32xbf16> to vector<40x8xbf16>
    %127 = vector.extract_strided_slice %72 {offsets = [0, 24], sizes = [40, 8], strides = [1, 1]} : vector<40x32xbf16> to vector<40x8xbf16>
    %128 = vector.extract_strided_slice %74 {offsets = [0, 24], sizes = [40, 8], strides = [1, 1]} : vector<40x32xbf16> to vector<40x8xbf16>
    %cst_31 = arith.constant dense<0.000000e+00> : vector<40x40xf32>
    %129 = tpu.matmul %126, %127, %cst_31 {dimension_numbers = #tpu.dot_dimension_numbers<[1], [1], [0], [0], [0, 0, 1, 0], [], []>} : vector<40x8xbf16>, vector<40x8xbf16>, vector<40x40xf32> -> vector<40x40xf32>
    %130 = arith.addf %129, %26 : vector<40x40xf32>
    %cst_32 = arith.constant dense<0xFF800000> : vector<40xf32>
    %131 = vector.multi_reduction <maximumf>, %130, %cst_32 [1] : vector<40x40xf32> to vector<40xf32>
    %132 = vector.shape_cast %131 : vector<40xf32> to vector<40x1xf32>
    %133 = vector.broadcast %132 : vector<40x1xf32> to vector<40x40xf32>
    %134 = arith.subf %130, %133 : vector<40x40xf32>
    %135 = math.exp %134 : vector<40x40xf32>
    %cst_33 = arith.constant dense<0.000000e+00> : vector<40xf32>
    %136 = vector.multi_reduction <add>, %135, %cst_33 [1] : vector<40x40xf32> to vector<40xf32>
    %137 = vector.shape_cast %136 : vector<40xf32> to vector<40x1xf32>
    %138 = tpu.reciprocal %137 {approx = true} : vector<40x1xf32> -> vector<40x1xf32>
    %139 = vector.broadcast %138 : vector<40x1xf32> to vector<40x40xf32>
    %140 = arith.mulf %135, %139 : vector<40x40xf32>
    %141 = arith.truncf %140 : vector<40x40xf32> to vector<40x40xbf16>
    %cst_34 = arith.constant dense<0.000000e+00> : vector<40x8xf32>
    %142 = tpu.matmul %141, %128, %cst_34 {dimension_numbers = #tpu.dot_dimension_numbers<[1], [0], [0], [1], [0, 0, 1, 1], [], []>} : vector<40x40xbf16>, vector<40x8xbf16>, vector<40x8xf32> -> vector<40x8xf32>
    %143 = tpu.concatenate %91, %108, %125, %142 in 1 : vector<40x8xf32>, vector<40x8xf32>, vector<40x8xf32>, vector<40x8xf32> -> vector<40x32xf32>
    %144 = arith.truncf %143 : vector<40x32xf32> to vector<40x32xbf16>
    %145 = vector.extract_strided_slice %32 {offsets = [0, 384], sizes = [32, 32], strides = [1, 1]} : vector<32x512xbf16> to vector<32x32xbf16>
    %cst_35 = arith.constant dense<0.000000e+00> : vector<40x32xf32>
    %146 = tpu.matmul %144, %145, %cst_35 {dimension_numbers = #tpu.dot_dimension_numbers<[1], [0], [0], [1], [0, 0, 1, 1], [], []>} : vector<40x32xbf16>, vector<32x32xbf16>, vector<40x32xf32> -> vector<40x32xf32>
    %147 = arith.addf %31, %146 : vector<40x32xf32>
    %148 = vector.broadcast %37 : vector<1x32xf32> to vector<40x32xf32>
    %149 = arith.addf %147, %148 : vector<40x32xf32>
    %cst_36 = arith.constant dense<0.000000e+00> : vector<40xf32>
    %150 = vector.multi_reduction <add>, %149, %cst_36 [1] : vector<40x32xf32> to vector<40xf32>
    %151 = vector.shape_cast %150 : vector<40xf32> to vector<40x1xf32>
    %cst_37 = arith.constant 3.200000e+01 : f32
    %152 = vector.broadcast %cst_37 : f32 to vector<40x1xf32>
    %153 = arith.divf %151, %152 : vector<40x1xf32>
    %154 = vector.broadcast %153 : vector<40x1xf32> to vector<40x32xf32>
    %155 = arith.subf %149, %154 : vector<40x32xf32>
    %156 = arith.mulf %155, %155 : vector<40x32xf32>
    %cst_38 = arith.constant dense<0.000000e+00> : vector<40xf32>
    %157 = vector.multi_reduction <add>, %156, %cst_38 [1] : vector<40x32xf32> to vector<40xf32>
    %158 = vector.shape_cast %157 : vector<40xf32> to vector<40x1xf32>
    %cst_39 = arith.constant 3.200000e+01 : f32
    %159 = vector.broadcast %cst_39 : f32 to vector<40x1xf32>
    %160 = arith.divf %158, %159 : vector<40x1xf32>
    %161 = vector.broadcast %153 : vector<40x1xf32> to vector<40x32xf32>
    %162 = arith.subf %149, %161 : vector<40x32xf32>
    %cst_40 = arith.constant 9.99999997E-7 : f32
    %163 = vector.broadcast %cst_40 : f32 to vector<40x1xf32>
    %164 = arith.addf %160, %163 : vector<40x1xf32>
    %165 = math.rsqrt %164 : vector<40x1xf32>
    %166 = vector.broadcast %165 : vector<40x1xf32> to vector<40x32xf32>
    %167 = arith.mulf %162, %166 : vector<40x32xf32>
    %168 = vector.broadcast %38 : vector<1x32xf32> to vector<40x32xf32>
    %169 = arith.mulf %167, %168 : vector<40x32xf32>
    %170 = vector.broadcast %39 : vector<1x32xf32> to vector<40x32xf32>
    %171 = arith.addf %169, %170 : vector<40x32xf32>
    %172 = arith.truncf %171 : vector<40x32xf32> to vector<40x32xbf16>
    %173 = vector.extract_strided_slice %32 {offsets = [0, 0], sizes = [32, 128], strides = [1, 1]} : vector<32x512xbf16> to vector<32x128xbf16>
    %cst_41 = arith.constant dense<0.000000e+00> : vector<40x128xf32>
    %174 = tpu.matmul %172, %173, %cst_41 {dimension_numbers = #tpu.dot_dimension_numbers<[1], [0], [0], [1], [0, 0, 1, 1], [], []>} : vector<40x32xbf16>, vector<32x128xbf16>, vector<40x128xf32> -> vector<40x128xf32>
    %175 = vector.broadcast %40 : vector<1x128xf32> to vector<40x128xf32>
    %176 = arith.addf %174, %175 : vector<40x128xf32>
    %177 = arith.mulf %176, %176 : vector<40x128xf32>
    %178 = arith.mulf %176, %177 : vector<40x128xf32>
    %cst_42 = arith.constant 4.471500e-02 : f32
    %179 = vector.broadcast %cst_42 : f32 to vector<40x128xf32>
    %180 = arith.mulf %179, %178 : vector<40x128xf32>
    %181 = arith.addf %176, %180 : vector<40x128xf32>
    %cst_43 = arith.constant 0.797884583 : f32
    %182 = vector.broadcast %cst_43 : f32 to vector<40x128xf32>
    %183 = arith.mulf %182, %181 : vector<40x128xf32>
    %184 = math.tanh %183 : vector<40x128xf32>
    %cst_44 = arith.constant 1.000000e+00 : f32
    %185 = vector.broadcast %cst_44 : f32 to vector<40x128xf32>
    %186 = arith.addf %185, %184 : vector<40x128xf32>
    %cst_45 = arith.constant 5.000000e-01 : f32
    %187 = vector.broadcast %cst_45 : f32 to vector<40x128xf32>
    %188 = arith.mulf %187, %186 : vector<40x128xf32>
    %189 = arith.mulf %176, %188 : vector<40x128xf32>
    %190 = arith.truncf %189 : vector<40x128xf32> to vector<40x128xbf16>
    %191 = vector.extract_strided_slice %32 {offsets = [0, 128], sizes = [32, 128], strides = [1, 1]} : vector<32x512xbf16> to vector<32x128xbf16>
    %cst_46 = arith.constant dense<0.000000e+00> : vector<40x32xf32>
    %192 = tpu.matmul %190, %191, %cst_46 {dimension_numbers = #tpu.dot_dimension_numbers<[1], [1], [0], [0], [0, 0, 1, 0], [], []>} : vector<40x128xbf16>, vector<32x128xbf16>, vector<40x32xf32> -> vector<40x32xf32>
    %193 = vector.broadcast %41 : vector<1x32xf32> to vector<40x32xf32>
    %194 = arith.addf %192, %193 : vector<40x32xf32>
    %195 = arith.addf %149, %194 : vector<40x32xf32>
    %c96 = arith.constant 96 : index
    %c0_47 = arith.constant 0 : index
    %196 = vector.load %arg1[%c96, %c0_47] : memref<128x512xbf16, #tpu.memory_space<vmem>>, vector<32x512xbf16>
    %c56 = arith.constant 56 : index
    %c0_48 = arith.constant 0 : index
    %197 = vector.load %arg2[%c56, %c0_48] : memref<64x128xf32, #tpu.memory_space<vmem>>, vector<8x128xf32>
    %198 = vector.extract_strided_slice %197 {offsets = [0, 0], sizes = [1, 32], strides = [1, 1]} : vector<8x128xf32> to vector<1x32xf32>
    %199 = vector.extract_strided_slice %197 {offsets = [1, 0], sizes = [1, 32], strides = [1, 1]} : vector<8x128xf32> to vector<1x32xf32>
    %200 = vector.extract_strided_slice %197 {offsets = [2, 0], sizes = [1, 96], strides = [1, 1]} : vector<8x128xf32> to vector<1x96xf32>
    %201 = vector.extract_strided_slice %197 {offsets = [3, 0], sizes = [1, 32], strides = [1, 1]} : vector<8x128xf32> to vector<1x32xf32>
    %202 = vector.extract_strided_slice %197 {offsets = [4, 0], sizes = [1, 32], strides = [1, 1]} : vector<8x128xf32> to vector<1x32xf32>
    %203 = vector.extract_strided_slice %197 {offsets = [5, 0], sizes = [1, 32], strides = [1, 1]} : vector<8x128xf32> to vector<1x32xf32>
    %204 = vector.extract_strided_slice %197 {offsets = [6, 0], sizes = [1, 128], strides = [1, 1]} : vector<8x128xf32> to vector<1x128xf32>
    %205 = vector.extract_strided_slice %197 {offsets = [7, 0], sizes = [1, 32], strides = [1, 1]} : vector<8x128xf32> to vector<1x32xf32>
    %cst_49 = arith.constant dense<0.000000e+00> : vector<40xf32>
    %206 = vector.multi_reduction <add>, %195, %cst_49 [1] : vector<40x32xf32> to vector<40xf32>
    %207 = vector.shape_cast %206 : vector<40xf32> to vector<40x1xf32>
    %cst_50 = arith.constant 3.200000e+01 : f32
    %208 = vector.broadcast %cst_50 : f32 to vector<40x1xf32>
    %209 = arith.divf %207, %208 : vector<40x1xf32>
    %210 = vector.broadcast %209 : vector<40x1xf32> to vector<40x32xf32>
    %211 = arith.subf %195, %210 : vector<40x32xf32>
    %212 = arith.mulf %211, %211 : vector<40x32xf32>
    %cst_51 = arith.constant dense<0.000000e+00> : vector<40xf32>
    %213 = vector.multi_reduction <add>, %212, %cst_51 [1] : vector<40x32xf32> to vector<40xf32>
    %214 = vector.shape_cast %213 : vector<40xf32> to vector<40x1xf32>
    %cst_52 = arith.constant 3.200000e+01 : f32
    %215 = vector.broadcast %cst_52 : f32 to vector<40x1xf32>
    %216 = arith.divf %214, %215 : vector<40x1xf32>
    %217 = vector.broadcast %209 : vector<40x1xf32> to vector<40x32xf32>
    %218 = arith.subf %195, %217 : vector<40x32xf32>
    %cst_53 = arith.constant 9.99999997E-7 : f32
    %219 = vector.broadcast %cst_53 : f32 to vector<40x1xf32>
    %220 = arith.addf %216, %219 : vector<40x1xf32>
    %221 = math.rsqrt %220 : vector<40x1xf32>
    %222 = vector.broadcast %221 : vector<40x1xf32> to vector<40x32xf32>
    %223 = arith.mulf %218, %222 : vector<40x32xf32>
    %224 = vector.broadcast %198 : vector<1x32xf32> to vector<40x32xf32>
    %225 = arith.mulf %223, %224 : vector<40x32xf32>
    %226 = vector.broadcast %199 : vector<1x32xf32> to vector<40x32xf32>
    %227 = arith.addf %225, %226 : vector<40x32xf32>
    %228 = arith.truncf %227 : vector<40x32xf32> to vector<40x32xbf16>
    %229 = vector.extract_strided_slice %196 {offsets = [0, 256], sizes = [32, 96], strides = [1, 1]} : vector<32x512xbf16> to vector<32x96xbf16>
    %cst_54 = arith.constant dense<0.000000e+00> : vector<40x96xf32>
    %230 = tpu.matmul %228, %229, %cst_54 {dimension_numbers = #tpu.dot_dimension_numbers<[1], [0], [0], [1], [0, 0, 1, 1], [], []>} : vector<40x32xbf16>, vector<32x96xbf16>, vector<40x96xf32> -> vector<40x96xf32>
    %231 = vector.broadcast %200 : vector<1x96xf32> to vector<40x96xf32>
    %232 = arith.addf %230, %231 : vector<40x96xf32>
    %233 = vector.extract_strided_slice %232 {offsets = [0, 0], sizes = [40, 32], strides = [1, 1]} : vector<40x96xf32> to vector<40x32xf32>
    %234 = arith.truncf %233 : vector<40x32xf32> to vector<40x32xbf16>
    %235 = vector.extract_strided_slice %232 {offsets = [0, 32], sizes = [40, 32], strides = [1, 1]} : vector<40x96xf32> to vector<40x32xf32>
    %236 = arith.truncf %235 : vector<40x32xf32> to vector<40x32xbf16>
    %237 = vector.extract_strided_slice %232 {offsets = [0, 64], sizes = [40, 32], strides = [1, 1]} : vector<40x96xf32> to vector<40x32xf32>
    %238 = arith.truncf %237 : vector<40x32xf32> to vector<40x32xbf16>
    %239 = vector.extract_strided_slice %234 {offsets = [0, 0], sizes = [40, 8], strides = [1, 1]} : vector<40x32xbf16> to vector<40x8xbf16>
    %240 = vector.extract_strided_slice %236 {offsets = [0, 0], sizes = [40, 8], strides = [1, 1]} : vector<40x32xbf16> to vector<40x8xbf16>
    %241 = vector.extract_strided_slice %238 {offsets = [0, 0], sizes = [40, 8], strides = [1, 1]} : vector<40x32xbf16> to vector<40x8xbf16>
    %cst_55 = arith.constant dense<0.000000e+00> : vector<40x40xf32>
    %242 = tpu.matmul %239, %240, %cst_55 {dimension_numbers = #tpu.dot_dimension_numbers<[1], [1], [0], [0], [0, 0, 1, 0], [], []>} : vector<40x8xbf16>, vector<40x8xbf16>, vector<40x40xf32> -> vector<40x40xf32>
    %243 = arith.addf %242, %26 : vector<40x40xf32>
    %cst_56 = arith.constant dense<0xFF800000> : vector<40xf32>
    %244 = vector.multi_reduction <maximumf>, %243, %cst_56 [1] : vector<40x40xf32> to vector<40xf32>
    %245 = vector.shape_cast %244 : vector<40xf32> to vector<40x1xf32>
    %246 = vector.broadcast %245 : vector<40x1xf32> to vector<40x40xf32>
    %247 = arith.subf %243, %246 : vector<40x40xf32>
    %248 = math.exp %247 : vector<40x40xf32>
    %cst_57 = arith.constant dense<0.000000e+00> : vector<40xf32>
    %249 = vector.multi_reduction <add>, %248, %cst_57 [1] : vector<40x40xf32> to vector<40xf32>
    %250 = vector.shape_cast %249 : vector<40xf32> to vector<40x1xf32>
    %251 = tpu.reciprocal %250 {approx = true} : vector<40x1xf32> -> vector<40x1xf32>
    %252 = vector.broadcast %251 : vector<40x1xf32> to vector<40x40xf32>
    %253 = arith.mulf %248, %252 : vector<40x40xf32>
    %254 = arith.truncf %253 : vector<40x40xf32> to vector<40x40xbf16>
    %cst_58 = arith.constant dense<0.000000e+00> : vector<40x8xf32>
    %255 = tpu.matmul %254, %241, %cst_58 {dimension_numbers = #tpu.dot_dimension_numbers<[1], [0], [0], [1], [0, 0, 1, 1], [], []>} : vector<40x40xbf16>, vector<40x8xbf16>, vector<40x8xf32> -> vector<40x8xf32>
    %256 = vector.extract_strided_slice %234 {offsets = [0, 8], sizes = [40, 8], strides = [1, 1]} : vector<40x32xbf16> to vector<40x8xbf16>
    %257 = vector.extract_strided_slice %236 {offsets = [0, 8], sizes = [40, 8], strides = [1, 1]} : vector<40x32xbf16> to vector<40x8xbf16>
    %258 = vector.extract_strided_slice %238 {offsets = [0, 8], sizes = [40, 8], strides = [1, 1]} : vector<40x32xbf16> to vector<40x8xbf16>
    %cst_59 = arith.constant dense<0.000000e+00> : vector<40x40xf32>
    %259 = tpu.matmul %256, %257, %cst_59 {dimension_numbers = #tpu.dot_dimension_numbers<[1], [1], [0], [0], [0, 0, 1, 0], [], []>} : vector<40x8xbf16>, vector<40x8xbf16>, vector<40x40xf32> -> vector<40x40xf32>
    %260 = arith.addf %259, %26 : vector<40x40xf32>
    %cst_60 = arith.constant dense<0xFF800000> : vector<40xf32>
    %261 = vector.multi_reduction <maximumf>, %260, %cst_60 [1] : vector<40x40xf32> to vector<40xf32>
    %262 = vector.shape_cast %261 : vector<40xf32> to vector<40x1xf32>
    %263 = vector.broadcast %262 : vector<40x1xf32> to vector<40x40xf32>
    %264 = arith.subf %260, %263 : vector<40x40xf32>
    %265 = math.exp %264 : vector<40x40xf32>
    %cst_61 = arith.constant dense<0.000000e+00> : vector<40xf32>
    %266 = vector.multi_reduction <add>, %265, %cst_61 [1] : vector<40x40xf32> to vector<40xf32>
    %267 = vector.shape_cast %266 : vector<40xf32> to vector<40x1xf32>
    %268 = tpu.reciprocal %267 {approx = true} : vector<40x1xf32> -> vector<40x1xf32>
    %269 = vector.broadcast %268 : vector<40x1xf32> to vector<40x40xf32>
    %270 = arith.mulf %265, %269 : vector<40x40xf32>
    %271 = arith.truncf %270 : vector<40x40xf32> to vector<40x40xbf16>
    %cst_62 = arith.constant dense<0.000000e+00> : vector<40x8xf32>
    %272 = tpu.matmul %271, %258, %cst_62 {dimension_numbers = #tpu.dot_dimension_numbers<[1], [0], [0], [1], [0, 0, 1, 1], [], []>} : vector<40x40xbf16>, vector<40x8xbf16>, vector<40x8xf32> -> vector<40x8xf32>
    %273 = vector.extract_strided_slice %234 {offsets = [0, 16], sizes = [40, 8], strides = [1, 1]} : vector<40x32xbf16> to vector<40x8xbf16>
    %274 = vector.extract_strided_slice %236 {offsets = [0, 16], sizes = [40, 8], strides = [1, 1]} : vector<40x32xbf16> to vector<40x8xbf16>
    %275 = vector.extract_strided_slice %238 {offsets = [0, 16], sizes = [40, 8], strides = [1, 1]} : vector<40x32xbf16> to vector<40x8xbf16>
    %cst_63 = arith.constant dense<0.000000e+00> : vector<40x40xf32>
    %276 = tpu.matmul %273, %274, %cst_63 {dimension_numbers = #tpu.dot_dimension_numbers<[1], [1], [0], [0], [0, 0, 1, 0], [], []>} : vector<40x8xbf16>, vector<40x8xbf16>, vector<40x40xf32> -> vector<40x40xf32>
    %277 = arith.addf %276, %26 : vector<40x40xf32>
    %cst_64 = arith.constant dense<0xFF800000> : vector<40xf32>
    %278 = vector.multi_reduction <maximumf>, %277, %cst_64 [1] : vector<40x40xf32> to vector<40xf32>
    %279 = vector.shape_cast %278 : vector<40xf32> to vector<40x1xf32>
    %280 = vector.broadcast %279 : vector<40x1xf32> to vector<40x40xf32>
    %281 = arith.subf %277, %280 : vector<40x40xf32>
    %282 = math.exp %281 : vector<40x40xf32>
    %cst_65 = arith.constant dense<0.000000e+00> : vector<40xf32>
    %283 = vector.multi_reduction <add>, %282, %cst_65 [1] : vector<40x40xf32> to vector<40xf32>
    %284 = vector.shape_cast %283 : vector<40xf32> to vector<40x1xf32>
    %285 = tpu.reciprocal %284 {approx = true} : vector<40x1xf32> -> vector<40x1xf32>
    %286 = vector.broadcast %285 : vector<40x1xf32> to vector<40x40xf32>
    %287 = arith.mulf %282, %286 : vector<40x40xf32>
    %288 = arith.truncf %287 : vector<40x40xf32> to vector<40x40xbf16>
    %cst_66 = arith.constant dense<0.000000e+00> : vector<40x8xf32>
    %289 = tpu.matmul %288, %275, %cst_66 {dimension_numbers = #tpu.dot_dimension_numbers<[1], [0], [0], [1], [0, 0, 1, 1], [], []>} : vector<40x40xbf16>, vector<40x8xbf16>, vector<40x8xf32> -> vector<40x8xf32>
    %290 = vector.extract_strided_slice %234 {offsets = [0, 24], sizes = [40, 8], strides = [1, 1]} : vector<40x32xbf16> to vector<40x8xbf16>
    %291 = vector.extract_strided_slice %236 {offsets = [0, 24], sizes = [40, 8], strides = [1, 1]} : vector<40x32xbf16> to vector<40x8xbf16>
    %292 = vector.extract_strided_slice %238 {offsets = [0, 24], sizes = [40, 8], strides = [1, 1]} : vector<40x32xbf16> to vector<40x8xbf16>
    %cst_67 = arith.constant dense<0.000000e+00> : vector<40x40xf32>
    %293 = tpu.matmul %290, %291, %cst_67 {dimension_numbers = #tpu.dot_dimension_numbers<[1], [1], [0], [0], [0, 0, 1, 0], [], []>} : vector<40x8xbf16>, vector<40x8xbf16>, vector<40x40xf32> -> vector<40x40xf32>
    %294 = arith.addf %293, %26 : vector<40x40xf32>
    %cst_68 = arith.constant dense<0xFF800000> : vector<40xf32>
    %295 = vector.multi_reduction <maximumf>, %294, %cst_68 [1] : vector<40x40xf32> to vector<40xf32>
    %296 = vector.shape_cast %295 : vector<40xf32> to vector<40x1xf32>
    %297 = vector.broadcast %296 : vector<40x1xf32> to vector<40x40xf32>
    %298 = arith.subf %294, %297 : vector<40x40xf32>
    %299 = math.exp %298 : vector<40x40xf32>
    %cst_69 = arith.constant dense<0.000000e+00> : vector<40xf32>
    %300 = vector.multi_reduction <add>, %299, %cst_69 [1] : vector<40x40xf32> to vector<40xf32>
    %301 = vector.shape_cast %300 : vector<40xf32> to vector<40x1xf32>
    %302 = tpu.reciprocal %301 {approx = true} : vector<40x1xf32> -> vector<40x1xf32>
    %303 = vector.broadcast %302 : vector<40x1xf32> to vector<40x40xf32>
    %304 = arith.mulf %299, %303 : vector<40x40xf32>
    %305 = arith.truncf %304 : vector<40x40xf32> to vector<40x40xbf16>
    %cst_70 = arith.constant dense<0.000000e+00> : vector<40x8xf32>
    %306 = tpu.matmul %305, %292, %cst_70 {dimension_numbers = #tpu.dot_dimension_numbers<[1], [0], [0], [1], [0, 0, 1, 1], [], []>} : vector<40x40xbf16>, vector<40x8xbf16>, vector<40x8xf32> -> vector<40x8xf32>
    %307 = tpu.concatenate %255, %272, %289, %306 in 1 : vector<40x8xf32>, vector<40x8xf32>, vector<40x8xf32>, vector<40x8xf32> -> vector<40x32xf32>
    %308 = arith.truncf %307 : vector<40x32xf32> to vector<40x32xbf16>
    %309 = vector.extract_strided_slice %196 {offsets = [0, 384], sizes = [32, 32], strides = [1, 1]} : vector<32x512xbf16> to vector<32x32xbf16>
    %cst_71 = arith.constant dense<0.000000e+00> : vector<40x32xf32>
    %310 = tpu.matmul %308, %309, %cst_71 {dimension_numbers = #tpu.dot_dimension_numbers<[1], [0], [0], [1], [0, 0, 1, 1], [], []>} : vector<40x32xbf16>, vector<32x32xbf16>, vector<40x32xf32> -> vector<40x32xf32>
    %311 = arith.addf %195, %310 : vector<40x32xf32>
    %312 = vector.broadcast %201 : vector<1x32xf32> to vector<40x32xf32>
    %313 = arith.addf %311, %312 : vector<40x32xf32>
    %cst_72 = arith.constant dense<0.000000e+00> : vector<40xf32>
    %314 = vector.multi_reduction <add>, %313, %cst_72 [1] : vector<40x32xf32> to vector<40xf32>
    %315 = vector.shape_cast %314 : vector<40xf32> to vector<40x1xf32>
    %cst_73 = arith.constant 3.200000e+01 : f32
    %316 = vector.broadcast %cst_73 : f32 to vector<40x1xf32>
    %317 = arith.divf %315, %316 : vector<40x1xf32>
    %318 = vector.broadcast %317 : vector<40x1xf32> to vector<40x32xf32>
    %319 = arith.subf %313, %318 : vector<40x32xf32>
    %320 = arith.mulf %319, %319 : vector<40x32xf32>
    %cst_74 = arith.constant dense<0.000000e+00> : vector<40xf32>
    %321 = vector.multi_reduction <add>, %320, %cst_74 [1] : vector<40x32xf32> to vector<40xf32>
    %322 = vector.shape_cast %321 : vector<40xf32> to vector<40x1xf32>
    %cst_75 = arith.constant 3.200000e+01 : f32
    %323 = vector.broadcast %cst_75 : f32 to vector<40x1xf32>
    %324 = arith.divf %322, %323 : vector<40x1xf32>
    %325 = vector.broadcast %317 : vector<40x1xf32> to vector<40x32xf32>
    %326 = arith.subf %313, %325 : vector<40x32xf32>
    %cst_76 = arith.constant 9.99999997E-7 : f32
    %327 = vector.broadcast %cst_76 : f32 to vector<40x1xf32>
    %328 = arith.addf %324, %327 : vector<40x1xf32>
    %329 = math.rsqrt %328 : vector<40x1xf32>
    %330 = vector.broadcast %329 : vector<40x1xf32> to vector<40x32xf32>
    %331 = arith.mulf %326, %330 : vector<40x32xf32>
    %332 = vector.broadcast %202 : vector<1x32xf32> to vector<40x32xf32>
    %333 = arith.mulf %331, %332 : vector<40x32xf32>
    %334 = vector.broadcast %203 : vector<1x32xf32> to vector<40x32xf32>
    %335 = arith.addf %333, %334 : vector<40x32xf32>
    %336 = arith.truncf %335 : vector<40x32xf32> to vector<40x32xbf16>
    %337 = vector.extract_strided_slice %196 {offsets = [0, 0], sizes = [32, 128], strides = [1, 1]} : vector<32x512xbf16> to vector<32x128xbf16>
    %cst_77 = arith.constant dense<0.000000e+00> : vector<40x128xf32>
    %338 = tpu.matmul %336, %337, %cst_77 {dimension_numbers = #tpu.dot_dimension_numbers<[1], [0], [0], [1], [0, 0, 1, 1], [], []>} : vector<40x32xbf16>, vector<32x128xbf16>, vector<40x128xf32> -> vector<40x128xf32>
    %339 = vector.broadcast %204 : vector<1x128xf32> to vector<40x128xf32>
    %340 = arith.addf %338, %339 : vector<40x128xf32>
    %341 = arith.mulf %340, %340 : vector<40x128xf32>
    %342 = arith.mulf %340, %341 : vector<40x128xf32>
    %cst_78 = arith.constant 4.471500e-02 : f32
    %343 = vector.broadcast %cst_78 : f32 to vector<40x128xf32>
    %344 = arith.mulf %343, %342 : vector<40x128xf32>
    %345 = arith.addf %340, %344 : vector<40x128xf32>
    %cst_79 = arith.constant 0.797884583 : f32
    %346 = vector.broadcast %cst_79 : f32 to vector<40x128xf32>
    %347 = arith.mulf %346, %345 : vector<40x128xf32>
    %348 = math.tanh %347 : vector<40x128xf32>
    %cst_80 = arith.constant 1.000000e+00 : f32
    %349 = vector.broadcast %cst_80 : f32 to vector<40x128xf32>
    %350 = arith.addf %349, %348 : vector<40x128xf32>
    %cst_81 = arith.constant 5.000000e-01 : f32
    %351 = vector.broadcast %cst_81 : f32 to vector<40x128xf32>
    %352 = arith.mulf %351, %350 : vector<40x128xf32>
    %353 = arith.mulf %340, %352 : vector<40x128xf32>
    %354 = arith.truncf %353 : vector<40x128xf32> to vector<40x128xbf16>
    %355 = vector.extract_strided_slice %196 {offsets = [0, 128], sizes = [32, 128], strides = [1, 1]} : vector<32x512xbf16> to vector<32x128xbf16>
    %cst_82 = arith.constant dense<0.000000e+00> : vector<40x32xf32>
    %356 = tpu.matmul %354, %355, %cst_82 {dimension_numbers = #tpu.dot_dimension_numbers<[1], [1], [0], [0], [0, 0, 1, 0], [], []>} : vector<40x128xbf16>, vector<32x128xbf16>, vector<40x32xf32> -> vector<40x32xf32>
    %357 = vector.broadcast %205 : vector<1x32xf32> to vector<40x32xf32>
    %358 = arith.addf %356, %357 : vector<40x32xf32>
    %359 = arith.addf %313, %358 : vector<40x32xf32>
    %c40 = arith.constant 40 : index
    %c0_83 = arith.constant 0 : index
    %360 = vector.load %arg2[%c40, %c0_83] : memref<64x128xf32, #tpu.memory_space<vmem>>, vector<1x32xf32>
    %c41 = arith.constant 41 : index
    %c0_84 = arith.constant 0 : index
    %361 = vector.load %arg2[%c41, %c0_84] : memref<64x128xf32, #tpu.memory_space<vmem>>, vector<1x32xf32>
    %cst_85 = arith.constant dense<0.000000e+00> : vector<40xf32>
    %362 = vector.multi_reduction <add>, %359, %cst_85 [1] : vector<40x32xf32> to vector<40xf32>
    %363 = vector.shape_cast %362 : vector<40xf32> to vector<40x1xf32>
    %cst_86 = arith.constant 3.200000e+01 : f32
    %364 = vector.broadcast %cst_86 : f32 to vector<40x1xf32>
    %365 = arith.divf %363, %364 : vector<40x1xf32>
    %366 = vector.broadcast %365 : vector<40x1xf32> to vector<40x32xf32>
    %367 = arith.subf %359, %366 : vector<40x32xf32>
    %368 = arith.mulf %367, %367 : vector<40x32xf32>
    %cst_87 = arith.constant dense<0.000000e+00> : vector<40xf32>
    %369 = vector.multi_reduction <add>, %368, %cst_87 [1] : vector<40x32xf32> to vector<40xf32>
    %370 = vector.shape_cast %369 : vector<40xf32> to vector<40x1xf32>
    %cst_88 = arith.constant 3.200000e+01 : f32
    %371 = vector.broadcast %cst_88 : f32 to vector<40x1xf32>
    %372 = arith.divf %370, %371 : vector<40x1xf32>
    %373 = vector.broadcast %365 : vector<40x1xf32> to vector<40x32xf32>
    %374 = arith.subf %359, %373 : vector<40x32xf32>
    %cst_89 = arith.constant 9.99999997E-7 : f32
    %375 = vector.broadcast %cst_89 : f32 to vector<40x1xf32>
    %376 = arith.addf %372, %375 : vector<40x1xf32>
    %377 = math.rsqrt %376 : vector<40x1xf32>
    %378 = vector.broadcast %377 : vector<40x1xf32> to vector<40x32xf32>
    %379 = arith.mulf %374, %378 : vector<40x32xf32>
    %380 = vector.broadcast %360 : vector<1x32xf32> to vector<40x32xf32>
    %381 = arith.mulf %379, %380 : vector<40x32xf32>
    %382 = vector.broadcast %361 : vector<1x32xf32> to vector<40x32xf32>
    %383 = arith.addf %381, %382 : vector<40x32xf32>
    %c0_90 = arith.constant 0 : index
    %c0_91 = arith.constant 0 : index
    %384 = vector.load %arg3[%c0_90, %c0_91] : memref<40x32xf32, #tpu.memory_space<vmem>>, vector<40x32xf32>
    tpu.vector_store %arg3[%c0_90, %c0_91], %383 {strides = array<i32>} : memref<40x32xf32, #tpu.memory_space<vmem>>, vector<40x32xf32>,
    return
  }
}

</mosaic_0001>

<llo_original>
// kernel: vision_transformer_forward.1
$region0: #{vision_transformer_forward.1}
  #allocation0 [shape = 'u32[]', space=smem, size = 0x4, offset = 0x4, fixed_abs, tag = 'smem constant byte address 0x4 - core index']
  #allocation1 [shape = 'u32[72,128]{1,0:T(1,128)}', space=vmem, size = 0x9000, scoped, tag = 'internal scratch']
  %s0 = inlined_call_operand.vmem [shape: bf16[40,64], index: 0, kind: input, shape index: {}]
  %s1 = inlined_call_operand.vmem [shape: bf16[128,512], index: 1, kind: input, shape index: {}]
  %s2 = inlined_call_operand.vmem [shape: f32[64,128], index: 2, kind: input, shape index: {}]
  %s3 = inlined_call_operand.vmem [shape: f32[40,32], index: 3, kind: output, shape index: {}]
  %s4 = sld [smem:[#allocation0]]
  $region22: #{vision_transformer_forward.1} parent=0
    _
  %s6 = ssub.s32 1, %s4
  %s7 = scalar_select 0, %s6, %s4
  // Predicated region
  $region2: #{vision_transformer_forward.1} parent=0 // pred_check
    _
  $region3: #{vision_transformer_forward.1} parent=0 // pred_check_branch
    %9 = sbr.rel (0) target = $region5
  $region4: #{vision_transformer_forward.1} parent=0 // pred_region
    _
  $region5: #{vision_transformer_forward.1} parent=0 // pred_fallthru
    _
  // Predicated region
  $region6: #{vision_transformer_forward.1} parent=0 // pred_check
    _
  $region7: #{vision_transformer_forward.1} parent=0 // pred_check_branch
    %11 = sbr.rel (0) target = $region9
  $region8: #{vision_transformer_forward.1} parent=0 // pred_region
    _
  $region9: #{vision_transformer_forward.1} parent=0 // pred_fallthru
    _
  // Predicated region
  $region10: #{vision_transformer_forward.1} parent=0 // pred_check
    _
  $region11: #{vision_transformer_forward.1} parent=0 // pred_check_branch
    %13 = sbr.rel (0) target = $region13
  $region12: #{vision_transformer_forward.1} parent=0 // pred_region
    _
  $region13: #{vision_transformer_forward.1} parent=0 // pred_fallthru
    _
  %v15 = vlaneseq
  %v16 = vshrl.u32 %v15, 7
  %v17 = vadd.s32 %v16, 8
  %v18 = vadd.s32 %v16, 16
  %v19 = vadd.s32 %v16, 24
  %v20 = vadd.s32 %v16, 32
  %v21 = vlaneseq
  %v22 = vand.u32 %v21, 127
  %vm23 = vcmp.ge.s32.totalorder %v16, 17
  %vm24 = vcmp.ge.s32.totalorder %v17, 17
  %vm25 = vcmp.ge.s32.totalorder %v18, 17
  %vm26 = vcmp.ge.s32.totalorder %v19, 17
  %vm27 = vcmp.ge.s32.totalorder %v20, 17
  %v28 = vsel %vm23, 1, 0
  %v29 = vsel %vm24, 1, 0
  %v30 = vsel %vm25, 1, 0
  %v31 = vsel %vm26, 1, 0
  %v32 = vsel %vm27, 1, 0
  %vm33 = vcmp.ge.s32.totalorder %v22, 17
  %v34 = vsel %vm33, 1, 0
  %vm35 = vcmp.ge.s32.totalorder %v16, 34
  %vm36 = vcmp.ge.s32.totalorder %v17, 34
  %vm37 = vcmp.ge.s32.totalorder %v18, 34
  %vm38 = vcmp.ge.s32.totalorder %v19, 34
  %vm39 = vcmp.ge.s32.totalorder %v20, 34
  %v40 = vsel %vm35, 1, 0
  %v41 = vsel %vm36, 1, 0
  %v42 = vsel %vm37, 1, 0
  %v43 = vsel %vm38, 1, 0
  %v44 = vsel %vm39, 1, 0
  %v45 = vadd.s32 %v28, %v40
  %v46 = vadd.s32 %v29, %v41
  %v47 = vadd.s32 %v30, %v42
  %v48 = vadd.s32 %v31, %v43
  %v49 = vadd.s32 %v32, %v44
  %vm50 = vcmp.ge.s32.totalorder %v22, 34
  %v51 = vsel %vm50, 1, 0
  %v52 = vadd.s32 %v34, %v51
  %vm53 = vcmp.eq.s32.totalorder %v45, %v52
  %vm54 = vcmp.eq.s32.totalorder %v46, %v52
  %vm55 = vcmp.eq.s32.totalorder %v47, %v52
  %vm56 = vcmp.eq.s32.totalorder %v48, %v52
  %vm57 = vcmp.eq.s32.totalorder %v49, %v52
  %vm58 = vmor %vm53, %vm35
  %vm59 = vmor %vm54, %vm36
  %vm60 = vmor %vm55, %vm37
  %vm61 = vmor %vm56, %vm38
  %vm62 = vmor %vm57, %vm39
  %v63 = vsel %vm58, 0.0, -1e+30
  %v64 = vsel %vm59, 0.0, -1e+30
  %v65 = vsel %vm60, 0.0, -1e+30
  %v66 = vsel %vm61, 0.0, -1e+30
  %v67 = vsel %vm62, 0.0, -1e+30
  %v68 = vld [vmem:[%s0] sm:$0xf]
  %v69 = vld [vmem:[%s0 + $0x4] sm:$0xf]
  %v70 = vld [vmem:[%s0 + $0x8] sm:$0xf]
  %v71 = vld [vmem:[%s0 + $0xc] sm:$0xf]
  %v72 = vld [vmem:[%s0 + $0x10] sm:$0xf]
  %v73 = vld [vmem:[%s1] sm:$0xf]
  %v74 = vld [vmem:[%s1 + $0x10] sm:$0xf]
  %v75 = vld [vmem:[%s1 + $0x20] sm:$0xf]
  %v76 = vld [vmem:[%s1 + $0x30] sm:$0xf]
  %v77 = vld [vmem:[%s1 + $0x40] sm:$0xf]
  %v78 = vld [vmem:[%s1 + $0x50] sm:$0xf]
  %v79 = vld [vmem:[%s1 + $0x60] sm:$0xf]
  %v80 = vld [vmem:[%s1 + $0x70] sm:$0xf]
  %v81 = vld [vmem:[%s2] sm:$0xff]
  %v82 = vld [vmem:[%s2 + $0x8] sm:$0xff]
  %v83 = vld [vmem:[%s2 + $0x10] sm:$0xff]
  %v84 = vld [vmem:[%s2 + $0x18] sm:$0xff]
  %v85 = vld [vmem:[%s2 + $0x20] sm:$0xff]
  %v91 = vunpack.c.l.b16 %v68
  %v92 = vunpack.c.l.b16 %v69
  %v93 = vunpack.c.l.b16 %v70
  %v94 = vunpack.c.l.b16 %v71
  %v95 = vunpack.c.l.b16 %v72
  %v96 = vpack.c.b16 %v92, %v91
  %v97 = vpack.c.b16 %v94, %v93
  %v98 = vpack.c.b16 %v95, %v95
  %v107 = vunpack.c.l.b16 %v73
  %v108 = vunpack.c.l.b16 %v74
  %v109 = vunpack.c.l.b16 %v75
  %v110 = vunpack.c.l.b16 %v76
  %v111 = vunpack.c.l.b16 %v77
  %v112 = vunpack.c.l.b16 %v78
  %v113 = vunpack.c.l.b16 %v79
  %v114 = vunpack.c.l.b16 %v80
  %v115 = vpack.c.b16 %v108, %v107
  %v116 = vpack.c.b16 %v110, %v109
  %v117 = vpack.c.b16 %v112, %v111
  %v118 = vpack.c.b16 %v114, %v113
  %vm123 = vcmask 523264
  %v125 = vsel %vm123, %v96, 0
  %v128 = vsel %vm123, %v97, 0
  %v131 = vsel %vm123, %v98, 0
  %133 = vmatpush.bf16.msra.mxu0 0
  %134 = vmatpush.bf16.msra.mxu0 0
  %135 = vmatpush.bf16.msra.mxu0 0
  %136 = vmatpush.bf16.msra.mxu0 0
  %137 = vmatpush.bf16.msra.mxu0 %v118
  %138 = vmatpush.bf16.msra.mxu0 %v117
  %139 = vmatpush.bf16.msra.mxu0 %v116
  %140 = vmatpush.bf16.msra.mxu0 %v115
  %141 = vmatmul.bf16.gmra.mxu0 %v125
  %v142 = vpop.f32.mrf.mxu0
  %v143 = vadd.f32 %v81, %v142
  %v144 = vpop.f32.mrf.mxu0
  %v145 = vadd.f32 %v82, %v144
  %146 = vmatmul.bf16.gmra.mxu0 %v128
  %v147 = vpop.f32.mrf.mxu0
  %v148 = vadd.f32 %v83, %v147
  %v149 = vpop.f32.mrf.mxu0
  %v150 = vadd.f32 %v84, %v149
  %151 = vmatmul.bf16.gmra.mxu0 %v131
  %v152 = vpop.f32.mrf.mxu0
  %v153 = vadd.f32 %v85, %v152
  %v154 = vpop.f32.mrf.mxu0
  %155 = vdwg.mxu0
  %v156 = vld [vmem:[%s1 + $0x80] sm:$0xff]
  %v157 = vld [vmem:[%s1 + $0x88] sm:$0xff]
  %v158 = vld [vmem:[%s1 + $0x90] sm:$0xff]
  %v159 = vld [vmem:[%s1 + $0x98] sm:$0xff]
  %v160 = vld [vmem:[%s1 + $0xa0] sm:$0xff]
  %v161 = vld [vmem:[%s1 + $0xa8] sm:$0xff]
  %v162 = vld [vmem:[%s1 + $0xb0] sm:$0xff]
  %v163 = vld [vmem:[%s1 + $0xb8] sm:$0xff]
  %v164 = vld [vmem:[%s2 + $0x30] sm:$0xff]
  %vm165 = vcmask 261120
  %v166 = vsel %vm165, %v143, 0.0
  %167 = vadd.xlane.f32.xlu0 %v166
  %v168 = vpop.xlane.xlu0 %167
  %v169 = vsel %vm165, %v145, 0.0
  %170 = vadd.xlane.f32.xlu0 %v169
  %v171 = vpop.xlane.xlu0 %170
  %v172 = vsel %vm165, %v148, 0.0
  %173 = vadd.xlane.f32.xlu0 %v172
  %v174 = vpop.xlane.xlu0 %173
  %v175 = vsel %vm165, %v150, 0.0
  %176 = vadd.xlane.f32.xlu0 %v175
  %v177 = vpop.xlane.xlu0 %176
  %v178 = vsel %vm165, %v153, 0.0
  %179 = vadd.xlane.f32.xlu0 %v178
  %v180 = vpop.xlane.xlu0 %179
  %v181 = vrcp.pop 32.0
  %v182 = vmul.f32 32.0, %v181
  %v183 = vsub.f32 1.0, %v182
  %v184 = vmul.f32 %v181, %v183
  %v185 = vadd.f32 %v181, %v184
  %vm186 = vweird.f32 %v181
  %v187 = vsel %vm186, %v181, %v185
  %v188 = vmul.f32 %v168, %v187
  %v189 = vmul.f32 %v171, %v187
  %v190 = vmul.f32 %v174, %v187
  %v191 = vmul.f32 %v177, %v187
  %v192 = vmul.f32 %v180, %v187
  %v193 = vsub.f32 %v143, %v188
  %v194 = vsub.f32 %v145, %v189
  %v195 = vsub.f32 %v148, %v190
  %v196 = vsub.f32 %v150, %v191
  %v197 = vsub.f32 %v153, %v192
  %v198 = vmul.f32 %v193, %v193
  %v199 = vmul.f32 %v194, %v194
  %v200 = vmul.f32 %v195, %v195
  %v201 = vmul.f32 %v196, %v196
  %v202 = vmul.f32 %v197, %v197
  %v203 = vsel %vm165, %v198, 0.0
  %204 = vadd.xlane.f32.xlu0 %v203
  %v205 = vpop.xlane.xlu0 %204
  %v206 = vsel %vm165, %v199, 0.0
  %207 = vadd.xlane.f32.xlu0 %v206
  %v208 = vpop.xlane.xlu0 %207
  %v209 = vsel %vm165, %v200, 0.0
  %210 = vadd.xlane.f32.xlu0 %v209
  %v211 = vpop.xlane.xlu0 %210
  %v212 = vsel %vm165, %v201, 0.0
  %213 = vadd.xlane.f32.xlu0 %v212
  %v214 = vpop.xlane.xlu0 %213
  %v215 = vsel %vm165, %v202, 0.0
  %216 = vadd.xlane.f32.xlu0 %v215
  %v217 = vpop.xlane.xlu0 %216
  %v218 = vmul.f32 %v205, %v187
  %v219 = vmul.f32 %v208, %v187
  %v220 = vmul.f32 %v211, %v187
  %v221 = vmul.f32 %v214, %v187
  %v222 = vmul.f32 %v217, %v187
  %v223 = vadd.f32 %v218, 1e-06
  %v224 = vadd.f32 %v219, 1e-06
  %v225 = vadd.f32 %v220, 1e-06
  %v226 = vadd.f32 %v221, 1e-06
  %v227 = vadd.f32 %v222, 1e-06
  %v228 = vrsqrt.pop %v223
  %v229 = vmul.f32 %v228, %v223
  %v230 = vmul.f32 %v229, %v228
  %v231 = vmul.f32 0.5, %v230
  %v232 = vsub.f32 1.5, %v231
  %v233 = vmul.f32 %v228, %v232
  %vm234 = vweird.f32 %v223
  %vm235 = vweird.f32 %v228
  %vm236 = vmor %vm234, %vm235
  %v237 = vsel %vm236, %v228, %v233
  %v238 = vrsqrt.pop %v224
  %v239 = vmul.f32 %v238, %v224
  %v240 = vmul.f32 %v239, %v238
  %v241 = vmul.f32 0.5, %v240
  %v242 = vsub.f32 1.5, %v241
  %v243 = vmul.f32 %v238, %v242
  %vm244 = vweird.f32 %v224
  %vm245 = vweird.f32 %v238
  %vm246 = vmor %vm244, %vm245
  %v247 = vsel %vm246, %v238, %v243
  %v248 = vrsqrt.pop %v225
  %v249 = vmul.f32 %v248, %v225
  %v250 = vmul.f32 %v249, %v248
  %v251 = vmul.f32 0.5, %v250
  %v252 = vsub.f32 1.5, %v251
  %v253 = vmul.f32 %v248, %v252
  %vm254 = vweird.f32 %v225
  %vm255 = vweird.f32 %v248
  %vm256 = vmor %vm254, %vm255
  %v257 = vsel %vm256, %v248, %v253
  %v258 = vrsqrt.pop %v226
  %v259 = vmul.f32 %v258, %v226
  %v260 = vmul.f32 %v259, %v258
  %v261 = vmul.f32 0.5, %v260
  %v262 = vsub.f32 1.5, %v261
  %v263 = vmul.f32 %v258, %v262
  %vm264 = vweird.f32 %v226
  %vm265 = vweird.f32 %v258
  %vm266 = vmor %vm264, %vm265
  %v267 = vsel %vm266, %v258, %v263
  %v268 = vrsqrt.pop %v227
  %v269 = vmul.f32 %v268, %v227
  %v270 = vmul.f32 %v269, %v268
  %v271 = vmul.f32 0.5, %v270
  %v272 = vsub.f32 1.5, %v271
  %v273 = vmul.f32 %v268, %v272
  %vm274 = vweird.f32 %v227
  %vm275 = vweird.f32 %v268
  %vm276 = vmor %vm274, %vm275
  %v277 = vsel %vm276, %v268, %v273
  %v278 = vmul.f32 %v193, %v237
  %v279 = vmul.f32 %v194, %v247
  %v280 = vmul.f32 %v195, %v257
  %v281 = vmul.f32 %v196, %v267
  %v282 = vmul.f32 %v197, %v277
  %v283 = vperm.slane %v164, 0
  %v284 = vmul.f32 %v278, %v283
  %v285 = vmul.f32 %v279, %v283
  %v286 = vmul.f32 %v280, %v283
  %v287 = vmul.f32 %v281, %v283
  %v288 = vmul.f32 %v282, %v283
  %v289 = vperm.slane %v164, 1
  %v290 = vadd.f32 %v284, %v289
  %v291 = vadd.f32 %v285, %v289
  %v292 = vadd.f32 %v286, %v289
  %v293 = vadd.f32 %v287, %v289
  %v294 = vadd.f32 %v288, %v289
  %v295 = vpack.c.bf16 %v291, %v290
  %v296 = vpack.c.bf16 %v293, %v292
  %v297 = vpack.c.bf16 %v294, %v294
  %v298 = vperm.slane %v164, 2
  %v303 = vunpack.c.l.b16 %v157
  %v304 = vunpack.c.l.b16 %v159
  %v305 = vunpack.c.l.b16 %v161
  %v306 = vunpack.c.l.b16 %v163
  %v307 = vpack.c.b16 %v304, %v303
  %v308 = vpack.c.b16 %v306, %v305
  %v312 = vsel %vm165, %v295, 0
  %v315 = vsel %vm165, %v296, 0
  %v318 = vsel %vm165, %v297, 0
  %320 = vmatpush.bf16.msra.mxu0 0
  %321 = vmatpush.bf16.msra.mxu0 0
  %322 = vmatpush.bf16.msra.mxu0 0
  %323 = vmatpush.bf16.msra.mxu0 0
  %324 = vmatpush.bf16.msra.mxu0 0
  %325 = vmatpush.bf16.msra.mxu0 0
  %326 = vmatpush.bf16.msra.mxu0 %v308
  %327 = vmatpush.bf16.msra.mxu0 %v307
  %328 = vmatmul.bf16.gmra.mxu0 %v312
  %v329 = vpop.f32.mrf.mxu0
  %v330 = vadd.f32 %v298, %v329
  %v331 = vpop.f32.mrf.mxu0
  %v332 = vadd.f32 %v298, %v331
  %333 = vmatmul.bf16.gmra.mxu0 %v315
  %v334 = vpop.f32.mrf.mxu0
  %v335 = vadd.f32 %v298, %v334
  %v336 = vpop.f32.mrf.mxu0
  %v337 = vadd.f32 %v298, %v336
  %338 = vmatmul.bf16.gmra.mxu0 %v318
  %v339 = vpop.f32.mrf.mxu0
  %v340 = vadd.f32 %v298, %v339
  %v341 = vpop.f32.mrf.mxu0
  %342 = vdwg.mxu0
  %v343 = vpack.c.bf16 %v330, %v330
  %v344 = vpack.c.bf16 %v332, %v332
  %v345 = vpack.c.bf16 %v335, %v335
  %v346 = vpack.c.bf16 %v337, %v337
  %v347 = vpack.c.bf16 %v340, %v340
  %v353 = vunpack.c.l.b16 %v343
  %v354 = vunpack.c.l.b16 %v344
  %v355 = vunpack.c.l.b16 %v345
  %v356 = vunpack.c.l.b16 %v346
  %v357 = vunpack.c.l.b16 %v347
  %v358 = vpack.c.b16 %v354, %v353
  %v359 = vpack.c.b16 %v356, %v355
  %v360 = vpack.c.b16 %v357, %v357
  %361 = vrot.lane.b32.xlu0 %v358, 96
  %v362 = vpop.permute.xlu0 %361
  %363 = vrot.lane.b32.xlu0 %v359, 96
  %v364 = vpop.permute.xlu0 %363
  %365 = vrot.lane.b32.xlu0 %v360, 96
  %v366 = vpop.permute.xlu0 %365
  %vm367 = vcmask 64512
  %v369 = vsel %vm367, %v358, 0
  %v372 = vsel %vm367, %v359, 0
  %v375 = vsel %vm367, %v360, 0
  %v378 = vsel %vm367, %v362, 0
  %v381 = vsel %vm367, %v364, 0
  %v384 = vsel %vm367, %v366, 0
  %386 = vmatpush.bf16.xpose.msra.mxu0 0
  %387 = vmatpush.bf16.xpose.msra.mxu0 0
  %388 = vmatpush.bf16.xpose.msra.mxu0 0
  %389 = vmatpush.bf16.xpose.msra.mxu0 0
  %390 = vmatpush.bf16.xpose.msra.mxu0 0
  %391 = vmatpush.bf16.xpose.msra.mxu0 %v384
  %392 = vmatpush.bf16.xpose.msra.mxu0 %v381
  %393 = vmatpush.bf16.xpose.msra.mxu0 %v378
  %394 = vmatmul.bf16.gmra.mxu0 %v369
  %v395 = vpop.f32.mrf.mxu0
  %v396 = vadd.f32 %v63, %v395
  %v397 = vpop.f32.mrf.mxu0
  %v398 = vadd.f32 %v64, %v397
  %399 = vmatmul.bf16.gmra.mxu0 %v372
  %v400 = vpop.f32.mrf.mxu0
  %v401 = vadd.f32 %v65, %v400
  %v402 = vpop.f32.mrf.mxu0
  %v403 = vadd.f32 %v66, %v402
  %404 = vmatmul.bf16.gmra.mxu0 %v375
  %v405 = vpop.f32.mrf.mxu0
  %v406 = vadd.f32 %v67, %v405
  %v407 = vpop.f32.mrf.mxu0
  %408 = vdwg.mxu0
  %vm409 = vcmask 326656
  %v410 = vsel %vm409, %v396, -inf
  %411 = vmax.xlane.f32.xlu0 %v410
  %v412 = vpop.xlane.xlu0 %411
  %v413 = vsel %vm409, %v398, -inf
  %414 = vmax.xlane.f32.xlu0 %v413
  %v415 = vpop.xlane.xlu0 %414
  %v416 = vsel %vm409, %v401, -inf
  %417 = vmax.xlane.f32.xlu0 %v416
  %v418 = vpop.xlane.xlu0 %417
  %v419 = vsel %vm409, %v403, -inf
  %420 = vmax.xlane.f32.xlu0 %v419
  %v421 = vpop.xlane.xlu0 %420
  %v422 = vsel %vm409, %v406, -inf
  %423 = vmax.xlane.f32.xlu0 %v422
  %v424 = vpop.xlane.xlu0 %423
  %v425 = vsub.f32 %v396, %v412
  %v426 = vsub.f32 %v398, %v415
  %v427 = vsub.f32 %v401, %v418
  %v428 = vsub.f32 %v403, %v421
  %v429 = vsub.f32 %v406, %v424
  %v430 = vmul.f32 %v425, 1.442695
  %v431 = vpow.pop %v430
  %v432 = vmul.f32 %v426, 1.442695
  %v433 = vpow.pop %v432
  %v434 = vmul.f32 %v427, 1.442695
  %v435 = vpow.pop %v434
  %v436 = vmul.f32 %v428, 1.442695
  %v437 = vpow.pop %v436
  %v438 = vmul.f32 %v429, 1.442695
  %v439 = vpow.pop %v438
  %v440 = vsel %vm409, %v431, 0.0
  %441 = vadd.xlane.f32.xlu0 %v440
  %v442 = vpop.xlane.xlu0 %441
  %v443 = vsel %vm409, %v433, 0.0
  %444 = vadd.xlane.f32.xlu0 %v443
  %v445 = vpop.xlane.xlu0 %444
  %v446 = vsel %vm409, %v435, 0.0
  %447 = vadd.xlane.f32.xlu0 %v446
  %v448 = vpop.xlane.xlu0 %447
  %v449 = vsel %vm409, %v437, 0.0
  %450 = vadd.xlane.f32.xlu0 %v449
  %v451 = vpop.xlane.xlu0 %450
  %v452 = vsel %vm409, %v439, 0.0
  %453 = vadd.xlane.f32.xlu0 %v452
  %v454 = vpop.xlane.xlu0 %453
  %v455 = vrcp.pop %v442
  %v456 = vrcp.pop %v445
  %v457 = vrcp.pop %v448
  %v458 = vrcp.pop %v451
  %v459 = vrcp.pop %v454
  %v460 = vmul.f32 %v431, %v455
  %v461 = vmul.f32 %v433, %v456
  %v462 = vmul.f32 %v435, %v457
  %v463 = vmul.f32 %v437, %v458
  %v464 = vmul.f32 %v439, %v459
  %v465 = vpack.c.bf16 %v461, %v460
  %v466 = vpack.c.bf16 %v463, %v462
  %v467 = vpack.c.bf16 %v464, %v464
  %468 = vrot.lane.b32.xlu0 %v358, 64
  %v469 = vpop.permute.xlu0 %468
  %470 = vrot.lane.b32.xlu0 %v359, 64
  %v471 = vpop.permute.xlu0 %470
  %472 = vrot.lane.b32.xlu0 %v360, 64
  %v473 = vpop.permute.xlu0 %472
  %v477 = vsel %vm409, %v465, 0
  %v480 = vsel %vm409, %v466, 0
  %v483 = vsel %vm409, %v467, 0
  %vm485 = vcmask 1043456
  %v487 = vsel %vm485, %v473, 0
  %489 = vmatpush.bf16.msra.mxu0 0
  %490 = vmatpush.bf16.msra.mxu0 0
  %491 = vmatpush.bf16.msra.mxu0 0
  %492 = vmatpush.bf16.msra.mxu0 0
  %493 = vmatpush.bf16.msra.mxu0 0
  %494 = vmatpush.bf16.msra.mxu0 %v487
  %495 = vmatpush.bf16.msra.mxu0 %v471
  %496 = vmatpush.bf16.msra.mxu0 %v469
  %497 = vmatmul.bf16.gmra.mxu0 %v477
  %v498 = vpop.f32.mrf.mxu0
  %v499 = vadd.f32 0.0, %v498
  %v500 = vpop.f32.mrf.mxu0
  %v501 = vadd.f32 0.0, %v500
  %502 = vmatmul.bf16.gmra.mxu0 %v480
  %v503 = vpop.f32.mrf.mxu0
  %v504 = vadd.f32 0.0, %v503
  %v505 = vpop.f32.mrf.mxu0
  %v506 = vadd.f32 0.0, %v505
  %507 = vmatmul.bf16.gmra.mxu0 %v483
  %v508 = vpop.f32.mrf.mxu0
  %v509 = vadd.f32 0.0, %v508
  %v510 = vpop.f32.mrf.mxu0
  %511 = vdwg.mxu0
  %512 = vrot.lane.b32.xlu0 %v358, 120
  %v513 = vpop.permute.xlu0 %512
  %514 = vrot.lane.b32.xlu0 %v359, 120
  %v515 = vpop.permute.xlu0 %514
  %516 = vrot.lane.b32.xlu0 %v360, 120
  %v517 = vpop.permute.xlu0 %516
  %518 = vrot.lane.b32.xlu0 %v358, 88
  %v519 = vpop.permute.xlu0 %518
  %520 = vrot.lane.b32.xlu0 %v359, 88
  %v521 = vpop.permute.xlu0 %520
  %522 = vrot.lane.b32.xlu0 %v360, 88
  %v523 = vpop.permute.xlu0 %522
  %v525 = vsel %vm367, %v513, 0
  %v528 = vsel %vm367, %v515, 0
  %v531 = vsel %vm367, %v517, 0
  %v534 = vsel %vm367, %v519, 0
  %v537 = vsel %vm367, %v521, 0
  %v540 = vsel %vm367, %v523, 0
  %542 = vmatpush.bf16.xpose.msra.mxu0 0
  %543 = vmatpush.bf16.xpose.msra.mxu0 0
  %544 = vmatpush.bf16.xpose.msra.mxu0 0
  %545 = vmatpush.bf16.xpose.msra.mxu0 0
  %546 = vmatpush.bf16.xpose.msra.mxu0 0
  %547 = vmatpush.bf16.xpose.msra.mxu0 %v540
  %548 = vmatpush.bf16.xpose.msra.mxu0 %v537
  %549 = vmatpush.bf16.xpose.msra.mxu0 %v534
  %550 = vmatmul.bf16.gmra.mxu0 %v525
  %v551 = vpop.f32.mrf.mxu0
  %v552 = vadd.f32 %v63, %v551
  %v553 = vpop.f32.mrf.mxu0
  %v554 = vadd.f32 %v64, %v553
  %555 = vmatmul.bf16.gmra.mxu0 %v528
  %v556 = vpop.f32.mrf.mxu0
  %v557 = vadd.f32 %v65, %v556
  %v558 = vpop.f32.mrf.mxu0
  %v559 = vadd.f32 %v66, %v558
  %560 = vmatmul.bf16.gmra.mxu0 %v531
  %v561 = vpop.f32.mrf.mxu0
  %v562 = vadd.f32 %v67, %v561
  %v563 = vpop.f32.mrf.mxu0
  %564 = vdwg.mxu0
  %v565 = vsel %vm409, %v552, -inf
  %566 = vmax.xlane.f32.xlu0 %v565
  %v567 = vpop.xlane.xlu0 %566
  %v568 = vsel %vm409, %v554, -inf
  %569 = vmax.xlane.f32.xlu0 %v568
  %v570 = vpop.xlane.xlu0 %569
  %v571 = vsel %vm409, %v557, -inf
  %572 = vmax.xlane.f32.xlu0 %v571
  %v573 = vpop.xlane.xlu0 %572
  %v574 = vsel %vm409, %v559, -inf
  %575 = vmax.xlane.f32.xlu0 %v574
  %v576 = vpop.xlane.xlu0 %575
  %v577 = vsel %vm409, %v562, -inf
  %578 = vmax.xlane.f32.xlu0 %v577
  %v579 = vpop.xlane.xlu0 %578
  %v580 = vsub.f32 %v552, %v567
  %v581 = vsub.f32 %v554, %v570
  %v582 = vsub.f32 %v557, %v573
  %v583 = vsub.f32 %v559, %v576
  %v584 = vsub.f32 %v562, %v579
  %v585 = vmul.f32 %v580, 1.442695
  %v586 = vpow.pop %v585
  %v587 = vmul.f32 %v581, 1.442695
  %v588 = vpow.pop %v587
  %v589 = vmul.f32 %v582, 1.442695
  %v590 = vpow.pop %v589
  %v591 = vmul.f32 %v583, 1.442695
  %v592 = vpow.pop %v591
  %v593 = vmul.f32 %v584, 1.442695
  %v594 = vpow.pop %v593
  %v595 = vsel %vm409, %v586, 0.0
  %596 = vadd.xlane.f32.xlu0 %v595
  %v597 = vpop.xlane.xlu0 %596
  %v598 = vsel %vm409, %v588, 0.0
  %599 = vadd.xlane.f32.xlu0 %v598
  %v600 = vpop.xlane.xlu0 %599
  %v601 = vsel %vm409, %v590, 0.0
  %602 = vadd.xlane.f32.xlu0 %v601
  %v603 = vpop.xlane.xlu0 %602
  %v604 = vsel %vm409, %v592, 0.0
  %605 = vadd.xlane.f32.xlu0 %v604
  %v606 = vpop.xlane.xlu0 %605
  %v607 = vsel %vm409, %v594, 0.0
  %608 = vadd.xlane.f32.xlu0 %v607
  %v609 = vpop.xlane.xlu0 %608
  %v610 = vrcp.pop %v597
  %v611 = vrcp.pop %v600
  %v612 = vrcp.pop %v603
  %v613 = vrcp.pop %v606
  %v614 = vrcp.pop %v609
  %v615 = vmul.f32 %v586, %v610
  %v616 = vmul.f32 %v588, %v611
  %v617 = vmul.f32 %v590, %v612
  %v618 = vmul.f32 %v592, %v613
  %v619 = vmul.f32 %v594, %v614
  %v620 = vpack.c.bf16 %v616, %v615
  %v621 = vpack.c.bf16 %v618, %v617
  %v622 = vpack.c.bf16 %v619, %v619
  %623 = vrot.lane.b32.xlu0 %v358, 56
  %v624 = vpop.permute.xlu0 %623
  %625 = vrot.lane.b32.xlu0 %v359, 56
  %v626 = vpop.permute.xlu0 %625
  %627 = vrot.lane.b32.xlu0 %v360, 56
  %v628 = vpop.permute.xlu0 %627
  %v632 = vsel %vm409, %v620, 0
  %v635 = vsel %vm409, %v621, 0
  %v638 = vsel %vm409, %v622, 0
  %v641 = vsel %vm485, %v628, 0
  %643 = vmatpush.bf16.msra.mxu0 0
  %644 = vmatpush.bf16.msra.mxu0 0
  %645 = vmatpush.bf16.msra.mxu0 0
  %646 = vmatpush.bf16.msra.mxu0 0
  %647 = vmatpush.bf16.msra.mxu0 0
  %648 = vmatpush.bf16.msra.mxu0 %v641
  %649 = vmatpush.bf16.msra.mxu0 %v626
  %650 = vmatpush.bf16.msra.mxu0 %v624
  %651 = vmatmul.bf16.gmra.mxu0 %v632
  %v652 = vpop.f32.mrf.mxu0
  %v653 = vadd.f32 0.0, %v652
  %v654 = vpop.f32.mrf.mxu0
  %v655 = vadd.f32 0.0, %v654
  %656 = vmatmul.bf16.gmra.mxu0 %v635
  %v657 = vpop.f32.mrf.mxu0
  %v658 = vadd.f32 0.0, %v657
  %v659 = vpop.f32.mrf.mxu0
  %v660 = vadd.f32 0.0, %v659
  %661 = vmatmul.bf16.gmra.mxu0 %v638
  %v662 = vpop.f32.mrf.mxu0
  %v663 = vadd.f32 0.0, %v662
  %v664 = vpop.f32.mrf.mxu0
  %665 = vdwg.mxu0
  %666 = vrot.lane.b32.xlu0 %v358, 112
  %v667 = vpop.permute.xlu0 %666
  %668 = vrot.lane.b32.xlu0 %v359, 112
  %v669 = vpop.permute.xlu0 %668
  %670 = vrot.lane.b32.xlu0 %v360, 112
  %v671 = vpop.permute.xlu0 %670
  %672 = vrot.lane.b32.xlu0 %v358, 80
  %v673 = vpop.permute.xlu0 %672
  %674 = vrot.lane.b32.xlu0 %v359, 80
  %v675 = vpop.permute.xlu0 %674
  %676 = vrot.lane.b32.xlu0 %v360, 80
  %v677 = vpop.permute.xlu0 %676
  %v679 = vsel %vm367, %v667, 0
  %v682 = vsel %vm367, %v669, 0
  %v685 = vsel %vm367, %v671, 0
  %v688 = vsel %vm367, %v673, 0
  %v691 = vsel %vm367, %v675, 0
  %v694 = vsel %vm367, %v677, 0
  %696 = vmatpush.bf16.xpose.msra.mxu0 0
  %697 = vmatpush.bf16.xpose.msra.mxu0 0
  %698 = vmatpush.bf16.xpose.msra.mxu0 0
  %699 = vmatpush.bf16.xpose.msra.mxu0 0
  %700 = vmatpush.bf16.xpose.msra.mxu0 0
  %701 = vmatpush.bf16.xpose.msra.mxu0 %v694
  %702 = vmatpush.bf16.xpose.msra.mxu0 %v691
  %703 = vmatpush.bf16.xpose.msra.mxu0 %v688
  %704 = vmatmul.bf16.gmra.mxu0 %v679
  %v705 = vpop.f32.mrf.mxu0
  %v706 = vadd.f32 %v63, %v705
  %v707 = vpop.f32.mrf.mxu0
  %v708 = vadd.f32 %v64, %v707
  %709 = vmatmul.bf16.gmra.mxu0 %v682
  %v710 = vpop.f32.mrf.mxu0
  %v711 = vadd.f32 %v65, %v710
  %v712 = vpop.f32.mrf.mxu0
  %v713 = vadd.f32 %v66, %v712
  %714 = vmatmul.bf16.gmra.mxu0 %v685
  %v715 = vpop.f32.mrf.mxu0
  %v716 = vadd.f32 %v67, %v715
  %v717 = vpop.f32.mrf.mxu0
  %718 = vdwg.mxu0
  %v719 = vsel %vm409, %v706, -inf
  %720 = vmax.xlane.f32.xlu0 %v719
  %v721 = vpop.xlane.xlu0 %720
  %v722 = vsel %vm409, %v708, -inf
  %723 = vmax.xlane.f32.xlu0 %v722
  %v724 = vpop.xlane.xlu0 %723
  %v725 = vsel %vm409, %v711, -inf
  %726 = vmax.xlane.f32.xlu0 %v725
  %v727 = vpop.xlane.xlu0 %726
  %v728 = vsel %vm409, %v713, -inf
  %729 = vmax.xlane.f32.xlu0 %v728
  %v730 = vpop.xlane.xlu0 %729
  %v731 = vsel %vm409, %v716, -inf
  %732 = vmax.xlane.f32.xlu0 %v731
  %v733 = vpop.xlane.xlu0 %732
  %v734 = vsub.f32 %v706, %v721
  %v735 = vsub.f32 %v708, %v724
  %v736 = vsub.f32 %v711, %v727
  %v737 = vsub.f32 %v713, %v730
  %v738 = vsub.f32 %v716, %v733
  %v739 = vmul.f32 %v734, 1.442695
  %v740 = vpow.pop %v739
  %v741 = vmul.f32 %v735, 1.442695
  %v742 = vpow.pop %v741
  %v743 = vmul.f32 %v736, 1.442695
  %v744 = vpow.pop %v743
  %v745 = vmul.f32 %v737, 1.442695
  %v746 = vpow.pop %v745
  %v747 = vmul.f32 %v738, 1.442695
  %v748 = vpow.pop %v747
  %v749 = vsel %vm409, %v740, 0.0
  %750 = vadd.xlane.f32.xlu0 %v749
  %v751 = vpop.xlane.xlu0 %750
  %v752 = vsel %vm409, %v742, 0.0
  %753 = vadd.xlane.f32.xlu0 %v752
  %v754 = vpop.xlane.xlu0 %753
  %v755 = vsel %vm409, %v744, 0.0
  %756 = vadd.xlane.f32.xlu0 %v755
  %v757 = vpop.xlane.xlu0 %756
  %v758 = vsel %vm409, %v746, 0.0
  %759 = vadd.xlane.f32.xlu0 %v758
  %v760 = vpop.xlane.xlu0 %759
  %v761 = vsel %vm409, %v748, 0.0
  %762 = vadd.xlane.f32.xlu0 %v761
  %v763 = vpop.xlane.xlu0 %762
  %v764 = vrcp.pop %v751
  %v765 = vrcp.pop %v754
  %v766 = vrcp.pop %v757
  %v767 = vrcp.pop %v760
  %v768 = vrcp.pop %v763
  %v769 = vmul.f32 %v740, %v764
  %v770 = vmul.f32 %v742, %v765
  %v771 = vmul.f32 %v744, %v766
  %v772 = vmul.f32 %v746, %v767
  %v773 = vmul.f32 %v748, %v768
  %v774 = vpack.c.bf16 %v770, %v769
  %v775 = vpack.c.bf16 %v772, %v771
  %v776 = vpack.c.bf16 %v773, %v773
  %777 = vrot.lane.b32.xlu0 %v358, 48
  %v778 = vpop.permute.xlu0 %777
  %779 = vrot.lane.b32.xlu0 %v359, 48
  %v780 = vpop.permute.xlu0 %779
  %781 = vrot.lane.b32.xlu0 %v360, 48
  %v782 = vpop.permute.xlu0 %781
  %v786 = vsel %vm409, %v774, 0
  %v789 = vsel %vm409, %v775, 0
  %v792 = vsel %vm409, %v776, 0
  %v795 = vsel %vm485, %v782, 0
  %797 = vmatpush.bf16.msra.mxu0 0
  %798 = vmatpush.bf16.msra.mxu0 0
  %799 = vmatpush.bf16.msra.mxu0 0
  %800 = vmatpush.bf16.msra.mxu0 0
  %801 = vmatpush.bf16.msra.mxu0 0
  %802 = vmatpush.bf16.msra.mxu0 %v795
  %803 = vmatpush.bf16.msra.mxu0 %v780
  %804 = vmatpush.bf16.msra.mxu0 %v778
  %805 = vmatmul.bf16.gmra.mxu0 %v786
  %v806 = vpop.f32.mrf.mxu0
  %v807 = vadd.f32 0.0, %v806
  %v808 = vpop.f32.mrf.mxu0
  %v809 = vadd.f32 0.0, %v808
  %810 = vmatmul.bf16.gmra.mxu0 %v789
  %v811 = vpop.f32.mrf.mxu0
  %v812 = vadd.f32 0.0, %v811
  %v813 = vpop.f32.mrf.mxu0
  %v814 = vadd.f32 0.0, %v813
  %815 = vmatmul.bf16.gmra.mxu0 %v792
  %v816 = vpop.f32.mrf.mxu0
  %v817 = vadd.f32 0.0, %v816
  %v818 = vpop.f32.mrf.mxu0
  %819 = vdwg.mxu0
  %820 = vrot.lane.b32.xlu0 %v358, 104
  %v821 = vpop.permute.xlu0 %820
  %822 = vrot.lane.b32.xlu0 %v359, 104
  %v823 = vpop.permute.xlu0 %822
  %824 = vrot.lane.b32.xlu0 %v360, 104
  %v825 = vpop.permute.xlu0 %824
  %826 = vrot.lane.b32.xlu0 %v358, 72
  %v827 = vpop.permute.xlu0 %826
  %828 = vrot.lane.b32.xlu0 %v359, 72
  %v829 = vpop.permute.xlu0 %828
  %830 = vrot.lane.b32.xlu0 %v360, 72
  %v831 = vpop.permute.xlu0 %830
  %v833 = vsel %vm367, %v821, 0
  %v836 = vsel %vm367, %v823, 0
  %v839 = vsel %vm367, %v825, 0
  %v842 = vsel %vm367, %v827, 0
  %v845 = vsel %vm367, %v829, 0
  %v848 = vsel %vm367, %v831, 0
  %850 = vmatpush.bf16.xpose.msra.mxu0 0
  %851 = vmatpush.bf16.xpose.msra.mxu0 0
  %852 = vmatpush.bf16.xpose.msra.mxu0 0
  %853 = vmatpush.bf16.xpose.msra.mxu0 0
  %854 = vmatpush.bf16.xpose.msra.mxu0 0
  %855 = vmatpush.bf16.xpose.msra.mxu0 %v848
  %856 = vmatpush.bf16.xpose.msra.mxu0 %v845
  %857 = vmatpush.bf16.xpose.msra.mxu0 %v842
  %858 = vmatmul.bf16.gmra.mxu0 %v833
  %v859 = vpop.f32.mrf.mxu0
  %v860 = vadd.f32 %v63, %v859
  %v861 = vpop.f32.mrf.mxu0
  %v862 = vadd.f32 %v64, %v861
  %863 = vmatmul.bf16.gmra.mxu0 %v836
  %v864 = vpop.f32.mrf.mxu0
  %v865 = vadd.f32 %v65, %v864
  %v866 = vpop.f32.mrf.mxu0
  %v867 = vadd.f32 %v66, %v866
  %868 = vmatmul.bf16.gmra.mxu0 %v839
  %v869 = vpop.f32.mrf.mxu0
  %v870 = vadd.f32 %v67, %v869
  %v871 = vpop.f32.mrf.mxu0
  %872 = vdwg.mxu0
  %v873 = vsel %vm409, %v860, -inf
  %874 = vmax.xlane.f32.xlu0 %v873
  %v875 = vpop.xlane.xlu0 %874
  %v876 = vsel %vm409, %v862, -inf
  %877 = vmax.xlane.f32.xlu0 %v876
  %v878 = vpop.xlane.xlu0 %877
  %v879 = vsel %vm409, %v865, -inf
  %880 = vmax.xlane.f32.xlu0 %v879
  %v881 = vpop.xlane.xlu0 %880
  %v882 = vsel %vm409, %v867, -inf
  %883 = vmax.xlane.f32.xlu0 %v882
  %v884 = vpop.xlane.xlu0 %883
  %v885 = vsel %vm409, %v870, -inf
  %886 = vmax.xlane.f32.xlu0 %v885
  %v887 = vpop.xlane.xlu0 %886
  %v888 = vsub.f32 %v860, %v875
  %v889 = vsub.f32 %v862, %v878
  %v890 = vsub.f32 %v865, %v881
  %v891 = vsub.f32 %v867, %v884
  %v892 = vsub.f32 %v870, %v887
  %v893 = vmul.f32 %v888, 1.442695
  %v894 = vpow.pop %v893
  %v895 = vmul.f32 %v889, 1.442695
  %v896 = vpow.pop %v895
  %v897 = vmul.f32 %v890, 1.442695
  %v898 = vpow.pop %v897
  %v899 = vmul.f32 %v891, 1.442695
  %v900 = vpow.pop %v899
  %v901 = vmul.f32 %v892, 1.442695
  %v902 = vpow.pop %v901
  %v903 = vsel %vm409, %v894, 0.0
  %904 = vadd.xlane.f32.xlu0 %v903
  %v905 = vpop.xlane.xlu0 %904
  %v906 = vsel %vm409, %v896, 0.0
  %907 = vadd.xlane.f32.xlu0 %v906
  %v908 = vpop.xlane.xlu0 %907
  %v909 = vsel %vm409, %v898, 0.0
  %910 = vadd.xlane.f32.xlu0 %v909
  %v911 = vpop.xlane.xlu0 %910
  %v912 = vsel %vm409, %v900, 0.0
  %913 = vadd.xlane.f32.xlu0 %v912
  %v914 = vpop.xlane.xlu0 %913
  %v915 = vsel %vm409, %v902, 0.0
  %916 = vadd.xlane.f32.xlu0 %v915
  %v917 = vpop.xlane.xlu0 %916
  %v918 = vrcp.pop %v905
  %v919 = vrcp.pop %v908
  %v920 = vrcp.pop %v911
  %v921 = vrcp.pop %v914
  %v922 = vrcp.pop %v917
  %v923 = vmul.f32 %v894, %v918
  %v924 = vmul.f32 %v896, %v919
  %v925 = vmul.f32 %v898, %v920
  %v926 = vmul.f32 %v900, %v921
  %v927 = vmul.f32 %v902, %v922
  %v928 = vpack.c.bf16 %v924, %v923
  %v929 = vpack.c.bf16 %v926, %v925
  %v930 = vpack.c.bf16 %v927, %v927
  %931 = vrot.lane.b32.xlu0 %v358, 40
  %v932 = vpop.permute.xlu0 %931
  %933 = vrot.lane.b32.xlu0 %v359, 40
  %v934 = vpop.permute.xlu0 %933
  %935 = vrot.lane.b32.xlu0 %v360, 40
  %v936 = vpop.permute.xlu0 %935
  %v940 = vsel %vm409, %v928, 0
  %v943 = vsel %vm409, %v929, 0
  %v946 = vsel %vm409, %v930, 0
  %v949 = vsel %vm485, %v936, 0
  %951 = vmatpush.bf16.msra.mxu0 0
  %952 = vmatpush.bf16.msra.mxu0 0
  %953 = vmatpush.bf16.msra.mxu0 0
  %954 = vmatpush.bf16.msra.mxu0 0
  %955 = vmatpush.bf16.msra.mxu0 0
  %956 = vmatpush.bf16.msra.mxu0 %v949
  %957 = vmatpush.bf16.msra.mxu0 %v934
  %958 = vmatpush.bf16.msra.mxu0 %v932
  %959 = vmatmul.bf16.gmra.mxu0 %v940
  %v960 = vpop.f32.mrf.mxu0
  %v961 = vadd.f32 0.0, %v960
  %v962 = vpop.f32.mrf.mxu0
  %v963 = vadd.f32 0.0, %v962
  %964 = vmatmul.bf16.gmra.mxu0 %v943
  %v965 = vpop.f32.mrf.mxu0
  %v966 = vadd.f32 0.0, %v965
  %v967 = vpop.f32.mrf.mxu0
  %v968 = vadd.f32 0.0, %v967
  %969 = vmatmul.bf16.gmra.mxu0 %v946
  %v970 = vpop.f32.mrf.mxu0
  %v971 = vadd.f32 0.0, %v970
  %v972 = vpop.f32.mrf.mxu0
  %973 = vdwg.mxu0
  %979 = vrot.lane.b32.xlu0 %v653, 8
  %v980 = vpop.permute.xlu0 %979
  %981 = vrot.lane.b32.xlu0 %v655, 8
  %v982 = vpop.permute.xlu0 %981
  %983 = vrot.lane.b32.xlu0 %v658, 8
  %v984 = vpop.permute.xlu0 %983
  %985 = vrot.lane.b32.xlu0 %v660, 8
  %v986 = vpop.permute.xlu0 %985
  %987 = vrot.lane.b32.xlu0 %v663, 8
  %v988 = vpop.permute.xlu0 %987
  %999 = vrot.lane.b32.xlu0 %v807, 16
  %v1000 = vpop.permute.xlu0 %999
  %1001 = vrot.lane.b32.xlu0 %v809, 16
  %v1002 = vpop.permute.xlu0 %1001
  %1003 = vrot.lane.b32.xlu0 %v812, 16
  %v1004 = vpop.permute.xlu0 %1003
  %1005 = vrot.lane.b32.xlu0 %v814, 16
  %v1006 = vpop.permute.xlu0 %1005
  %1007 = vrot.lane.b32.xlu0 %v817, 16
  %v1008 = vpop.permute.xlu0 %1007
  %1019 = vrot.lane.b32.xlu0 %v961, 24
  %v1020 = vpop.permute.xlu0 %1019
  %1021 = vrot.lane.b32.xlu0 %v963, 24
  %v1022 = vpop.permute.xlu0 %1021
  %1023 = vrot.lane.b32.xlu0 %v966, 24
  %v1024 = vpop.permute.xlu0 %1023
  %1025 = vrot.lane.b32.xlu0 %v968, 24
  %v1026 = vpop.permute.xlu0 %1025
  %1027 = vrot.lane.b32.xlu0 %v971, 24
  %v1028 = vpop.permute.xlu0 %1027
  %v1034 = vsel %vm367, %v499, %v980
  %v1035 = vsel %vm367, %v501, %v982
  %v1036 = vsel %vm367, %v504, %v984
  %v1037 = vsel %vm367, %v506, %v986
  %v1038 = vsel %vm367, %v509, %v988
  %vm1039 = vcmask 130048
  %v1040 = vsel %vm1039, %v1034, %v1000
  %v1041 = vsel %vm1039, %v1035, %v1002
  %v1042 = vsel %vm1039, %v1036, %v1004
  %v1043 = vsel %vm1039, %v1037, %v1006
  %v1044 = vsel %vm1039, %v1038, %v1008
  %vm1045 = vcmask 195584
  %v1046 = vsel %vm1045, %v1040, %v1020
  %v1047 = vsel %vm1045, %v1041, %v1022
  %v1048 = vsel %vm1045, %v1042, %v1024
  %v1049 = vsel %vm1045, %v1043, %v1026
  %v1050 = vsel %vm1045, %v1044, %v1028
  %v1051 = vpack.c.bf16 %v1047, %v1046
  %v1052 = vpack.c.bf16 %v1049, %v1048
  %v1053 = vpack.c.bf16 %v1050, %v1050
  %v1054 = vunpack.c.h.b16 %v157
  %v1055 = vunpack.c.h.b16 %v159
  %v1056 = vunpack.c.h.b16 %v161
  %v1057 = vunpack.c.h.b16 %v163
  %v1058 = vpack.c.b16 %v1055, %v1054
  %v1059 = vpack.c.b16 %v1057, %v1056
  %v1063 = vsel %vm165, %v1051, 0
  %v1066 = vsel %vm165, %v1052, 0
  %v1069 = vsel %vm165, %v1053, 0
  %1071 = vmatpush.bf16.msra.mxu0 0
  %1072 = vmatpush.bf16.msra.mxu0 0
  %1073 = vmatpush.bf16.msra.mxu0 0
  %1074 = vmatpush.bf16.msra.mxu0 0
  %1075 = vmatpush.bf16.msra.mxu0 0
  %1076 = vmatpush.bf16.msra.mxu0 0
  %1077 = vmatpush.bf16.msra.mxu0 %v1059
  %1078 = vmatpush.bf16.msra.mxu0 %v1058
  %1079 = vmatmul.bf16.gmra.mxu0 %v1063
  %v1080 = vpop.f32.mrf.mxu0
  %v1081 = vadd.f32 0.0, %v1080
  %v1082 = vpop.f32.mrf.mxu0
  %v1083 = vadd.f32 0.0, %v1082
  %1084 = vmatmul.bf16.gmra.mxu0 %v1066
  %v1085 = vpop.f32.mrf.mxu0
  %v1086 = vadd.f32 0.0, %v1085
  %v1087 = vpop.f32.mrf.mxu0
  %v1088 = vadd.f32 0.0, %v1087
  %1089 = vmatmul.bf16.gmra.mxu0 %v1069
  %v1090 = vpop.f32.mrf.mxu0
  %v1091 = vadd.f32 0.0, %v1090
  %v1092 = vpop.f32.mrf.mxu0
  %1093 = vdwg.mxu0
  %v1094 = vadd.f32 %v143, %v1081
  %v1095 = vadd.f32 %v145, %v1083
  %v1096 = vadd.f32 %v148, %v1086
  %v1097 = vadd.f32 %v150, %v1088
  %v1098 = vadd.f32 %v153, %v1091
  %v1099 = vperm.slane %v164, 3
  %v1100 = vadd.f32 %v1094, %v1099
  %v1101 = vadd.f32 %v1095, %v1099
  %v1102 = vadd.f32 %v1096, %v1099
  %v1103 = vadd.f32 %v1097, %v1099
  %v1104 = vadd.f32 %v1098, %v1099
  %v1105 = vsel %vm165, %v1100, 0.0
  %1106 = vadd.xlane.f32.xlu0 %v1105
  %v1107 = vpop.xlane.xlu0 %1106
  %v1108 = vsel %vm165, %v1101, 0.0
  %1109 = vadd.xlane.f32.xlu0 %v1108
  %v1110 = vpop.xlane.xlu0 %1109
  %v1111 = vsel %vm165, %v1102, 0.0
  %1112 = vadd.xlane.f32.xlu0 %v1111
  %v1113 = vpop.xlane.xlu0 %1112
  %v1114 = vsel %vm165, %v1103, 0.0
  %1115 = vadd.xlane.f32.xlu0 %v1114
  %v1116 = vpop.xlane.xlu0 %1115
  %v1117 = vsel %vm165, %v1104, 0.0
  %1118 = vadd.xlane.f32.xlu0 %v1117
  %v1119 = vpop.xlane.xlu0 %1118
  %v1120 = vmul.f32 %v1107, %v187
  %v1121 = vmul.f32 %v1110, %v187
  %v1122 = vmul.f32 %v1113, %v187
  %v1123 = vmul.f32 %v1116, %v187
  %v1124 = vmul.f32 %v1119, %v187
  %v1125 = vsub.f32 %v1100, %v1120
  %v1126 = vsub.f32 %v1101, %v1121
  %v1127 = vsub.f32 %v1102, %v1122
  %v1128 = vsub.f32 %v1103, %v1123
  %v1129 = vsub.f32 %v1104, %v1124
  %v1130 = vmul.f32 %v1125, %v1125
  %v1131 = vmul.f32 %v1126, %v1126
  %v1132 = vmul.f32 %v1127, %v1127
  %v1133 = vmul.f32 %v1128, %v1128
  %v1134 = vmul.f32 %v1129, %v1129
  %v1135 = vsel %vm165, %v1130, 0.0
  %1136 = vadd.xlane.f32.xlu0 %v1135
  %v1137 = vpop.xlane.xlu0 %1136
  %v1138 = vsel %vm165, %v1131, 0.0
  %1139 = vadd.xlane.f32.xlu0 %v1138
  %v1140 = vpop.xlane.xlu0 %1139
  %v1141 = vsel %vm165, %v1132, 0.0
  %1142 = vadd.xlane.f32.xlu0 %v1141
  %v1143 = vpop.xlane.xlu0 %1142
  %v1144 = vsel %vm165, %v1133, 0.0
  %1145 = vadd.xlane.f32.xlu0 %v1144
  %v1146 = vpop.xlane.xlu0 %1145
  %v1147 = vsel %vm165, %v1134, 0.0
  %1148 = vadd.xlane.f32.xlu0 %v1147
  %v1149 = vpop.xlane.xlu0 %1148
  %v1150 = vmul.f32 %v1137, %v187
  %v1151 = vmul.f32 %v1140, %v187
  %v1152 = vmul.f32 %v1143, %v187
  %v1153 = vmul.f32 %v1146, %v187
  %v1154 = vmul.f32 %v1149, %v187
  %v1155 = vadd.f32 %v1150, 1e-06
  %v1156 = vadd.f32 %v1151, 1e-06
  %v1157 = vadd.f32 %v1152, 1e-06
  %v1158 = vadd.f32 %v1153, 1e-06
  %v1159 = vadd.f32 %v1154, 1e-06
  %v1160 = vrsqrt.pop %v1155
  %v1161 = vmul.f32 %v1160, %v1155
  %v1162 = vmul.f32 %v1161, %v1160
  %v1163 = vmul.f32 0.5, %v1162
  %v1164 = vsub.f32 1.5, %v1163
  %v1165 = vmul.f32 %v1160, %v1164
  %vm1166 = vweird.f32 %v1155
  %vm1167 = vweird.f32 %v1160
  %vm1168 = vmor %vm1166, %vm1167
  %v1169 = vsel %vm1168, %v1160, %v1165
  %v1170 = vrsqrt.pop %v1156
  %v1171 = vmul.f32 %v1170, %v1156
  %v1172 = vmul.f32 %v1171, %v1170
  %v1173 = vmul.f32 0.5, %v1172
  %v1174 = vsub.f32 1.5, %v1173
  %v1175 = vmul.f32 %v1170, %v1174
  %vm1176 = vweird.f32 %v1156
  %vm1177 = vweird.f32 %v1170
  %vm1178 = vmor %vm1176, %vm1177
  %v1179 = vsel %vm1178, %v1170, %v1175
  %v1180 = vrsqrt.pop %v1157
  %v1181 = vmul.f32 %v1180, %v1157
  %v1182 = vmul.f32 %v1181, %v1180
  %v1183 = vmul.f32 0.5, %v1182
  %v1184 = vsub.f32 1.5, %v1183
  %v1185 = vmul.f32 %v1180, %v1184
  %vm1186 = vweird.f32 %v1157
  %vm1187 = vweird.f32 %v1180
  %vm1188 = vmor %vm1186, %vm1187
  %v1189 = vsel %vm1188, %v1180, %v1185
  %v1190 = vrsqrt.pop %v1158
  %v1191 = vmul.f32 %v1190, %v1158
  %v1192 = vmul.f32 %v1191, %v1190
  %v1193 = vmul.f32 0.5, %v1192
  %v1194 = vsub.f32 1.5, %v1193
  %v1195 = vmul.f32 %v1190, %v1194
  %vm1196 = vweird.f32 %v1158
  %vm1197 = vweird.f32 %v1190
  %vm1198 = vmor %vm1196, %vm1197
  %v1199 = vsel %vm1198, %v1190, %v1195
  %v1200 = vrsqrt.pop %v1159
  %v1201 = vmul.f32 %v1200, %v1159
  %v1202 = vmul.f32 %v1201, %v1200
  %v1203 = vmul.f32 0.5, %v1202
  %v1204 = vsub.f32 1.5, %v1203
  %v1205 = vmul.f32 %v1200, %v1204
  %vm1206 = vweird.f32 %v1159
  %vm1207 = vweird.f32 %v1200
  %vm1208 = vmor %vm1206, %vm1207
  %v1209 = vsel %vm1208, %v1200, %v1205
  %v1210 = vmul.f32 %v1125, %v1169
  %v1211 = vmul.f32 %v1126, %v1179
  %v1212 = vmul.f32 %v1127, %v1189
  %v1213 = vmul.f32 %v1128, %v1199
  %v1214 = vmul.f32 %v1129, %v1209
  %v1215 = vperm.slane %v164, 4
  %v1216 = vmul.f32 %v1210, %v1215
  %v1217 = vmul.f32 %v1211, %v1215
  %v1218 = vmul.f32 %v1212, %v1215
  %v1219 = vmul.f32 %v1213, %v1215
  %v1220 = vmul.f32 %v1214, %v1215
  %v1221 = vperm.slane %v164, 5
  %v1222 = vadd.f32 %v1216, %v1221
  %v1223 = vadd.f32 %v1217, %v1221
  %v1224 = vadd.f32 %v1218, %v1221
  %v1225 = vadd.f32 %v1219, %v1221
  %v1226 = vadd.f32 %v1220, %v1221
  %v1227 = vpack.c.bf16 %v1223, %v1222
  %v1228 = vpack.c.bf16 %v1225, %v1224
  %v1229 = vpack.c.bf16 %v1226, %v1226
  %v1230 = vperm.slane %v164, 6
  %v1235 = vunpack.c.l.b16 %v156
  %v1236 = vunpack.c.l.b16 %v158
  %v1237 = vunpack.c.l.b16 %v160
  %v1238 = vunpack.c.l.b16 %v162
  %v1239 = vpack.c.b16 %v1236, %v1235
  %v1240 = vpack.c.b16 %v1238, %v1237
  %v1244 = vsel %vm165, %v1227, 0
  %v1247 = vsel %vm165, %v1228, 0
  %v1250 = vsel %vm165, %v1229, 0
  %1252 = vmatpush.bf16.msra.mxu0 0
  %1253 = vmatpush.bf16.msra.mxu0 0
  %1254 = vmatpush.bf16.msra.mxu0 0
  %1255 = vmatpush.bf16.msra.mxu0 0
  %1256 = vmatpush.bf16.msra.mxu0 0
  %1257 = vmatpush.bf16.msra.mxu0 0
  %1258 = vmatpush.bf16.msra.mxu0 %v1240
  %1259 = vmatpush.bf16.msra.mxu0 %v1239
  %1260 = vmatmul.bf16.gmra.mxu0 %v1244
  %v1261 = vpop.f32.mrf.mxu0
  %v1262 = vadd.f32 %v1230, %v1261
  %v1263 = vpop.f32.mrf.mxu0
  %v1264 = vadd.f32 %v1230, %v1263
  %1265 = vmatmul.bf16.gmra.mxu0 %v1247
  %v1266 = vpop.f32.mrf.mxu0
  %v1267 = vadd.f32 %v1230, %v1266
  %v1268 = vpop.f32.mrf.mxu0
  %v1269 = vadd.f32 %v1230, %v1268
  %1270 = vmatmul.bf16.gmra.mxu0 %v1250
  %v1271 = vpop.f32.mrf.mxu0
  %v1272 = vadd.f32 %v1230, %v1271
  %v1273 = vpop.f32.mrf.mxu0
  %1274 = vdwg.mxu0
  %v1275 = vmul.f32 %v1262, %v1262
  %v1276 = vmul.f32 %v1264, %v1264
  %v1277 = vmul.f32 %v1267, %v1267
  %v1278 = vmul.f32 %v1269, %v1269
  %v1279 = vmul.f32 %v1272, %v1272
  %v1280 = vmul.f32 %v1262, %v1275
  %v1281 = vmul.f32 %v1264, %v1276
  %v1282 = vmul.f32 %v1267, %v1277
  %v1283 = vmul.f32 %v1269, %v1278
  %v1284 = vmul.f32 %v1272, %v1279
  %v1285 = vmul.f32 %v1280, 0.044715
  %v1286 = vmul.f32 %v1281, 0.044715
  %v1287 = vmul.f32 %v1282, 0.044715
  %v1288 = vmul.f32 %v1283, 0.044715
  %v1289 = vmul.f32 %v1284, 0.044715
  %v1290 = vadd.f32 %v1262, %v1285
  %v1291 = vadd.f32 %v1264, %v1286
  %v1292 = vadd.f32 %v1267, %v1287
  %v1293 = vadd.f32 %v1269, %v1288
  %v1294 = vadd.f32 %v1272, %v1289
  %v1295 = vmul.f32 %v1290, 0.7978846
  %v1296 = vmul.f32 %v1291, 0.7978846
  %v1297 = vmul.f32 %v1292, 0.7978846
  %v1298 = vmul.f32 %v1293, 0.7978846
  %v1299 = vmul.f32 %v1294, 0.7978846
  %v1300 = vtanh.pop %v1295
  %v1301 = vtanh.pop %v1296
  %v1302 = vtanh.pop %v1297
  %v1303 = vtanh.pop %v1298
  %v1304 = vtanh.pop %v1299
  %v1305 = vadd.f32 %v1300, 1.0
  %v1306 = vadd.f32 %v1301, 1.0
  %v1307 = vadd.f32 %v1302, 1.0
  %v1308 = vadd.f32 %v1303, 1.0
  %v1309 = vadd.f32 %v1304, 1.0
  %v1310 = vmul.f32 %v1305, 0.5
  %v1311 = vmul.f32 %v1306, 0.5
  %v1312 = vmul.f32 %v1307, 0.5
  %v1313 = vmul.f32 %v1308, 0.5
  %v1314 = vmul.f32 %v1309, 0.5
  %v1315 = vmul.f32 %v1262, %v1310
  %v1316 = vmul.f32 %v1264, %v1311
  %v1317 = vmul.f32 %v1267, %v1312
  %v1318 = vmul.f32 %v1269, %v1313
  %v1319 = vmul.f32 %v1272, %v1314
  %v1320 = vpack.c.bf16 %v1316, %v1315
  %v1321 = vpack.c.bf16 %v1318, %v1317
  %v1322 = vpack.c.bf16 %v1319, %v1319
  %v1323 = vperm.slane %v164, 7
  %v1324 = vunpack.c.h.b16 %v156
  %v1325 = vunpack.c.h.b16 %v158
  %v1326 = vunpack.c.h.b16 %v160
  %v1327 = vunpack.c.h.b16 %v162
  %v1328 = vpack.c.b16 %v1325, %v1324
  %v1329 = vpack.c.b16 %v1327, %v1326
  %1332 = vmatpush.bf16.xpose.msra.mxu0 0
  %1333 = vmatpush.bf16.xpose.msra.mxu0 0
  %1334 = vmatpush.bf16.xpose.msra.mxu0 0
  %1335 = vmatpush.bf16.xpose.msra.mxu0 0
  %1336 = vmatpush.bf16.xpose.msra.mxu0 0
  %1337 = vmatpush.bf16.xpose.msra.mxu0 0
  %1338 = vmatpush.bf16.xpose.msra.mxu0 %v1329
  %1339 = vmatpush.bf16.xpose.msra.mxu0 %v1328
  %1340 = vmatmul.bf16.gmra.mxu0 %v1320
  %v1341 = vpop.f32.mrf.mxu0
  %v1342 = vadd.f32 %v1323, %v1341
  %v1343 = vpop.f32.mrf.mxu0
  %v1344 = vadd.f32 %v1323, %v1343
  %1345 = vmatmul.bf16.gmra.mxu0 %v1321
  %v1346 = vpop.f32.mrf.mxu0
  %v1347 = vadd.f32 %v1323, %v1346
  %v1348 = vpop.f32.mrf.mxu0
  %v1349 = vadd.f32 %v1323, %v1348
  %1350 = vmatmul.bf16.gmra.mxu0 %v1322
  %v1351 = vpop.f32.mrf.mxu0
  %v1352 = vadd.f32 %v1323, %v1351
  %v1353 = vpop.f32.mrf.mxu0
  %1354 = vdwg.mxu0
  %v1355 = vadd.f32 %v1100, %v1342
  %v1356 = vadd.f32 %v1101, %v1344
  %v1357 = vadd.f32 %v1102, %v1347
  %v1358 = vadd.f32 %v1103, %v1349
  %v1359 = vadd.f32 %v1104, %v1352
  %v1360 = vld [vmem:[%s1 + $0xc0] sm:$0xff]
  %v1361 = vld [vmem:[%s1 + $0xc8] sm:$0xff]
  %v1362 = vld [vmem:[%s1 + $0xd0] sm:$0xff]
  %v1363 = vld [vmem:[%s1 + $0xd8] sm:$0xff]
  %v1364 = vld [vmem:[%s1 + $0xe0] sm:$0xff]
  %v1365 = vld [vmem:[%s1 + $0xe8] sm:$0xff]
  %v1366 = vld [vmem:[%s1 + $0xf0] sm:$0xff]
  %v1367 = vld [vmem:[%s1 + $0xf8] sm:$0xff]
  %v1368 = vld [vmem:[%s2 + $0x38] sm:$0xff]
  %v1369 = vsel %vm165, %v1355, 0.0
  %1370 = vadd.xlane.f32.xlu0 %v1369
  %v1371 = vpop.xlane.xlu0 %1370
  %v1372 = vsel %vm165, %v1356, 0.0
  %1373 = vadd.xlane.f32.xlu0 %v1372
  %v1374 = vpop.xlane.xlu0 %1373
  %v1375 = vsel %vm165, %v1357, 0.0
  %1376 = vadd.xlane.f32.xlu0 %v1375
  %v1377 = vpop.xlane.xlu0 %1376
  %v1378 = vsel %vm165, %v1358, 0.0
  %1379 = vadd.xlane.f32.xlu0 %v1378
  %v1380 = vpop.xlane.xlu0 %1379
  %v1381 = vsel %vm165, %v1359, 0.0
  %1382 = vadd.xlane.f32.xlu0 %v1381
  %v1383 = vpop.xlane.xlu0 %1382
  %v1384 = vmul.f32 %v1371, %v187
  %v1385 = vmul.f32 %v1374, %v187
  %v1386 = vmul.f32 %v1377, %v187
  %v1387 = vmul.f32 %v1380, %v187
  %v1388 = vmul.f32 %v1383, %v187
  %v1389 = vsub.f32 %v1355, %v1384
  %v1390 = vsub.f32 %v1356, %v1385
  %v1391 = vsub.f32 %v1357, %v1386
  %v1392 = vsub.f32 %v1358, %v1387
  %v1393 = vsub.f32 %v1359, %v1388
  %v1394 = vmul.f32 %v1389, %v1389
  %v1395 = vmul.f32 %v1390, %v1390
  %v1396 = vmul.f32 %v1391, %v1391
  %v1397 = vmul.f32 %v1392, %v1392
  %v1398 = vmul.f32 %v1393, %v1393
  %v1399 = vsel %vm165, %v1394, 0.0
  %1400 = vadd.xlane.f32.xlu0 %v1399
  %v1401 = vpop.xlane.xlu0 %1400
  %v1402 = vsel %vm165, %v1395, 0.0
  %1403 = vadd.xlane.f32.xlu0 %v1402
  %v1404 = vpop.xlane.xlu0 %1403
  %v1405 = vsel %vm165, %v1396, 0.0
  %1406 = vadd.xlane.f32.xlu0 %v1405
  %v1407 = vpop.xlane.xlu0 %1406
  %v1408 = vsel %vm165, %v1397, 0.0
  %1409 = vadd.xlane.f32.xlu0 %v1408
  %v1410 = vpop.xlane.xlu0 %1409
  %v1411 = vsel %vm165, %v1398, 0.0
  %1412 = vadd.xlane.f32.xlu0 %v1411
  %v1413 = vpop.xlane.xlu0 %1412
  %v1414 = vmul.f32 %v1401, %v187
  %v1415 = vmul.f32 %v1404, %v187
  %v1416 = vmul.f32 %v1407, %v187
  %v1417 = vmul.f32 %v1410, %v187
  %v1418 = vmul.f32 %v1413, %v187
  %v1419 = vadd.f32 %v1414, 1e-06
  %v1420 = vadd.f32 %v1415, 1e-06
  %v1421 = vadd.f32 %v1416, 1e-06
  %v1422 = vadd.f32 %v1417, 1e-06
  %v1423 = vadd.f32 %v1418, 1e-06
  %v1424 = vrsqrt.pop %v1419
  %v1425 = vmul.f32 %v1424, %v1419
  %v1426 = vmul.f32 %v1425, %v1424
  %v1427 = vmul.f32 0.5, %v1426
  %v1428 = vsub.f32 1.5, %v1427
  %v1429 = vmul.f32 %v1424, %v1428
  %vm1430 = vweird.f32 %v1419
  %vm1431 = vweird.f32 %v1424
  %vm1432 = vmor %vm1430, %vm1431
  %v1433 = vsel %vm1432, %v1424, %v1429
  %v1434 = vrsqrt.pop %v1420
  %v1435 = vmul.f32 %v1434, %v1420
  %v1436 = vmul.f32 %v1435, %v1434
  %v1437 = vmul.f32 0.5, %v1436
  %v1438 = vsub.f32 1.5, %v1437
  %v1439 = vmul.f32 %v1434, %v1438
  %vm1440 = vweird.f32 %v1420
  %vm1441 = vweird.f32 %v1434
  %vm1442 = vmor %vm1440, %vm1441
  %v1443 = vsel %vm1442, %v1434, %v1439
  %v1444 = vrsqrt.pop %v1421
  %v1445 = vmul.f32 %v1444, %v1421
  %v1446 = vmul.f32 %v1445, %v1444
  %v1447 = vmul.f32 0.5, %v1446
  %v1448 = vsub.f32 1.5, %v1447
  %v1449 = vmul.f32 %v1444, %v1448
  %vm1450 = vweird.f32 %v1421
  %vm1451 = vweird.f32 %v1444
  %vm1452 = vmor %vm1450, %vm1451
  %v1453 = vsel %vm1452, %v1444, %v1449
  %v1454 = vrsqrt.pop %v1422
  %v1455 = vmul.f32 %v1454, %v1422
  %v1456 = vmul.f32 %v1455, %v1454
  %v1457 = vmul.f32 0.5, %v1456
  %v1458 = vsub.f32 1.5, %v1457
  %v1459 = vmul.f32 %v1454, %v1458
  %vm1460 = vweird.f32 %v1422
  %vm1461 = vweird.f32 %v1454
  %vm1462 = vmor %vm1460, %vm1461
  %v1463 = vsel %vm1462, %v1454, %v1459
  %v1464 = vrsqrt.pop %v1423
  %v1465 = vmul.f32 %v1464, %v1423
  %v1466 = vmul.f32 %v1465, %v1464
  %v1467 = vmul.f32 0.5, %v1466
  %v1468 = vsub.f32 1.5, %v1467
  %v1469 = vmul.f32 %v1464, %v1468
  %vm1470 = vweird.f32 %v1423
  %vm1471 = vweird.f32 %v1464
  %vm1472 = vmor %vm1470, %vm1471
  %v1473 = vsel %vm1472, %v1464, %v1469
  %v1474 = vmul.f32 %v1389, %v1433
  %v1475 = vmul.f32 %v1390, %v1443
  %v1476 = vmul.f32 %v1391, %v1453
  %v1477 = vmul.f32 %v1392, %v1463
  %v1478 = vmul.f32 %v1393, %v1473
  %v1479 = vperm.slane %v1368, 0
  %v1480 = vmul.f32 %v1474, %v1479
  %v1481 = vmul.f32 %v1475, %v1479
  %v1482 = vmul.f32 %v1476, %v1479
  %v1483 = vmul.f32 %v1477, %v1479
  %v1484 = vmul.f32 %v1478, %v1479
  %v1485 = vperm.slane %v1368, 1
  %v1486 = vadd.f32 %v1480, %v1485
  %v1487 = vadd.f32 %v1481, %v1485
  %v1488 = vadd.f32 %v1482, %v1485
  %v1489 = vadd.f32 %v1483, %v1485
  %v1490 = vadd.f32 %v1484, %v1485
  %v1491 = vpack.c.bf16 %v1487, %v1486
  %v1492 = vpack.c.bf16 %v1489, %v1488
  %v1493 = vpack.c.bf16 %v1490, %v1490
  %v1494 = vperm.slane %v1368, 2
  %v1499 = vunpack.c.l.b16 %v1361
  %v1500 = vunpack.c.l.b16 %v1363
  %v1501 = vunpack.c.l.b16 %v1365
  %v1502 = vunpack.c.l.b16 %v1367
  %v1503 = vpack.c.b16 %v1500, %v1499
  %v1504 = vpack.c.b16 %v1502, %v1501
  %v1508 = vsel %vm165, %v1491, 0
  %v1511 = vsel %vm165, %v1492, 0
  %v1514 = vsel %vm165, %v1493, 0
  %1516 = vmatpush.bf16.msra.mxu0 0
  %1517 = vmatpush.bf16.msra.mxu0 0
  %1518 = vmatpush.bf16.msra.mxu0 0
  %1519 = vmatpush.bf16.msra.mxu0 0
  %1520 = vmatpush.bf16.msra.mxu0 0
  %1521 = vmatpush.bf16.msra.mxu0 0
  %1522 = vmatpush.bf16.msra.mxu0 %v1504
  %1523 = vmatpush.bf16.msra.mxu0 %v1503
  %1524 = vmatmul.bf16.gmra.mxu0 %v1508
  %v1525 = vpop.f32.mrf.mxu0
  %v1526 = vadd.f32 %v1494, %v1525
  %v1527 = vpop.f32.mrf.mxu0
  %v1528 = vadd.f32 %v1494, %v1527
  %1529 = vmatmul.bf16.gmra.mxu0 %v1511
  %v1530 = vpop.f32.mrf.mxu0
  %v1531 = vadd.f32 %v1494, %v1530
  %v1532 = vpop.f32.mrf.mxu0
  %v1533 = vadd.f32 %v1494, %v1532
  %1534 = vmatmul.bf16.gmra.mxu0 %v1514
  %v1535 = vpop.f32.mrf.mxu0
  %v1536 = vadd.f32 %v1494, %v1535
  %v1537 = vpop.f32.mrf.mxu0
  %1538 = vdwg.mxu0
  %v1539 = vpack.c.bf16 %v1526, %v1526
  %v1540 = vpack.c.bf16 %v1528, %v1528
  %v1541 = vpack.c.bf16 %v1531, %v1531
  %v1542 = vpack.c.bf16 %v1533, %v1533
  %v1543 = vpack.c.bf16 %v1536, %v1536
  %v1549 = vunpack.c.l.b16 %v1539
  %v1550 = vunpack.c.l.b16 %v1540
  %v1551 = vunpack.c.l.b16 %v1541
  %v1552 = vunpack.c.l.b16 %v1542
  %v1553 = vunpack.c.l.b16 %v1543
  %v1554 = vpack.c.b16 %v1550, %v1549
  %v1555 = vpack.c.b16 %v1552, %v1551
  %v1556 = vpack.c.b16 %v1553, %v1553
  %1557 = vrot.lane.b32.xlu0 %v1554, 96
  %v1558 = vpop.permute.xlu0 %1557
  %1559 = vrot.lane.b32.xlu0 %v1555, 96
  %v1560 = vpop.permute.xlu0 %1559
  %1561 = vrot.lane.b32.xlu0 %v1556, 96
  %v1562 = vpop.permute.xlu0 %1561
  %v1564 = vsel %vm367, %v1554, 0
  %v1567 = vsel %vm367, %v1555, 0
  %v1570 = vsel %vm367, %v1556, 0
  %v1573 = vsel %vm367, %v1558, 0
  %v1576 = vsel %vm367, %v1560, 0
  %v1579 = vsel %vm367, %v1562, 0
  %1581 = vmatpush.bf16.xpose.msra.mxu0 0
  %1582 = vmatpush.bf16.xpose.msra.mxu0 0
  %1583 = vmatpush.bf16.xpose.msra.mxu0 0
  %1584 = vmatpush.bf16.xpose.msra.mxu0 0
  %1585 = vmatpush.bf16.xpose.msra.mxu0 0
  %1586 = vmatpush.bf16.xpose.msra.mxu0 %v1579
  %1587 = vmatpush.bf16.xpose.msra.mxu0 %v1576
  %1588 = vmatpush.bf16.xpose.msra.mxu0 %v1573
  %1589 = vmatmul.bf16.gmra.mxu0 %v1564
  %v1590 = vpop.f32.mrf.mxu0
  %v1591 = vadd.f32 %v63, %v1590
  %v1592 = vpop.f32.mrf.mxu0
  %v1593 = vadd.f32 %v64, %v1592
  %1594 = vmatmul.bf16.gmra.mxu0 %v1567
  %v1595 = vpop.f32.mrf.mxu0
  %v1596 = vadd.f32 %v65, %v1595
  %v1597 = vpop.f32.mrf.mxu0
  %v1598 = vadd.f32 %v66, %v1597
  %1599 = vmatmul.bf16.gmra.mxu0 %v1570
  %v1600 = vpop.f32.mrf.mxu0
  %v1601 = vadd.f32 %v67, %v1600
  %v1602 = vpop.f32.mrf.mxu0
  %1603 = vdwg.mxu0
  %v1604 = vsel %vm409, %v1591, -inf
  %1605 = vmax.xlane.f32.xlu0 %v1604
  %v1606 = vpop.xlane.xlu0 %1605
  %v1607 = vsel %vm409, %v1593, -inf
  %1608 = vmax.xlane.f32.xlu0 %v1607
  %v1609 = vpop.xlane.xlu0 %1608
  %v1610 = vsel %vm409, %v1596, -inf
  %1611 = vmax.xlane.f32.xlu0 %v1610
  %v1612 = vpop.xlane.xlu0 %1611
  %v1613 = vsel %vm409, %v1598, -inf
  %1614 = vmax.xlane.f32.xlu0 %v1613
  %v1615 = vpop.xlane.xlu0 %1614
  %v1616 = vsel %vm409, %v1601, -inf
  %1617 = vmax.xlane.f32.xlu0 %v1616
  %v1618 = vpop.xlane.xlu0 %1617
  %v1619 = vsub.f32 %v1591, %v1606
  %v1620 = vsub.f32 %v1593, %v1609
  %v1621 = vsub.f32 %v1596, %v1612
  %v1622 = vsub.f32 %v1598, %v1615
  %v1623 = vsub.f32 %v1601, %v1618
  %v1624 = vmul.f32 %v1619, 1.442695
  %v1625 = vpow.pop %v1624
  %v1626 = vmul.f32 %v1620, 1.442695
  %v1627 = vpow.pop %v1626
  %v1628 = vmul.f32 %v1621, 1.442695
  %v1629 = vpow.pop %v1628
  %v1630 = vmul.f32 %v1622, 1.442695
  %v1631 = vpow.pop %v1630
  %v1632 = vmul.f32 %v1623, 1.442695
  %v1633 = vpow.pop %v1632
  %v1634 = vsel %vm409, %v1625, 0.0
  %1635 = vadd.xlane.f32.xlu0 %v1634
  %v1636 = vpop.xlane.xlu0 %1635
  %v1637 = vsel %vm409, %v1627, 0.0
  %1638 = vadd.xlane.f32.xlu0 %v1637
  %v1639 = vpop.xlane.xlu0 %1638
  %v1640 = vsel %vm409, %v1629, 0.0
  %1641 = vadd.xlane.f32.xlu0 %v1640
  %v1642 = vpop.xlane.xlu0 %1641
  %v1643 = vsel %vm409, %v1631, 0.0
  %1644 = vadd.xlane.f32.xlu0 %v1643
  %v1645 = vpop.xlane.xlu0 %1644
  %v1646 = vsel %vm409, %v1633, 0.0
  %1647 = vadd.xlane.f32.xlu0 %v1646
  %v1648 = vpop.xlane.xlu0 %1647
  %v1649 = vrcp.pop %v1636
  %v1650 = vrcp.pop %v1639
  %v1651 = vrcp.pop %v1642
  %v1652 = vrcp.pop %v1645
  %v1653 = vrcp.pop %v1648
  %v1654 = vmul.f32 %v1625, %v1649
  %v1655 = vmul.f32 %v1627, %v1650
  %v1656 = vmul.f32 %v1629, %v1651
  %v1657 = vmul.f32 %v1631, %v1652
  %v1658 = vmul.f32 %v1633, %v1653
  %v1659 = vpack.c.bf16 %v1655, %v1654
  %v1660 = vpack.c.bf16 %v1657, %v1656
  %v1661 = vpack.c.bf16 %v1658, %v1658
  %1662 = vrot.lane.b32.xlu0 %v1554, 64
  %v1663 = vpop.permute.xlu0 %1662
  %1664 = vrot.lane.b32.xlu0 %v1555, 64
  %v1665 = vpop.permute.xlu0 %1664
  %1666 = vrot.lane.b32.xlu0 %v1556, 64
  %v1667 = vpop.permute.xlu0 %1666
  %v1671 = vsel %vm409, %v1659, 0
  %v1674 = vsel %vm409, %v1660, 0
  %v1677 = vsel %vm409, %v1661, 0
  %v1680 = vsel %vm485, %v1667, 0
  %1682 = vmatpush.bf16.msra.mxu0 0
  %1683 = vmatpush.bf16.msra.mxu0 0
  %1684 = vmatpush.bf16.msra.mxu0 0
  %1685 = vmatpush.bf16.msra.mxu0 0
  %1686 = vmatpush.bf16.msra.mxu0 0
  %1687 = vmatpush.bf16.msra.mxu0 %v1680
  %1688 = vmatpush.bf16.msra.mxu0 %v1665
  %1689 = vmatpush.bf16.msra.mxu0 %v1663
  %1690 = vmatmul.bf16.gmra.mxu0 %v1671
  %v1691 = vpop.f32.mrf.mxu0
  %v1692 = vadd.f32 0.0, %v1691
  %v1693 = vpop.f32.mrf.mxu0
  %v1694 = vadd.f32 0.0, %v1693
  %1695 = vmatmul.bf16.gmra.mxu0 %v1674
  %v1696 = vpop.f32.mrf.mxu0
  %v1697 = vadd.f32 0.0, %v1696
  %v1698 = vpop.f32.mrf.mxu0
  %v1699 = vadd.f32 0.0, %v1698
  %1700 = vmatmul.bf16.gmra.mxu0 %v1677
  %v1701 = vpop.f32.mrf.mxu0
  %v1702 = vadd.f32 0.0, %v1701
  %v1703 = vpop.f32.mrf.mxu0
  %1704 = vdwg.mxu0
  %1705 = vrot.lane.b32.xlu0 %v1554, 120
  %v1706 = vpop.permute.xlu0 %1705
  %1707 = vrot.lane.b32.xlu0 %v1555, 120
  %v1708 = vpop.permute.xlu0 %1707
  %1709 = vrot.lane.b32.xlu0 %v1556, 120
  %v1710 = vpop.permute.xlu0 %1709
  %1711 = vrot.lane.b32.xlu0 %v1554, 88
  %v1712 = vpop.permute.xlu0 %1711
  %1713 = vrot.lane.b32.xlu0 %v1555, 88
  %v1714 = vpop.permute.xlu0 %1713
  %1715 = vrot.lane.b32.xlu0 %v1556, 88
  %v1716 = vpop.permute.xlu0 %1715
  %v1718 = vsel %vm367, %v1706, 0
  %v1721 = vsel %vm367, %v1708, 0
  %v1724 = vsel %vm367, %v1710, 0
  %v1727 = vsel %vm367, %v1712, 0
  %v1730 = vsel %vm367, %v1714, 0
  %v1733 = vsel %vm367, %v1716, 0
  %1735 = vmatpush.bf16.xpose.msra.mxu0 0
  %1736 = vmatpush.bf16.xpose.msra.mxu0 0
  %1737 = vmatpush.bf16.xpose.msra.mxu0 0
  %1738 = vmatpush.bf16.xpose.msra.mxu0 0
  %1739 = vmatpush.bf16.xpose.msra.mxu0 0
  %1740 = vmatpush.bf16.xpose.msra.mxu0 %v1733
  %1741 = vmatpush.bf16.xpose.msra.mxu0 %v1730
  %1742 = vmatpush.bf16.xpose.msra.mxu0 %v1727
  %1743 = vmatmul.bf16.gmra.mxu0 %v1718
  %v1744 = vpop.f32.mrf.mxu0
  %v1745 = vadd.f32 %v63, %v1744
  %v1746 = vpop.f32.mrf.mxu0
  %v1747 = vadd.f32 %v64, %v1746
  %1748 = vmatmul.bf16.gmra.mxu0 %v1721
  %v1749 = vpop.f32.mrf.mxu0
  %v1750 = vadd.f32 %v65, %v1749
  %v1751 = vpop.f32.mrf.mxu0
  %v1752 = vadd.f32 %v66, %v1751
  %1753 = vmatmul.bf16.gmra.mxu0 %v1724
  %v1754 = vpop.f32.mrf.mxu0
  %v1755 = vadd.f32 %v67, %v1754
  %v1756 = vpop.f32.mrf.mxu0
  %1757 = vdwg.mxu0
  %v1758 = vsel %vm409, %v1745, -inf
  %1759 = vmax.xlane.f32.xlu0 %v1758
  %v1760 = vpop.xlane.xlu0 %1759
  %v1761 = vsel %vm409, %v1747, -inf
  %1762 = vmax.xlane.f32.xlu0 %v1761
  %v1763 = vpop.xlane.xlu0 %1762
  %v1764 = vsel %vm409, %v1750, -inf
  %1765 = vmax.xlane.f32.xlu0 %v1764
  %v1766 = vpop.xlane.xlu0 %1765
  %v1767 = vsel %vm409, %v1752, -inf
  %1768 = vmax.xlane.f32.xlu0 %v1767
  %v1769 = vpop.xlane.xlu0 %1768
  %v1770 = vsel %vm409, %v1755, -inf
  %1771 = vmax.xlane.f32.xlu0 %v1770
  %v1772 = vpop.xlane.xlu0 %1771
  %v1773 = vsub.f32 %v1745, %v1760
  %v1774 = vsub.f32 %v1747, %v1763
  %v1775 = vsub.f32 %v1750, %v1766
  %v1776 = vsub.f32 %v1752, %v1769
  %v1777 = vsub.f32 %v1755, %v1772
  %v1778 = vmul.f32 %v1773, 1.442695
  %v1779 = vpow.pop %v1778
  %v1780 = vmul.f32 %v1774, 1.442695
  %v1781 = vpow.pop %v1780
  %v1782 = vmul.f32 %v1775, 1.442695
  %v1783 = vpow.pop %v1782
  %v1784 = vmul.f32 %v1776, 1.442695
  %v1785 = vpow.pop %v1784
  %v1786 = vmul.f32 %v1777, 1.442695
  %v1787 = vpow.pop %v1786
  %v1788 = vsel %vm409, %v1779, 0.0
  %1789 = vadd.xlane.f32.xlu0 %v1788
  %v1790 = vpop.xlane.xlu0 %1789
  %v1791 = vsel %vm409, %v1781, 0.0
  %1792 = vadd.xlane.f32.xlu0 %v1791
  %v1793 = vpop.xlane.xlu0 %1792
  %v1794 = vsel %vm409, %v1783, 0.0
  %1795 = vadd.xlane.f32.xlu0 %v1794
  %v1796 = vpop.xlane.xlu0 %1795
  %v1797 = vsel %vm409, %v1785, 0.0
  %1798 = vadd.xlane.f32.xlu0 %v1797
  %v1799 = vpop.xlane.xlu0 %1798
  %v1800 = vsel %vm409, %v1787, 0.0
  %1801 = vadd.xlane.f32.xlu0 %v1800
  %v1802 = vpop.xlane.xlu0 %1801
  %v1803 = vrcp.pop %v1790
  %v1804 = vrcp.pop %v1793
  %v1805 = vrcp.pop %v1796
  %v1806 = vrcp.pop %v1799
  %v1807 = vrcp.pop %v1802
  %v1808 = vmul.f32 %v1779, %v1803
  %v1809 = vmul.f32 %v1781, %v1804
  %v1810 = vmul.f32 %v1783, %v1805
  %v1811 = vmul.f32 %v1785, %v1806
  %v1812 = vmul.f32 %v1787, %v1807
  %v1813 = vpack.c.bf16 %v1809, %v1808
  %v1814 = vpack.c.bf16 %v1811, %v1810
  %v1815 = vpack.c.bf16 %v1812, %v1812
  %1816 = vrot.lane.b32.xlu0 %v1554, 56
  %v1817 = vpop.permute.xlu0 %1816
  %1818 = vrot.lane.b32.xlu0 %v1555, 56
  %v1819 = vpop.permute.xlu0 %1818
  %1820 = vrot.lane.b32.xlu0 %v1556, 56
  %v1821 = vpop.permute.xlu0 %1820
  %v1825 = vsel %vm409, %v1813, 0
  %v1828 = vsel %vm409, %v1814, 0
  %v1831 = vsel %vm409, %v1815, 0
  %v1834 = vsel %vm485, %v1821, 0
  %1836 = vmatpush.bf16.msra.mxu0 0
  %1837 = vmatpush.bf16.msra.mxu0 0
  %1838 = vmatpush.bf16.msra.mxu0 0
  %1839 = vmatpush.bf16.msra.mxu0 0
  %1840 = vmatpush.bf16.msra.mxu0 0
  %1841 = vmatpush.bf16.msra.mxu0 %v1834
  %1842 = vmatpush.bf16.msra.mxu0 %v1819
  %1843 = vmatpush.bf16.msra.mxu0 %v1817
  %1844 = vmatmul.bf16.gmra.mxu0 %v1825
  %v1845 = vpop.f32.mrf.mxu0
  %v1846 = vadd.f32 0.0, %v1845
  %v1847 = vpop.f32.mrf.mxu0
  %v1848 = vadd.f32 0.0, %v1847
  %1849 = vmatmul.bf16.gmra.mxu0 %v1828
  %v1850 = vpop.f32.mrf.mxu0
  %v1851 = vadd.f32 0.0, %v1850
  %v1852 = vpop.f32.mrf.mxu0
  %v1853 = vadd.f32 0.0, %v1852
  %1854 = vmatmul.bf16.gmra.mxu0 %v1831
  %v1855 = vpop.f32.mrf.mxu0
  %v1856 = vadd.f32 0.0, %v1855
  %v1857 = vpop.f32.mrf.mxu0
  %1858 = vdwg.mxu0
  %1859 = vrot.lane.b32.xlu0 %v1554, 112
  %v1860 = vpop.permute.xlu0 %1859
  %1861 = vrot.lane.b32.xlu0 %v1555, 112
  %v1862 = vpop.permute.xlu0 %1861
  %1863 = vrot.lane.b32.xlu0 %v1556, 112
  %v1864 = vpop.permute.xlu0 %1863
  %1865 = vrot.lane.b32.xlu0 %v1554, 80
  %v1866 = vpop.permute.xlu0 %1865
  %1867 = vrot.lane.b32.xlu0 %v1555, 80
  %v1868 = vpop.permute.xlu0 %1867
  %1869 = vrot.lane.b32.xlu0 %v1556, 80
  %v1870 = vpop.permute.xlu0 %1869
  %v1872 = vsel %vm367, %v1860, 0
  %v1875 = vsel %vm367, %v1862, 0
  %v1878 = vsel %vm367, %v1864, 0
  %v1881 = vsel %vm367, %v1866, 0
  %v1884 = vsel %vm367, %v1868, 0
  %v1887 = vsel %vm367, %v1870, 0
  %1889 = vmatpush.bf16.xpose.msra.mxu0 0
  %1890 = vmatpush.bf16.xpose.msra.mxu0 0
  %1891 = vmatpush.bf16.xpose.msra.mxu0 0
  %1892 = vmatpush.bf16.xpose.msra.mxu0 0
  %1893 = vmatpush.bf16.xpose.msra.mxu0 0
  %1894 = vmatpush.bf16.xpose.msra.mxu0 %v1887
  %1895 = vmatpush.bf16.xpose.msra.mxu0 %v1884
  %1896 = vmatpush.bf16.xpose.msra.mxu0 %v1881
  %1897 = vmatmul.bf16.gmra.mxu0 %v1872
  %v1898 = vpop.f32.mrf.mxu0
  %v1899 = vadd.f32 %v63, %v1898
  %v1900 = vpop.f32.mrf.mxu0
  %v1901 = vadd.f32 %v64, %v1900
  %1902 = vmatmul.bf16.gmra.mxu0 %v1875
  %v1903 = vpop.f32.mrf.mxu0
  %v1904 = vadd.f32 %v65, %v1903
  %v1905 = vpop.f32.mrf.mxu0
  %v1906 = vadd.f32 %v66, %v1905
  %1907 = vmatmul.bf16.gmra.mxu0 %v1878
  %v1908 = vpop.f32.mrf.mxu0
  %v1909 = vadd.f32 %v67, %v1908
  %v1910 = vpop.f32.mrf.mxu0
  %1911 = vdwg.mxu0
  %v1912 = vsel %vm409, %v1899, -inf
  %1913 = vmax.xlane.f32.xlu0 %v1912
  %v1914 = vpop.xlane.xlu0 %1913
  %v1915 = vsel %vm409, %v1901, -inf
  %1916 = vmax.xlane.f32.xlu0 %v1915
  %v1917 = vpop.xlane.xlu0 %1916
  %v1918 = vsel %vm409, %v1904, -inf
  %1919 = vmax.xlane.f32.xlu0 %v1918
  %v1920 = vpop.xlane.xlu0 %1919
  %v1921 = vsel %vm409, %v1906, -inf
  %1922 = vmax.xlane.f32.xlu0 %v1921
  %v1923 = vpop.xlane.xlu0 %1922
  %v1924 = vsel %vm409, %v1909, -inf
  %1925 = vmax.xlane.f32.xlu0 %v1924
  %v1926 = vpop.xlane.xlu0 %1925
  %v1927 = vsub.f32 %v1899, %v1914
  %v1928 = vsub.f32 %v1901, %v1917
  %v1929 = vsub.f32 %v1904, %v1920
  %v1930 = vsub.f32 %v1906, %v1923
  %v1931 = vsub.f32 %v1909, %v1926
  %v1932 = vmul.f32 %v1927, 1.442695
  %v1933 = vpow.pop %v1932
  %v1934 = vmul.f32 %v1928, 1.442695
  %v1935 = vpow.pop %v1934
  %v1936 = vmul.f32 %v1929, 1.442695
  %v1937 = vpow.pop %v1936
  %v1938 = vmul.f32 %v1930, 1.442695
  %v1939 = vpow.pop %v1938
  %v1940 = vmul.f32 %v1931, 1.442695
  %v1941 = vpow.pop %v1940
  %v1942 = vsel %vm409, %v1933, 0.0
  %1943 = vadd.xlane.f32.xlu0 %v1942
  %v1944 = vpop.xlane.xlu0 %1943
  %v1945 = vsel %vm409, %v1935, 0.0
  %1946 = vadd.xlane.f32.xlu0 %v1945
  %v1947 = vpop.xlane.xlu0 %1946
  %v1948 = vsel %vm409, %v1937, 0.0
  %1949 = vadd.xlane.f32.xlu0 %v1948
  %v1950 = vpop.xlane.xlu0 %1949
  %v1951 = vsel %vm409, %v1939, 0.0
  %1952 = vadd.xlane.f32.xlu0 %v1951
  %v1953 = vpop.xlane.xlu0 %1952
  %v1954 = vsel %vm409, %v1941, 0.0
  %1955 = vadd.xlane.f32.xlu0 %v1954
  %v1956 = vpop.xlane.xlu0 %1955
  %v1957 = vrcp.pop %v1944
  %v1958 = vrcp.pop %v1947
  %v1959 = vrcp.pop %v1950
  %v1960 = vrcp.pop %v1953
  %v1961 = vrcp.pop %v1956
  %v1962 = vmul.f32 %v1933, %v1957
  %v1963 = vmul.f32 %v1935, %v1958
  %v1964 = vmul.f32 %v1937, %v1959
  %v1965 = vmul.f32 %v1939, %v1960
  %v1966 = vmul.f32 %v1941, %v1961
  %v1967 = vpack.c.bf16 %v1963, %v1962
  %v1968 = vpack.c.bf16 %v1965, %v1964
  %v1969 = vpack.c.bf16 %v1966, %v1966
  %1970 = vrot.lane.b32.xlu0 %v1554, 48
  %v1971 = vpop.permute.xlu0 %1970
  %1972 = vrot.lane.b32.xlu0 %v1555, 48
  %v1973 = vpop.permute.xlu0 %1972
  %1974 = vrot.lane.b32.xlu0 %v1556, 48
  %v1975 = vpop.permute.xlu0 %1974
  %v1979 = vsel %vm409, %v1967, 0
  %v1982 = vsel %vm409, %v1968, 0
  %v1985 = vsel %vm409, %v1969, 0
  %v1988 = vsel %vm485, %v1975, 0
  %1990 = vmatpush.bf16.msra.mxu0 0
  %1991 = vmatpush.bf16.msra.mxu0 0
  %1992 = vmatpush.bf16.msra.mxu0 0
  %1993 = vmatpush.bf16.msra.mxu0 0
  %1994 = vmatpush.bf16.msra.mxu0 0
  %1995 = vmatpush.bf16.msra.mxu0 %v1988
  %1996 = vmatpush.bf16.msra.mxu0 %v1973
  %1997 = vmatpush.bf16.msra.mxu0 %v1971
  %1998 = vmatmul.bf16.gmra.mxu0 %v1979
  %v1999 = vpop.f32.mrf.mxu0
  %v2000 = vadd.f32 0.0, %v1999
  %v2001 = vpop.f32.mrf.mxu0
  %v2002 = vadd.f32 0.0, %v2001
  %2003 = vmatmul.bf16.gmra.mxu0 %v1982
  %v2004 = vpop.f32.mrf.mxu0
  %v2005 = vadd.f32 0.0, %v2004
  %v2006 = vpop.f32.mrf.mxu0
  %v2007 = vadd.f32 0.0, %v2006
  %2008 = vmatmul.bf16.gmra.mxu0 %v1985
  %v2009 = vpop.f32.mrf.mxu0
  %v2010 = vadd.f32 0.0, %v2009
  %v2011 = vpop.f32.mrf.mxu0
  %2012 = vdwg.mxu0
  %2013 = vrot.lane.b32.xlu0 %v1554, 104
  %v2014 = vpop.permute.xlu0 %2013
  %2015 = vrot.lane.b32.xlu0 %v1555, 104
  %v2016 = vpop.permute.xlu0 %2015
  %2017 = vrot.lane.b32.xlu0 %v1556, 104
  %v2018 = vpop.permute.xlu0 %2017
  %2019 = vrot.lane.b32.xlu0 %v1554, 72
  %v2020 = vpop.permute.xlu0 %2019
  %2021 = vrot.lane.b32.xlu0 %v1555, 72
  %v2022 = vpop.permute.xlu0 %2021
  %2023 = vrot.lane.b32.xlu0 %v1556, 72
  %v2024 = vpop.permute.xlu0 %2023
  %v2026 = vsel %vm367, %v2014, 0
  %v2029 = vsel %vm367, %v2016, 0
  %v2032 = vsel %vm367, %v2018, 0
  %v2035 = vsel %vm367, %v2020, 0
  %v2038 = vsel %vm367, %v2022, 0
  %v2041 = vsel %vm367, %v2024, 0
  %2043 = vmatpush.bf16.xpose.msra.mxu0 0
  %2044 = vmatpush.bf16.xpose.msra.mxu0 0
  %2045 = vmatpush.bf16.xpose.msra.mxu0 0
  %2046 = vmatpush.bf16.xpose.msra.mxu0 0
  %2047 = vmatpush.bf16.xpose.msra.mxu0 0
  %2048 = vmatpush.bf16.xpose.msra.mxu0 %v2041
  %2049 = vmatpush.bf16.xpose.msra.mxu0 %v2038
  %2050 = vmatpush.bf16.xpose.msra.mxu0 %v2035
  %2051 = vmatmul.bf16.gmra.mxu0 %v2026
  %v2052 = vpop.f32.mrf.mxu0
  %v2053 = vadd.f32 %v63, %v2052
  %v2054 = vpop.f32.mrf.mxu0
  %v2055 = vadd.f32 %v64, %v2054
  %2056 = vmatmul.bf16.gmra.mxu0 %v2029
  %v2057 = vpop.f32.mrf.mxu0
  %v2058 = vadd.f32 %v65, %v2057
  %v2059 = vpop.f32.mrf.mxu0
  %v2060 = vadd.f32 %v66, %v2059
  %2061 = vmatmul.bf16.gmra.mxu0 %v2032
  %v2062 = vpop.f32.mrf.mxu0
  %v2063 = vadd.f32 %v67, %v2062
  %v2064 = vpop.f32.mrf.mxu0
  %2065 = vdwg.mxu0
  %v2066 = vsel %vm409, %v2053, -inf
  %2067 = vmax.xlane.f32.xlu0 %v2066
  %v2068 = vpop.xlane.xlu0 %2067
  %v2069 = vsel %vm409, %v2055, -inf
  %2070 = vmax.xlane.f32.xlu0 %v2069
  %v2071 = vpop.xlane.xlu0 %2070
  %v2072 = vsel %vm409, %v2058, -inf
  %2073 = vmax.xlane.f32.xlu0 %v2072
  %v2074 = vpop.xlane.xlu0 %2073
  %v2075 = vsel %vm409, %v2060, -inf
  %2076 = vmax.xlane.f32.xlu0 %v2075
  %v2077 = vpop.xlane.xlu0 %2076
  %v2078 = vsel %vm409, %v2063, -inf
  %2079 = vmax.xlane.f32.xlu0 %v2078
  %v2080 = vpop.xlane.xlu0 %2079
  %v2081 = vsub.f32 %v2053, %v2068
  %v2082 = vsub.f32 %v2055, %v2071
  %v2083 = vsub.f32 %v2058, %v2074
  %v2084 = vsub.f32 %v2060, %v2077
  %v2085 = vsub.f32 %v2063, %v2080
  %v2086 = vmul.f32 %v2081, 1.442695
  %v2087 = vpow.pop %v2086
  %v2088 = vmul.f32 %v2082, 1.442695
  %v2089 = vpow.pop %v2088
  %v2090 = vmul.f32 %v2083, 1.442695
  %v2091 = vpow.pop %v2090
  %v2092 = vmul.f32 %v2084, 1.442695
  %v2093 = vpow.pop %v2092
  %v2094 = vmul.f32 %v2085, 1.442695
  %v2095 = vpow.pop %v2094
  %v2096 = vsel %vm409, %v2087, 0.0
  %2097 = vadd.xlane.f32.xlu0 %v2096
  %v2098 = vpop.xlane.xlu0 %2097
  %v2099 = vsel %vm409, %v2089, 0.0
  %2100 = vadd.xlane.f32.xlu0 %v2099
  %v2101 = vpop.xlane.xlu0 %2100
  %v2102 = vsel %vm409, %v2091, 0.0
  %2103 = vadd.xlane.f32.xlu0 %v2102
  %v2104 = vpop.xlane.xlu0 %2103
  %v2105 = vsel %vm409, %v2093, 0.0
  %2106 = vadd.xlane.f32.xlu0 %v2105
  %v2107 = vpop.xlane.xlu0 %2106
  %v2108 = vsel %vm409, %v2095, 0.0
  %2109 = vadd.xlane.f32.xlu0 %v2108
  %v2110 = vpop.xlane.xlu0 %2109
  %v2111 = vrcp.pop %v2098
  %v2112 = vrcp.pop %v2101
  %v2113 = vrcp.pop %v2104
  %v2114 = vrcp.pop %v2107
  %v2115 = vrcp.pop %v2110
  %v2116 = vmul.f32 %v2087, %v2111
  %v2117 = vmul.f32 %v2089, %v2112
  %v2118 = vmul.f32 %v2091, %v2113
  %v2119 = vmul.f32 %v2093, %v2114
  %v2120 = vmul.f32 %v2095, %v2115
  %v2121 = vpack.c.bf16 %v2117, %v2116
  %v2122 = vpack.c.bf16 %v2119, %v2118
  %v2123 = vpack.c.bf16 %v2120, %v2120
  %2124 = vrot.lane.b32.xlu0 %v1554, 40
  %v2125 = vpop.permute.xlu0 %2124
  %2126 = vrot.lane.b32.xlu0 %v1555, 40
  %v2127 = vpop.permute.xlu0 %2126
  %2128 = vrot.lane.b32.xlu0 %v1556, 40
  %v2129 = vpop.permute.xlu0 %2128
  %v2133 = vsel %vm409, %v2121, 0
  %v2136 = vsel %vm409, %v2122, 0
  %v2139 = vsel %vm409, %v2123, 0
  %v2142 = vsel %vm485, %v2129, 0
  %2144 = vmatpush.bf16.msra.mxu0 0
  %2145 = vmatpush.bf16.msra.mxu0 0
  %2146 = vmatpush.bf16.msra.mxu0 0
  %2147 = vmatpush.bf16.msra.mxu0 0
  %2148 = vmatpush.bf16.msra.mxu0 0
  %2149 = vmatpush.bf16.msra.mxu0 %v2142
  %2150 = vmatpush.bf16.msra.mxu0 %v2127
  %2151 = vmatpush.bf16.msra.mxu0 %v2125
  %2152 = vmatmul.bf16.gmra.mxu0 %v2133
  %v2153 = vpop.f32.mrf.mxu0
  %v2154 = vadd.f32 0.0, %v2153
  %v2155 = vpop.f32.mrf.mxu0
  %v2156 = vadd.f32 0.0, %v2155
  %2157 = vmatmul.bf16.gmra.mxu0 %v2136
  %v2158 = vpop.f32.mrf.mxu0
  %v2159 = vadd.f32 0.0, %v2158
  %v2160 = vpop.f32.mrf.mxu0
  %v2161 = vadd.f32 0.0, %v2160
  %2162 = vmatmul.bf16.gmra.mxu0 %v2139
  %v2163 = vpop.f32.mrf.mxu0
  %v2164 = vadd.f32 0.0, %v2163
  %v2165 = vpop.f32.mrf.mxu0
  %2166 = vdwg.mxu0
  %2172 = vrot.lane.b32.xlu0 %v1846, 8
  %v2173 = vpop.permute.xlu0 %2172
  %2174 = vrot.lane.b32.xlu0 %v1848, 8
  %v2175 = vpop.permute.xlu0 %2174
  %2176 = vrot.lane.b32.xlu0 %v1851, 8
  %v2177 = vpop.permute.xlu0 %2176
  %2178 = vrot.lane.b32.xlu0 %v1853, 8
  %v2179 = vpop.permute.xlu0 %2178
  %2180 = vrot.lane.b32.xlu0 %v1856, 8
  %v2181 = vpop.permute.xlu0 %2180
  %2192 = vrot.lane.b32.xlu0 %v2000, 16
  %v2193 = vpop.permute.xlu0 %2192
  %2194 = vrot.lane.b32.xlu0 %v2002, 16
  %v2195 = vpop.permute.xlu0 %2194
  %2196 = vrot.lane.b32.xlu0 %v2005, 16
  %v2197 = vpop.permute.xlu0 %2196
  %2198 = vrot.lane.b32.xlu0 %v2007, 16
  %v2199 = vpop.permute.xlu0 %2198
  %2200 = vrot.lane.b32.xlu0 %v2010, 16
  %v2201 = vpop.permute.xlu0 %2200
  %2212 = vrot.lane.b32.xlu0 %v2154, 24
  %v2213 = vpop.permute.xlu0 %2212
  %2214 = vrot.lane.b32.xlu0 %v2156, 24
  %v2215 = vpop.permute.xlu0 %2214
  %2216 = vrot.lane.b32.xlu0 %v2159, 24
  %v2217 = vpop.permute.xlu0 %2216
  %2218 = vrot.lane.b32.xlu0 %v2161, 24
  %v2219 = vpop.permute.xlu0 %2218
  %2220 = vrot.lane.b32.xlu0 %v2164, 24
  %v2221 = vpop.permute.xlu0 %2220
  %v2227 = vsel %vm367, %v1692, %v2173
  %v2228 = vsel %vm367, %v1694, %v2175
  %v2229 = vsel %vm367, %v1697, %v2177
  %v2230 = vsel %vm367, %v1699, %v2179
  %v2231 = vsel %vm367, %v1702, %v2181
  %v2232 = vsel %vm1039, %v2227, %v2193
  %v2233 = vsel %vm1039, %v2228, %v2195
  %v2234 = vsel %vm1039, %v2229, %v2197
  %v2235 = vsel %vm1039, %v2230, %v2199
  %v2236 = vsel %vm1039, %v2231, %v2201
  %v2237 = vsel %vm1045, %v2232, %v2213
  %v2238 = vsel %vm1045, %v2233, %v2215
  %v2239 = vsel %vm1045, %v2234, %v2217
  %v2240 = vsel %vm1045, %v2235, %v2219
  %v2241 = vsel %vm1045, %v2236, %v2221
  %v2242 = vpack.c.bf16 %v2238, %v2237
  %v2243 = vpack.c.bf16 %v2240, %v2239
  %v2244 = vpack.c.bf16 %v2241, %v2241
  %v2245 = vunpack.c.h.b16 %v1361
  %v2246 = vunpack.c.h.b16 %v1363
  %v2247 = vunpack.c.h.b16 %v1365
  %v2248 = vunpack.c.h.b16 %v1367
  %v2249 = vpack.c.b16 %v2246, %v2245
  %v2250 = vpack.c.b16 %v2248, %v2247
  %v2254 = vsel %vm165, %v2242, 0
  %v2257 = vsel %vm165, %v2243, 0
  %v2260 = vsel %vm165, %v2244, 0
  %2262 = vmatpush.bf16.msra.mxu0 0
  %2263 = vmatpush.bf16.msra.mxu0 0
  %2264 = vmatpush.bf16.msra.mxu0 0
  %2265 = vmatpush.bf16.msra.mxu0 0
  %2266 = vmatpush.bf16.msra.mxu0 0
  %2267 = vmatpush.bf16.msra.mxu0 0
  %2268 = vmatpush.bf16.msra.mxu0 %v2250
  %2269 = vmatpush.bf16.msra.mxu0 %v2249
  %2270 = vmatmul.bf16.gmra.mxu0 %v2254
  %v2271 = vpop.f32.mrf.mxu0
  %v2272 = vadd.f32 0.0, %v2271
  %v2273 = vpop.f32.mrf.mxu0
  %v2274 = vadd.f32 0.0, %v2273
  %2275 = vmatmul.bf16.gmra.mxu0 %v2257
  %v2276 = vpop.f32.mrf.mxu0
  %v2277 = vadd.f32 0.0, %v2276
  %v2278 = vpop.f32.mrf.mxu0
  %v2279 = vadd.f32 0.0, %v2278
  %2280 = vmatmul.bf16.gmra.mxu0 %v2260
  %v2281 = vpop.f32.mrf.mxu0
  %v2282 = vadd.f32 0.0, %v2281
  %v2283 = vpop.f32.mrf.mxu0
  %2284 = vdwg.mxu0
  %v2285 = vadd.f32 %v1355, %v2272
  %v2286 = vadd.f32 %v1356, %v2274
  %v2287 = vadd.f32 %v1357, %v2277
  %v2288 = vadd.f32 %v1358, %v2279
  %v2289 = vadd.f32 %v1359, %v2282
  %v2290 = vperm.slane %v1368, 3
  %v2291 = vadd.f32 %v2285, %v2290
  %v2292 = vadd.f32 %v2286, %v2290
  %v2293 = vadd.f32 %v2287, %v2290
  %v2294 = vadd.f32 %v2288, %v2290
  %v2295 = vadd.f32 %v2289, %v2290
  %v2296 = vsel %vm165, %v2291, 0.0
  %2297 = vadd.xlane.f32.xlu0 %v2296
  %v2298 = vpop.xlane.xlu0 %2297
  %v2299 = vsel %vm165, %v2292, 0.0
  %2300 = vadd.xlane.f32.xlu0 %v2299
  %v2301 = vpop.xlane.xlu0 %2300
  %v2302 = vsel %vm165, %v2293, 0.0
  %2303 = vadd.xlane.f32.xlu0 %v2302
  %v2304 = vpop.xlane.xlu0 %2303
  %v2305 = vsel %vm165, %v2294, 0.0
  %2306 = vadd.xlane.f32.xlu0 %v2305
  %v2307 = vpop.xlane.xlu0 %2306
  %v2308 = vsel %vm165, %v2295, 0.0
  %2309 = vadd.xlane.f32.xlu0 %v2308
  %v2310 = vpop.xlane.xlu0 %2309
  %v2311 = vmul.f32 %v2298, %v187
  %v2312 = vmul.f32 %v2301, %v187
  %v2313 = vmul.f32 %v2304, %v187
  %v2314 = vmul.f32 %v2307, %v187
  %v2315 = vmul.f32 %v2310, %v187
  %v2316 = vsub.f32 %v2291, %v2311
  %v2317 = vsub.f32 %v2292, %v2312
  %v2318 = vsub.f32 %v2293, %v2313
  %v2319 = vsub.f32 %v2294, %v2314
  %v2320 = vsub.f32 %v2295, %v2315
  %v2321 = vmul.f32 %v2316, %v2316
  %v2322 = vmul.f32 %v2317, %v2317
  %v2323 = vmul.f32 %v2318, %v2318
  %v2324 = vmul.f32 %v2319, %v2319
  %v2325 = vmul.f32 %v2320, %v2320
  %v2326 = vsel %vm165, %v2321, 0.0
  %2327 = vadd.xlane.f32.xlu0 %v2326
  %v2328 = vpop.xlane.xlu0 %2327
  %v2329 = vsel %vm165, %v2322, 0.0
  %2330 = vadd.xlane.f32.xlu0 %v2329
  %v2331 = vpop.xlane.xlu0 %2330
  %v2332 = vsel %vm165, %v2323, 0.0
  %2333 = vadd.xlane.f32.xlu0 %v2332
  %v2334 = vpop.xlane.xlu0 %2333
  %v2335 = vsel %vm165, %v2324, 0.0
  %2336 = vadd.xlane.f32.xlu0 %v2335
  %v2337 = vpop.xlane.xlu0 %2336
  %v2338 = vsel %vm165, %v2325, 0.0
  %2339 = vadd.xlane.f32.xlu0 %v2338
  %v2340 = vpop.xlane.xlu0 %2339
  %v2341 = vmul.f32 %v2328, %v187
  %v2342 = vmul.f32 %v2331, %v187
  %v2343 = vmul.f32 %v2334, %v187
  %v2344 = vmul.f32 %v2337, %v187
  %v2345 = vmul.f32 %v2340, %v187
  %v2346 = vadd.f32 %v2341, 1e-06
  %v2347 = vadd.f32 %v2342, 1e-06
  %v2348 = vadd.f32 %v2343, 1e-06
  %v2349 = vadd.f32 %v2344, 1e-06
  %v2350 = vadd.f32 %v2345, 1e-06
  %v2351 = vrsqrt.pop %v2346
  %v2352 = vmul.f32 %v2351, %v2346
  %v2353 = vmul.f32 %v2352, %v2351
  %v2354 = vmul.f32 0.5, %v2353
  %v2355 = vsub.f32 1.5, %v2354
  %v2356 = vmul.f32 %v2351, %v2355
  %vm2357 = vweird.f32 %v2346
  %vm2358 = vweird.f32 %v2351
  %vm2359 = vmor %vm2357, %vm2358
  %v2360 = vsel %vm2359, %v2351, %v2356
  %v2361 = vrsqrt.pop %v2347
  %v2362 = vmul.f32 %v2361, %v2347
  %v2363 = vmul.f32 %v2362, %v2361
  %v2364 = vmul.f32 0.5, %v2363
  %v2365 = vsub.f32 1.5, %v2364
  %v2366 = vmul.f32 %v2361, %v2365
  %vm2367 = vweird.f32 %v2347
  %vm2368 = vweird.f32 %v2361
  %vm2369 = vmor %vm2367, %vm2368
  %v2370 = vsel %vm2369, %v2361, %v2366
  %v2371 = vrsqrt.pop %v2348
  %v2372 = vmul.f32 %v2371, %v2348
  %v2373 = vmul.f32 %v2372, %v2371
  %v2374 = vmul.f32 0.5, %v2373
  %v2375 = vsub.f32 1.5, %v2374
  %v2376 = vmul.f32 %v2371, %v2375
  %vm2377 = vweird.f32 %v2348
  %vm2378 = vweird.f32 %v2371
  %vm2379 = vmor %vm2377, %vm2378
  %v2380 = vsel %vm2379, %v2371, %v2376
  %v2381 = vrsqrt.pop %v2349
  %v2382 = vmul.f32 %v2381, %v2349
  %v2383 = vmul.f32 %v2382, %v2381
  %v2384 = vmul.f32 0.5, %v2383
  %v2385 = vsub.f32 1.5, %v2384
  %v2386 = vmul.f32 %v2381, %v2385
  %vm2387 = vweird.f32 %v2349
  %vm2388 = vweird.f32 %v2381
  %vm2389 = vmor %vm2387, %vm2388
  %v2390 = vsel %vm2389, %v2381, %v2386
  %v2391 = vrsqrt.pop %v2350
  %v2392 = vmul.f32 %v2391, %v2350
  %v2393 = vmul.f32 %v2392, %v2391
  %v2394 = vmul.f32 0.5, %v2393
  %v2395 = vsub.f32 1.5, %v2394
  %v2396 = vmul.f32 %v2391, %v2395
  %vm2397 = vweird.f32 %v2350
  %vm2398 = vweird.f32 %v2391
  %vm2399 = vmor %vm2397, %vm2398
  %v2400 = vsel %vm2399, %v2391, %v2396
  %v2401 = vmul.f32 %v2316, %v2360
  %v2402 = vmul.f32 %v2317, %v2370
  %v2403 = vmul.f32 %v2318, %v2380
  %v2404 = vmul.f32 %v2319, %v2390
  %v2405 = vmul.f32 %v2320, %v2400
  %v2406 = vperm.slane %v1368, 4
  %v2407 = vmul.f32 %v2401, %v2406
  %v2408 = vmul.f32 %v2402, %v2406
  %v2409 = vmul.f32 %v2403, %v2406
  %v2410 = vmul.f32 %v2404, %v2406
  %v2411 = vmul.f32 %v2405, %v2406
  %v2412 = vperm.slane %v1368, 5
  %v2413 = vadd.f32 %v2407, %v2412
  %v2414 = vadd.f32 %v2408, %v2412
  %v2415 = vadd.f32 %v2409, %v2412
  %v2416 = vadd.f32 %v2410, %v2412
  %v2417 = vadd.f32 %v2411, %v2412
  %v2418 = vpack.c.bf16 %v2414, %v2413
  %v2419 = vpack.c.bf16 %v2416, %v2415
  %v2420 = vpack.c.bf16 %v2417, %v2417
  %v2421 = vperm.slane %v1368, 6
  %v2426 = vunpack.c.l.b16 %v1360
  %v2427 = vunpack.c.l.b16 %v1362
  %v2428 = vunpack.c.l.b16 %v1364
  %v2429 = vunpack.c.l.b16 %v1366
  %v2430 = vpack.c.b16 %v2427, %v2426
  %v2431 = vpack.c.b16 %v2429, %v2428
  %v2435 = vsel %vm165, %v2418, 0
  %v2438 = vsel %vm165, %v2419, 0
  %v2441 = vsel %vm165, %v2420, 0
  %2443 = vmatpush.bf16.msra.mxu0 0
  %2444 = vmatpush.bf16.msra.mxu0 0
  %2445 = vmatpush.bf16.msra.mxu0 0
  %2446 = vmatpush.bf16.msra.mxu0 0
  %2447 = vmatpush.bf16.msra.mxu0 0
  %2448 = vmatpush.bf16.msra.mxu0 0
  %2449 = vmatpush.bf16.msra.mxu0 %v2431
  %2450 = vmatpush.bf16.msra.mxu0 %v2430
  %2451 = vmatmul.bf16.gmra.mxu0 %v2435
  %v2452 = vpop.f32.mrf.mxu0
  %v2453 = vadd.f32 %v2421, %v2452
  %v2454 = vpop.f32.mrf.mxu0
  %v2455 = vadd.f32 %v2421, %v2454
  %2456 = vmatmul.bf16.gmra.mxu0 %v2438
  %v2457 = vpop.f32.mrf.mxu0
  %v2458 = vadd.f32 %v2421, %v2457
  %v2459 = vpop.f32.mrf.mxu0
  %v2460 = vadd.f32 %v2421, %v2459
  %2461 = vmatmul.bf16.gmra.mxu0 %v2441
  %v2462 = vpop.f32.mrf.mxu0
  %v2463 = vadd.f32 %v2421, %v2462
  %v2464 = vpop.f32.mrf.mxu0
  %2465 = vdwg.mxu0
  %v2466 = vmul.f32 %v2453, %v2453
  %v2467 = vmul.f32 %v2455, %v2455
  %v2468 = vmul.f32 %v2458, %v2458
  %v2469 = vmul.f32 %v2460, %v2460
  %v2470 = vmul.f32 %v2463, %v2463
  %v2471 = vmul.f32 %v2453, %v2466
  %v2472 = vmul.f32 %v2455, %v2467
  %v2473 = vmul.f32 %v2458, %v2468
  %v2474 = vmul.f32 %v2460, %v2469
  %v2475 = vmul.f32 %v2463, %v2470
  %v2476 = vmul.f32 %v2471, 0.044715
  %v2477 = vmul.f32 %v2472, 0.044715
  %v2478 = vmul.f32 %v2473, 0.044715
  %v2479 = vmul.f32 %v2474, 0.044715
  %v2480 = vmul.f32 %v2475, 0.044715
  %v2481 = vadd.f32 %v2453, %v2476
  %v2482 = vadd.f32 %v2455, %v2477
  %v2483 = vadd.f32 %v2458, %v2478
  %v2484 = vadd.f32 %v2460, %v2479
  %v2485 = vadd.f32 %v2463, %v2480
  %v2486 = vmul.f32 %v2481, 0.7978846
  %v2487 = vmul.f32 %v2482, 0.7978846
  %v2488 = vmul.f32 %v2483, 0.7978846
  %v2489 = vmul.f32 %v2484, 0.7978846
  %v2490 = vmul.f32 %v2485, 0.7978846
  %v2491 = vtanh.pop %v2486
  %v2492 = vtanh.pop %v2487
  %v2493 = vtanh.pop %v2488
  %v2494 = vtanh.pop %v2489
  %v2495 = vtanh.pop %v2490
  %v2496 = vadd.f32 %v2491, 1.0
  %v2497 = vadd.f32 %v2492, 1.0
  %v2498 = vadd.f32 %v2493, 1.0
  %v2499 = vadd.f32 %v2494, 1.0
  %v2500 = vadd.f32 %v2495, 1.0
  %v2501 = vmul.f32 %v2496, 0.5
  %v2502 = vmul.f32 %v2497, 0.5
  %v2503 = vmul.f32 %v2498, 0.5
  %v2504 = vmul.f32 %v2499, 0.5
  %v2505 = vmul.f32 %v2500, 0.5
  %v2506 = vmul.f32 %v2453, %v2501
  %v2507 = vmul.f32 %v2455, %v2502
  %v2508 = vmul.f32 %v2458, %v2503
  %v2509 = vmul.f32 %v2460, %v2504
  %v2510 = vmul.f32 %v2463, %v2505
  %v2511 = vpack.c.bf16 %v2507, %v2506
  %v2512 = vpack.c.bf16 %v2509, %v2508
  %v2513 = vpack.c.bf16 %v2510, %v2510
  %v2514 = vperm.slane %v1368, 7
  %v2515 = vunpack.c.h.b16 %v1360
  %v2516 = vunpack.c.h.b16 %v1362
  %v2517 = vunpack.c.h.b16 %v1364
  %v2518 = vunpack.c.h.b16 %v1366
  %v2519 = vpack.c.b16 %v2516, %v2515
  %v2520 = vpack.c.b16 %v2518, %v2517
  %2523 = vmatpush.bf16.xpose.msra.mxu0 0
  %2524 = vmatpush.bf16.xpose.msra.mxu0 0
  %2525 = vmatpush.bf16.xpose.msra.mxu0 0
  %2526 = vmatpush.bf16.xpose.msra.mxu0 0
  %2527 = vmatpush.bf16.xpose.msra.mxu0 0
  %2528 = vmatpush.bf16.xpose.msra.mxu0 0
  %2529 = vmatpush.bf16.xpose.msra.mxu0 %v2520
  %2530 = vmatpush.bf16.xpose.msra.mxu0 %v2519
  %2531 = vmatmul.bf16.gmra.mxu0 %v2511
  %v2532 = vpop.f32.mrf.mxu0
  %v2533 = vadd.f32 %v2514, %v2532
  %v2534 = vpop.f32.mrf.mxu0
  %v2535 = vadd.f32 %v2514, %v2534
  %2536 = vmatmul.bf16.gmra.mxu0 %v2512
  %v2537 = vpop.f32.mrf.mxu0
  %v2538 = vadd.f32 %v2514, %v2537
  %v2539 = vpop.f32.mrf.mxu0
  %v2540 = vadd.f32 %v2514, %v2539
  %2541 = vmatmul.bf16.gmra.mxu0 %v2513
  %v2542 = vpop.f32.mrf.mxu0
  %v2543 = vadd.f32 %v2514, %v2542
  %v2544 = vpop.f32.mrf.mxu0
  %2545 = vdwg.mxu0
  %v2546 = vadd.f32 %v2291, %v2533
  %v2547 = vadd.f32 %v2292, %v2535
  %v2548 = vadd.f32 %v2293, %v2538
  %v2549 = vadd.f32 %v2294, %v2540
  %v2550 = vadd.f32 %v2295, %v2543
  %v2551 = vld [vmem:[%s2 + $0x28] sm:$0x1]
  %v2552 = vld [vmem:[%s2 + $0x29] sm:$0x1]
  %v2553 = vsel %vm165, %v2546, 0.0
  %2554 = vadd.xlane.f32.xlu0 %v2553
  %v2555 = vpop.xlane.xlu0 %2554
  %v2556 = vsel %vm165, %v2547, 0.0
  %2557 = vadd.xlane.f32.xlu0 %v2556
  %v2558 = vpop.xlane.xlu0 %2557
  %v2559 = vsel %vm165, %v2548, 0.0
  %2560 = vadd.xlane.f32.xlu0 %v2559
  %v2561 = vpop.xlane.xlu0 %2560
  %v2562 = vsel %vm165, %v2549, 0.0
  %2563 = vadd.xlane.f32.xlu0 %v2562
  %v2564 = vpop.xlane.xlu0 %2563
  %v2565 = vsel %vm165, %v2550, 0.0
  %2566 = vadd.xlane.f32.xlu0 %v2565
  %v2567 = vpop.xlane.xlu0 %2566
  %v2568 = vmul.f32 %v2555, %v187
  %v2569 = vmul.f32 %v2558, %v187
  %v2570 = vmul.f32 %v2561, %v187
  %v2571 = vmul.f32 %v2564, %v187
  %v2572 = vmul.f32 %v2567, %v187
  %v2573 = vsub.f32 %v2546, %v2568
  %v2574 = vsub.f32 %v2547, %v2569
  %v2575 = vsub.f32 %v2548, %v2570
  %v2576 = vsub.f32 %v2549, %v2571
  %v2577 = vsub.f32 %v2550, %v2572
  %v2578 = vmul.f32 %v2573, %v2573
  %v2579 = vmul.f32 %v2574, %v2574
  %v2580 = vmul.f32 %v2575, %v2575
  %v2581 = vmul.f32 %v2576, %v2576
  %v2582 = vmul.f32 %v2577, %v2577
  %v2583 = vsel %vm165, %v2578, 0.0
  %2584 = vadd.xlane.f32.xlu0 %v2583
  %v2585 = vpop.xlane.xlu0 %2584
  %v2586 = vsel %vm165, %v2579, 0.0
  %2587 = vadd.xlane.f32.xlu0 %v2586
  %v2588 = vpop.xlane.xlu0 %2587
  %v2589 = vsel %vm165, %v2580, 0.0
  %2590 = vadd.xlane.f32.xlu0 %v2589
  %v2591 = vpop.xlane.xlu0 %2590
  %v2592 = vsel %vm165, %v2581, 0.0
  %2593 = vadd.xlane.f32.xlu0 %v2592
  %v2594 = vpop.xlane.xlu0 %2593
  %v2595 = vsel %vm165, %v2582, 0.0
  %2596 = vadd.xlane.f32.xlu0 %v2595
  %v2597 = vpop.xlane.xlu0 %2596
  %v2598 = vmul.f32 %v2585, %v187
  %v2599 = vmul.f32 %v2588, %v187
  %v2600 = vmul.f32 %v2591, %v187
  %v2601 = vmul.f32 %v2594, %v187
  %v2602 = vmul.f32 %v2597, %v187
  %v2603 = vadd.f32 %v2598, 1e-06
  %v2604 = vadd.f32 %v2599, 1e-06
  %v2605 = vadd.f32 %v2600, 1e-06
  %v2606 = vadd.f32 %v2601, 1e-06
  %v2607 = vadd.f32 %v2602, 1e-06
  %v2608 = vrsqrt.pop %v2603
  %v2609 = vmul.f32 %v2608, %v2603
  %v2610 = vmul.f32 %v2609, %v2608
  %v2611 = vmul.f32 0.5, %v2610
  %v2612 = vsub.f32 1.5, %v2611
  %v2613 = vmul.f32 %v2608, %v2612
  %vm2614 = vweird.f32 %v2603
  %vm2615 = vweird.f32 %v2608
  %vm2616 = vmor %vm2614, %vm2615
  %v2617 = vsel %vm2616, %v2608, %v2613
  %v2618 = vrsqrt.pop %v2604
  %v2619 = vmul.f32 %v2618, %v2604
  %v2620 = vmul.f32 %v2619, %v2618
  %v2621 = vmul.f32 0.5, %v2620
  %v2622 = vsub.f32 1.5, %v2621
  %v2623 = vmul.f32 %v2618, %v2622
  %vm2624 = vweird.f32 %v2604
  %vm2625 = vweird.f32 %v2618
  %vm2626 = vmor %vm2624, %vm2625
  %v2627 = vsel %vm2626, %v2618, %v2623
  %v2628 = vrsqrt.pop %v2605
  %v2629 = vmul.f32 %v2628, %v2605
  %v2630 = vmul.f32 %v2629, %v2628
  %v2631 = vmul.f32 0.5, %v2630
  %v2632 = vsub.f32 1.5, %v2631
  %v2633 = vmul.f32 %v2628, %v2632
  %vm2634 = vweird.f32 %v2605
  %vm2635 = vweird.f32 %v2628
  %vm2636 = vmor %vm2634, %vm2635
  %v2637 = vsel %vm2636, %v2628, %v2633
  %v2638 = vrsqrt.pop %v2606
  %v2639 = vmul.f32 %v2638, %v2606
  %v2640 = vmul.f32 %v2639, %v2638
  %v2641 = vmul.f32 0.5, %v2640
  %v2642 = vsub.f32 1.5, %v2641
  %v2643 = vmul.f32 %v2638, %v2642
  %vm2644 = vweird.f32 %v2606
  %vm2645 = vweird.f32 %v2638
  %vm2646 = vmor %vm2644, %vm2645
  %v2647 = vsel %vm2646, %v2638, %v2643
  %v2648 = vrsqrt.pop %v2607
  %v2649 = vmul.f32 %v2648, %v2607
  %v2650 = vmul.f32 %v2649, %v2648
  %v2651 = vmul.f32 0.5, %v2650
  %v2652 = vsub.f32 1.5, %v2651
  %v2653 = vmul.f32 %v2648, %v2652
  %vm2654 = vweird.f32 %v2607
  %vm2655 = vweird.f32 %v2648
  %vm2656 = vmor %vm2654, %vm2655
  %v2657 = vsel %vm2656, %v2648, %v2653
  %v2658 = vmul.f32 %v2573, %v2617
  %v2659 = vmul.f32 %v2574, %v2627
  %v2660 = vmul.f32 %v2575, %v2637
  %v2661 = vmul.f32 %v2576, %v2647
  %v2662 = vmul.f32 %v2577, %v2657
  %v2663 = vperm.slane %v2551, 0
  %v2664 = vmul.f32 %v2658, %v2663
  %v2665 = vmul.f32 %v2659, %v2663
  %v2666 = vmul.f32 %v2660, %v2663
  %v2667 = vmul.f32 %v2661, %v2663
  %v2668 = vmul.f32 %v2662, %v2663
  %v2669 = vperm.slane %v2552, 0
  %v2670 = vadd.f32 %v2664, %v2669
  %v2671 = vadd.f32 %v2665, %v2669
  %v2672 = vadd.f32 %v2666, %v2669
  %v2673 = vadd.f32 %v2667, %v2669
  %v2674 = vadd.f32 %v2668, %v2669
  %2675 = vst.msk [vmem:[%s3] sm:$0xff] %vm165, %v2670
  %2676 = vst.msk [vmem:[%s3 + $0x8] sm:$0xff] %vm165, %v2671
  %2677 = vst.msk [vmem:[%s3 + $0x10] sm:$0xff] %vm165, %v2672
  %2678 = vst.msk [vmem:[%s3 + $0x18] sm:$0xff] %vm165, %v2673
  %2679 = vst.msk [vmem:[%s3 + $0x20] sm:$0xff] %vm165, %v2674
  // Predicated region
  $region14: #{vision_transformer_forward.1} parent=0 // pred_check
    _
  $region15: #{vision_transformer_forward.1} parent=0 // pred_check_branch
    %2681 = sbr.rel (0) target = $region17
  $region16: #{vision_transformer_forward.1} parent=0 // pred_region
    _
  $region17: #{vision_transformer_forward.1} parent=0 // pred_fallthru
    _
  // Predicated region
  $region18: #{vision_transformer_forward.1} parent=0 // pred_check
    _
  $region19: #{vision_transformer_forward.1} parent=0 // pred_check_branch
    %2683 = sbr.rel (0) target = $region21
  $region20: #{vision_transformer_forward.1} parent=0 // pred_region
    _
  $region21: #{vision_transformer_forward.1} parent=0 // pred_fallthru
    _

</llo_original>
